<compile_context>
chip_gen: v7x
topology: tpu7x:2x2x1
jax: 0.10.0
libtpu: 0.0.40
codegen_flags: <defaults>
</compile_context>

<pallas_src>
import numpy as np
import jax
import jax.numpy as jnp
from jax.experimental import pallas as pl
from jax.experimental.pallas import tpu as pltpu

START_TAG = "<START>"
STOP_TAG = "<STOP>"
tag_to_ix = {"B": 0, "I": 1, "O": 2, START_TAG: 3, STOP_TAG: 4}
START_IDX = tag_to_ix[START_TAG]
STOP_IDX = tag_to_ix[STOP_TAG]


# ----------------------------------------------------------------------------
# Fused kernel: BiLSTM -> hidden2tag -> Viterbi -> backtrack
# ----------------------------------------------------------------------------
def _bilstm_crf_kernel(emb_ref, wih_ref, bias_ref, whhf_ref, whhb_ref,
                       h0_ref, c0_ref, wtag_ref, btag_ref, transT_ref, stop_ref,
                       feats_ref, path_ref, score_ref, start_ref,
                       xproj_scr, fwd_scr, bwd_scr, bptr_scr, sel_scr):
    S = emb_ref.shape[0]
    H2 = whhf_ref.shape[0]
    G = whhf_ref.shape[1]                 # 4*H2, gate order [i | f | o | g]
    T = feats_ref.shape[1]
    NEG = jnp.float32(-10000.0)

    # ---- Stage 1: hoisted input projection for BOTH directions (one matmul) ----
    # xproj[:, 0:G]   = emb @ W_ih_fwd + b_fwd
    # xproj[:, G:2G]  = emb @ W_ih_bwd + b_bwd
    xproj_scr[...] = (jnp.dot(emb_ref[...], wih_ref[...],
                              preferred_element_type=jnp.float32)
                      + bias_ref[...])

    whhf = whhf_ref[...]
    whhb = whhb_ref[...]

    # ---- Stage 2: fused fwd+bwd LSTM recurrence (single unrolled loop) -------
    def cell(h, c, whh, xrow):
        # gates: [i | f | o | g] -> one sigmoid over 3*H2 lanes + one tanh.
        gates = jnp.dot(h, whh, preferred_element_type=jnp.float32) + xrow
        sig = jax.nn.sigmoid(gates[:, 0:3 * H2])
        g_t = jnp.tanh(gates[:, 3 * H2:G])
        c_new = sig[:, H2:2 * H2] * c + sig[:, 0:H2] * g_t
        h_new = sig[:, 2 * H2:3 * H2] * jnp.tanh(c_new)
        return h_new, c_new

    def lstm_body(t, carry):
        hf, cf, hb, cb = carry            # (1, H2) each; two independent chains
        tb = S - 1 - t
        hf, cf = cell(hf, cf, whhf, xproj_scr[pl.ds(t, 1), 0:G])
        hb, cb = cell(hb, cb, whhb, xproj_scr[pl.ds(tb, 1), G:2 * G])
        fwd_scr[pl.ds(t, 1), :] = hf
        bwd_scr[pl.ds(tb, 1), :] = hb
        return (hf, cf, hb, cb)

    init = (h0_ref[0:1, :], c0_ref[0:1, :], h0_ref[1:2, :], c0_ref[1:2, :])
    jax.lax.fori_loop(0, S, lstm_body, init, unroll=True)

    # ---- Stage 3: hidden2tag ------------------------------------------------
    wtag = wtag_ref[...]                  # (2*H2, T)
    feats_ref[...] = (
        jnp.dot(fwd_scr[...], wtag[0:H2, :], preferred_element_type=jnp.float32)
        + jnp.dot(bwd_scr[...], wtag[H2:, :], preferred_element_type=jnp.float32)
        + btag_ref[...])

    # ---- Stage 4: CRF Viterbi forward recursion -----------------------------
    # Orientation [prev(rows), next(cols)]: the per-next max/argmax are sublane
    # reductions that land directly as rows; only fv needs one row->col
    # conversion per step.
    lane_f = jax.lax.broadcasted_iota(jnp.int32, (1, T), 1).astype(jnp.float32)
    sub_f = jax.lax.broadcasted_iota(jnp.int32, (T, 1), 0).astype(jnp.float32)
    prev_iota = jax.lax.broadcasted_iota(jnp.int32, (T, T), 0).astype(jnp.float32)
    eye = (jax.lax.broadcasted_iota(jnp.int32, (T, T), 0)
           == jax.lax.broadcasted_iota(jnp.int32, (T, T), 1)).astype(jnp.float32)
    transT = transT_ref[...]              # (T, T): transitions[next, prev].T

    fv0_col = jnp.where(sub_f == jnp.float32(START_IDX), jnp.float32(0.0), NEG)
    fv0_row = jnp.where(lane_f == jnp.float32(START_IDX), jnp.float32(0.0), NEG)

    def vit_body(t, carry):
        fv_col, _ = carry
        scores = transT + fv_col                                  # (T, T)
        m_row = jnp.max(scores, axis=0, keepdims=True)            # (1, T)
        best_row = jnp.min(jnp.where(scores == m_row, prev_iota, jnp.float32(T)),
                           axis=0, keepdims=True)                 # first argmax
        bptr_scr[pl.ds(t, 1), :] = best_row                       # kept as f32
        fv_row = m_row + feats_ref[pl.ds(t, 1), :]
        fv_col_new = jnp.sum(eye * fv_row, axis=1, keepdims=True)  # row -> col
        return (fv_col_new, fv_row)

    _, fv_row_final = jax.lax.fori_loop(0, S, vit_body, (fv0_col, fv0_row),
                                        unroll=True)

    terminal = fv_row_final + stop_ref[...]                       # (1, T)
    tmax = jnp.max(terminal, axis=1, keepdims=True)               # (1, 1)
    best_last = jnp.min(jnp.where(terminal == tmax, lane_f, jnp.float32(T)),
                        axis=1, keepdims=True)                    # (1, 1)
    score_ref[...] = tmax

    # ---- Stage 5: on-device backpointer chase (vectorized one-hot select) ----
    sel_last = (lane_f == best_last).astype(jnp.float32)          # (1, T)
    sel_scr[pl.ds(S - 1, 1), :] = sel_last

    def bt_body(k, sel):
        t = S - 1 - k
        bp = bptr_scr[pl.ds(t, 1), :]
        best = jnp.sum(bp * sel, axis=1, keepdims=True)           # bptrs[t, cur]
        sel_new = (lane_f == best).astype(jnp.float32)
        sel_scr[pl.ds(t - 1, 1), :] = sel_new
        return sel_new

    sel_first = jax.lax.fori_loop(0, S - 1, bt_body, sel_last, unroll=True)
    start_val = jnp.sum(bptr_scr[pl.ds(0, 1), :] * sel_first, axis=1,
                        keepdims=True)
    start_ref[...] = start_val.astype(jnp.int32)                  # should == START
    path_ref[...] = jnp.sum(sel_scr[...] * lane_f, axis=1,
                            keepdims=True).astype(jnp.int32)      # (S, 1)


def _reorder_gate_rows(w):
    """PyTorch LSTM gate order [i, f, g, o] -> [i, f, o, g] along axis 0."""
    h = w.shape[0] // 4
    return jnp.concatenate([w[0:2 * h], w[3 * h:4 * h], w[2 * h:3 * h]], axis=0)


def bilstm_crf_call(emb, params):
    S, _ = emb.shape
    H2 = params["w_hh_f"].shape[1]
    G = 4 * H2
    T = params["w_tag"].shape[0]

    wih_f = _reorder_gate_rows(params["w_ih_f"]).T                # (E, G)
    wih_b = _reorder_gate_rows(params["w_ih_b"]).T                # (E, G)
    wih_cat = jnp.concatenate([wih_f, wih_b], axis=1)             # (E, 2G)
    bf = _reorder_gate_rows(params["b_ih_f"] + params["b_hh_f"])
    bb = _reorder_gate_rows(params["b_ih_b"] + params["b_hh_b"])
    bias_cat = jnp.concatenate([bf, bb]).reshape(1, 2 * G)
    whhf_t = _reorder_gate_rows(params["w_hh_f"]).T               # (H2, G)
    whhb_t = _reorder_gate_rows(params["w_hh_b"]).T               # (H2, G)
    wtag_t = params["w_tag"].T                                    # (2*H2, T)
    btag = params["b_tag"].reshape(1, T)
    trans_t = params["transitions"].T                             # [prev, next]
    stop_row = params["transitions"][STOP_IDX:STOP_IDX + 1, :]    # (1, T)

    args = (emb, wih_cat, bias_cat, whhf_t, whhb_t,
            params["h0"], params["c0"], wtag_t, btag, trans_t, stop_row)
    in_specs = [pl.BlockSpec(a.shape, lambda i: (0, 0)) for a in args]

    out_shape = (jax.ShapeDtypeStruct((S, T), jnp.float32),   # feats
                 jax.ShapeDtypeStruct((S, 1), jnp.int32),     # decoded path
                 jax.ShapeDtypeStruct((1, 1), jnp.float32),   # path score
                 jax.ShapeDtypeStruct((1, 1), jnp.int32))     # start-tag check
    out_specs = (pl.BlockSpec((S, T), lambda i: (0, 0)),
                 pl.BlockSpec((S, 1), lambda i: (0, 0)),
                 pl.BlockSpec((1, 1), lambda i: (0, 0)),
                 pl.BlockSpec((1, 1), lambda i: (0, 0)))

    return pl.pallas_call(
        _bilstm_crf_kernel,
        out_shape=out_shape,
        grid=(1,),
        in_specs=in_specs,
        out_specs=out_specs,
        scratch_shapes=[pltpu.VMEM((S, 2 * G), jnp.float32),   # hoisted x-proj
                        pltpu.VMEM((S, H2), jnp.float32),      # fwd hiddens
                        pltpu.VMEM((S, H2), jnp.float32),      # bwd hiddens
                        pltpu.VMEM((S, T), jnp.float32),       # backpointers (f32)
                        pltpu.VMEM((S, T), jnp.float32)],      # one-hot path
    )(*args)


def bilstm_crf_forward(sentence, params):
    emb = params["embedding"][sentence]            # glue: embedding gather (S, E)
    feats, path, score, start = bilstm_crf_call(emb, params)
    jax.block_until_ready((feats, path, score, start))
    assert int(np.asarray(start)[0, 0]) == START_IDX
    tag_seq = [int(v) for v in np.asarray(path)[:, 0]]
    path_score = float(np.asarray(score)[0, 0])
    return path_score, tag_seq, feats


# ----------------------------------------------------------------------------
# numpy references (sanity checks)
# ----------------------------------------------------------------------------
def _ref_feats(sentence, p):
    emb = np.asarray(p["embedding"])[np.asarray(sentence)]

    def sig(x):
        return 1.0 / (1.0 + np.exp(-x))

    def run(x_seq, wih, whh, b, h, c):
        H2 = whh.shape[1]
        outs = []
        for x in x_seq:
            g = x @ wih.T + h @ whh.T + b
            i = sig(g[:H2]); f = sig(g[H2:2 * H2])
            gg = np.tanh(g[2 * H2:3 * H2]); o = sig(g[3 * H2:])
            c = f * c + i * gg
            h = o * np.tanh(c)
            outs.append(h)
        return np.stack(outs)

    bf = np.asarray(p["b_ih_f"]) + np.asarray(p["b_hh_f"])
    bb = np.asarray(p["b_ih_b"]) + np.asarray(p["b_hh_b"])
    h0 = np.asarray(p["h0"]); c0 = np.asarray(p["c0"])
    fwd = run(emb, np.asarray(p["w_ih_f"]), np.asarray(p["w_hh_f"]), bf, h0[0], c0[0])
    bwd = run(emb[::-1], np.asarray(p["w_ih_b"]), np.asarray(p["w_hh_b"]), bb, h0[1], c0[1])[::-1]
    out = np.concatenate([fwd, bwd], axis=1)
    return out @ np.asarray(p["w_tag"]).T + np.asarray(p["b_tag"])


def _ref_viterbi(feats, transitions):
    feats = np.asarray(feats); trans = np.asarray(transitions)
    fv = np.full((trans.shape[0],), -10000.0, np.float32)
    fv[START_IDX] = 0.0
    bptrs = []
    for f in feats:
        scores = trans + fv[None, :]              # [next, prev]
        bptrs.append(scores.argmax(axis=1))       # first-index argmax
        fv = scores.max(axis=1) + f
    terminal = fv + trans[STOP_IDX]
    best = int(terminal.argmax())
    score = float(terminal[best])
    path = [best]
    for bp in reversed(bptrs):
        best = int(bp[best])
        path.append(best)
    start = path.pop()
    assert start == START_IDX
    path.reverse()
    return score, path


# ----------------------------------------------------------------------------
if __name__ == "__main__":
    VOCAB, EMB, HIDDEN, S = 20, 16, 32, 8
    H2 = HIDDEN // 2
    T = len(tag_to_ix)

    key = jax.random.PRNGKey(0)
    ks = jax.random.split(key, 16)
    scale = 1.0 / np.sqrt(H2)
    u = lambda k, shp: jax.random.uniform(k, shp, jnp.float32, -scale, scale)

    transitions = jax.random.normal(ks[11], (T, T), jnp.float32)
    transitions = transitions.at[START_IDX, :].set(-10000.0)
    transitions = transitions.at[:, STOP_IDX].set(-10000.0)

    params = {
        "embedding": jax.random.normal(ks[0], (VOCAB, EMB), jnp.float32),
        "w_ih_f": u(ks[1], (4 * H2, EMB)), "w_hh_f": u(ks[2], (4 * H2, H2)),
        "b_ih_f": u(ks[3], (4 * H2,)),     "b_hh_f": u(ks[4], (4 * H2,)),
        "w_ih_b": u(ks[5], (4 * H2, EMB)), "w_hh_b": u(ks[6], (4 * H2, H2)),
        "b_ih_b": u(ks[7], (4 * H2,)),     "b_hh_b": u(ks[8], (4 * H2,)),
        "w_tag": u(ks[9], (T, HIDDEN)),    "b_tag": u(ks[10], (T,)),
        "transitions": transitions,
        # torch init_hidden() draws randn each forward; here drawn once, deterministically
        "h0": jax.random.normal(ks[12], (2, H2), jnp.float32),
        "c0": jax.random.normal(ks[13], (2, H2), jnp.float32),
    }

    sentence = jax.random.randint(ks[14], (S,), 0, VOCAB, dtype=jnp.int32)

    score, tag_seq, feats = bilstm_crf_forward(sentence, params)

    # sanity 1: emission features from the fused Pallas BiLSTM match numpy
    np.testing.assert_allclose(np.asarray(feats), _ref_feats(sentence, params),
                               rtol=2e-2, atol=2e-2)

    # sanity 2: on-device Viterbi + backtrack match a numpy CRF decode run on
    # the kernel's own emission features (tests the CRF stages bit-for-bit).
    ref_score, ref_path = _ref_viterbi(feats, params["transitions"])
    assert tag_seq == ref_path, (tag_seq, ref_path)
    np.testing.assert_allclose(score, ref_score, rtol=1e-5, atol=1e-4)

    assert len(tag_seq) == S and all(0 <= t < T for t in tag_seq)
    assert np.isfinite(score)

    print("KERNEL_OK")
</pallas_src>

<mosaic_0001>
module attributes {stable_mosaic.version = 11 : i64} {
  func.func @_bilstm_crf_kernel(%arg0: i32, %arg1: memref<8x16xf32, #tpu.memory_space<vmem>>, %arg2: memref<16x128xf32, #tpu.memory_space<vmem>>, %arg3: memref<1x128xf32, #tpu.memory_space<vmem>>, %arg4: memref<16x64xf32, #tpu.memory_space<vmem>>, %arg5: memref<16x64xf32, #tpu.memory_space<vmem>>, %arg6: memref<2x16xf32, #tpu.memory_space<vmem>>, %arg7: memref<2x16xf32, #tpu.memory_space<vmem>>, %arg8: memref<32x5xf32, #tpu.memory_space<vmem>>, %arg9: memref<1x5xf32, #tpu.memory_space<vmem>>, %arg10: memref<5x5xf32, #tpu.memory_space<vmem>>, %arg11: memref<1x5xf32, #tpu.memory_space<vmem>>, %arg12: memref<8x5xf32, #tpu.memory_space<vmem>>, %arg13: memref<8x1xi32, #tpu.memory_space<vmem>>, %arg14: memref<1x1xf32, #tpu.memory_space<vmem>>, %arg15: memref<1x1xi32, #tpu.memory_space<vmem>>, %arg16: memref<8x128xf32, #tpu.memory_space<vmem>>, %arg17: memref<8x16xf32, #tpu.memory_space<vmem>>, %arg18: memref<8x16xf32, #tpu.memory_space<vmem>>, %arg19: memref<8x5xf32, #tpu.memory_space<vmem>>, %arg20: memref<8x5xf32, #tpu.memory_space<vmem>>) attributes {dimension_semantics = [#tpu.dimension_semantics<arbitrary>], iteration_bounds = array<i64: 1>, scalar_prefetch = 0 : i64, scratch_operands = 5 : i64, tpu.core_type = #tpu.core_type<tc>, window_params = [{pipeline_mode = #tpu.pipeline_mode<synchronous>, transform_indices = @transform_0, window_bounds = array<i64: 8, 16>}, {pipeline_mode = #tpu.pipeline_mode<synchronous>, transform_indices = @transform_1, window_bounds = array<i64: 16, 128>}, {pipeline_mode = #tpu.pipeline_mode<synchronous>, transform_indices = @transform_2, window_bounds = array<i64: 1, 128>}, {pipeline_mode = #tpu.pipeline_mode<synchronous>, transform_indices = @transform_3, window_bounds = array<i64: 16, 64>}, {pipeline_mode = #tpu.pipeline_mode<synchronous>, transform_indices = @transform_4, window_bounds = array<i64: 16, 64>}, {pipeline_mode = #tpu.pipeline_mode<synchronous>, transform_indices = @transform_5, window_bounds = array<i64: 2, 16>}, {pipeline_mode = #tpu.pipeline_mode<synchronous>, transform_indices = @transform_6, window_bounds = array<i64: 2, 16>}, {pipeline_mode = #tpu.pipeline_mode<synchronous>, transform_indices = @transform_7, window_bounds = array<i64: 32, 5>}, {pipeline_mode = #tpu.pipeline_mode<synchronous>, transform_indices = @transform_8, window_bounds = array<i64: 1, 5>}, {pipeline_mode = #tpu.pipeline_mode<synchronous>, transform_indices = @transform_9, window_bounds = array<i64: 5, 5>}, {pipeline_mode = #tpu.pipeline_mode<synchronous>, transform_indices = @transform_10, window_bounds = array<i64: 1, 5>}, {pipeline_mode = #tpu.pipeline_mode<synchronous>, transform_indices = @transform_11, window_bounds = array<i64: 8, 5>}, {pipeline_mode = #tpu.pipeline_mode<synchronous>, transform_indices = @transform_12, window_bounds = array<i64: 8, 1>}, {pipeline_mode = #tpu.pipeline_mode<synchronous>, transform_indices = @transform_13, window_bounds = array<i64: 1, 1>}, {pipeline_mode = #tpu.pipeline_mode<synchronous>, transform_indices = @transform_14, window_bounds = array<i64: 1, 1>}]} {
    %c0 = arith.constant 0 : index
    %c0_0 = arith.constant 0 : index
    %0 = vector.load %arg1[%c0, %c0_0] : memref<8x16xf32, #tpu.memory_space<vmem>>, vector<8x16xf32>
    %c0_1 = arith.constant 0 : index
    %c0_2 = arith.constant 0 : index
    %1 = vector.load %arg2[%c0_1, %c0_2] : memref<16x128xf32, #tpu.memory_space<vmem>>, vector<16x128xf32>
    %cst = arith.constant dense<0.000000e+00> : vector<8x128xf32>
    %2 = tpu.matmul %0, %1, %cst {dimension_numbers = #tpu.dot_dimension_numbers<[1], [0], [0], [1], [0, 0, 1, 1], [], []>} : vector<8x16xf32>, vector<16x128xf32>, vector<8x128xf32> -> vector<8x128xf32>
    %c0_3 = arith.constant 0 : index
    %c0_4 = arith.constant 0 : index
    %3 = vector.load %arg3[%c0_3, %c0_4] : memref<1x128xf32, #tpu.memory_space<vmem>>, vector<1x128xf32>
    %4 = vector.broadcast %3 : vector<1x128xf32> to vector<8x128xf32>
    %5 = arith.addf %2, %4 : vector<8x128xf32>
    %c0_5 = arith.constant 0 : index
    %c0_6 = arith.constant 0 : index
    %6 = vector.load %arg16[%c0_5, %c0_6] : memref<8x128xf32, #tpu.memory_space<vmem>>, vector<8x128xf32>
    tpu.vector_store %arg16[%c0_5, %c0_6], %5 {strides = array<i32>} : memref<8x128xf32, #tpu.memory_space<vmem>>, vector<8x128xf32>,
    %c0_7 = arith.constant 0 : index
    %c0_8 = arith.constant 0 : index
    %7 = vector.load %arg4[%c0_7, %c0_8] : memref<16x64xf32, #tpu.memory_space<vmem>>, vector<16x64xf32>
    %c0_9 = arith.constant 0 : index
    %c0_10 = arith.constant 0 : index
    %8 = vector.load %arg5[%c0_9, %c0_10] : memref<16x64xf32, #tpu.memory_space<vmem>>, vector<16x64xf32>
    %c0_11 = arith.constant 0 : index
    %c0_12 = arith.constant 0 : index
    %9 = vector.load %arg6[%c0_11, %c0_12] : memref<2x16xf32, #tpu.memory_space<vmem>>, vector<1x16xf32>
    %c0_13 = arith.constant 0 : index
    %c0_14 = arith.constant 0 : index
    %10 = vector.load %arg7[%c0_13, %c0_14] : memref<2x16xf32, #tpu.memory_space<vmem>>, vector<1x16xf32>
    %c1 = arith.constant 1 : index
    %c0_15 = arith.constant 0 : index
    %11 = vector.load %arg6[%c1, %c0_15] : memref<2x16xf32, #tpu.memory_space<vmem>>, vector<1x16xf32>
    %c1_16 = arith.constant 1 : index
    %c0_17 = arith.constant 0 : index
    %12 = vector.load %arg7[%c1_16, %c0_17] : memref<2x16xf32, #tpu.memory_space<vmem>>, vector<1x16xf32>
    %c0_i32 = arith.constant 0 : i32
    %c7_i32 = arith.constant 7 : i32
    %13 = arith.subi %c7_i32, %c0_i32 : i32
    %14 = arith.index_cast %c0_i32 : i32 to index
    %c0_18 = arith.constant 0 : index
    %15 = vector.load %arg16[%14, %c0_18] : memref<8x128xf32, #tpu.memory_space<vmem>>, vector<1x64xf32>
    %cst_19 = arith.constant dense<0.000000e+00> : vector<1x64xf32>
    %16 = tpu.matmul %9, %7, %cst_19 {dimension_numbers = #tpu.dot_dimension_numbers<[1], [0], [0], [1], [0, 0, 1, 1], [], []>} : vector<1x16xf32>, vector<16x64xf32>, vector<1x64xf32> -> vector<1x64xf32>
    %17 = arith.addf %16, %15 : vector<1x64xf32>
    %18 = vector.extract_strided_slice %17 {offsets = [0, 0], sizes = [1, 48], strides = [1, 1]} : vector<1x64xf32> to vector<1x48xf32>
    %19 = arith.negf %18 : vector<1x48xf32>
    %20 = math.exp %19 : vector<1x48xf32>
    %cst_20 = arith.constant 1.000000e+00 : f32
    %21 = vector.broadcast %cst_20 : f32 to vector<1x48xf32>
    %22 = arith.addf %21, %20 : vector<1x48xf32>
    %23 = arith.divf %21, %22 : vector<1x48xf32>
    %24 = vector.extract_strided_slice %17 {offsets = [0, 48], sizes = [1, 16], strides = [1, 1]} : vector<1x64xf32> to vector<1x16xf32>
    %25 = math.tanh %24 : vector<1x16xf32>
    %26 = vector.extract_strided_slice %23 {offsets = [0, 16], sizes = [1, 16], strides = [1, 1]} : vector<1x48xf32> to vector<1x16xf32>
    %27 = arith.mulf %26, %10 : vector<1x16xf32>
    %28 = vector.extract_strided_slice %23 {offsets = [0, 0], sizes = [1, 16], strides = [1, 1]} : vector<1x48xf32> to vector<1x16xf32>
    %29 = arith.mulf %28, %25 : vector<1x16xf32>
    %30 = arith.addf %27, %29 : vector<1x16xf32>
    %31 = vector.extract_strided_slice %23 {offsets = [0, 32], sizes = [1, 16], strides = [1, 1]} : vector<1x48xf32> to vector<1x16xf32>
    %32 = math.tanh %30 : vector<1x16xf32>
    %33 = arith.mulf %31, %32 : vector<1x16xf32>
    %34 = arith.index_cast %13 : i32 to index
    %c64 = arith.constant 64 : index
    %35 = vector.load %arg16[%34, %c64] : memref<8x128xf32, #tpu.memory_space<vmem>>, vector<1x64xf32>
    %cst_21 = arith.constant dense<0.000000e+00> : vector<1x64xf32>
    %36 = tpu.matmul %11, %8, %cst_21 {dimension_numbers = #tpu.dot_dimension_numbers<[1], [0], [0], [1], [0, 0, 1, 1], [], []>} : vector<1x16xf32>, vector<16x64xf32>, vector<1x64xf32> -> vector<1x64xf32>
    %37 = arith.addf %36, %35 : vector<1x64xf32>
    %38 = vector.extract_strided_slice %37 {offsets = [0, 0], sizes = [1, 48], strides = [1, 1]} : vector<1x64xf32> to vector<1x48xf32>
    %39 = arith.negf %38 : vector<1x48xf32>
    %40 = math.exp %39 : vector<1x48xf32>
    %cst_22 = arith.constant 1.000000e+00 : f32
    %41 = vector.broadcast %cst_22 : f32 to vector<1x48xf32>
    %42 = arith.addf %41, %40 : vector<1x48xf32>
    %43 = arith.divf %41, %42 : vector<1x48xf32>
    %44 = vector.extract_strided_slice %37 {offsets = [0, 48], sizes = [1, 16], strides = [1, 1]} : vector<1x64xf32> to vector<1x16xf32>
    %45 = math.tanh %44 : vector<1x16xf32>
    %46 = vector.extract_strided_slice %43 {offsets = [0, 16], sizes = [1, 16], strides = [1, 1]} : vector<1x48xf32> to vector<1x16xf32>
    %47 = arith.mulf %46, %12 : vector<1x16xf32>
    %48 = vector.extract_strided_slice %43 {offsets = [0, 0], sizes = [1, 16], strides = [1, 1]} : vector<1x48xf32> to vector<1x16xf32>
    %49 = arith.mulf %48, %45 : vector<1x16xf32>
    %50 = arith.addf %47, %49 : vector<1x16xf32>
    %51 = vector.extract_strided_slice %43 {offsets = [0, 32], sizes = [1, 16], strides = [1, 1]} : vector<1x48xf32> to vector<1x16xf32>
    %52 = math.tanh %50 : vector<1x16xf32>
    %53 = arith.mulf %51, %52 : vector<1x16xf32>
    %54 = arith.index_cast %c0_i32 : i32 to index
    %c0_23 = arith.constant 0 : index
    %55 = vector.load %arg17[%54, %c0_23] : memref<8x16xf32, #tpu.memory_space<vmem>>, vector<1x16xf32>
    tpu.vector_store %arg17[%54, %c0_23], %33 {strides = array<i32>} : memref<8x16xf32, #tpu.memory_space<vmem>>, vector<1x16xf32>,
    %56 = arith.index_cast %13 : i32 to index
    %c0_24 = arith.constant 0 : index
    %57 = vector.load %arg18[%56, %c0_24] : memref<8x16xf32, #tpu.memory_space<vmem>>, vector<1x16xf32>
    tpu.vector_store %arg18[%56, %c0_24], %53 {strides = array<i32>} : memref<8x16xf32, #tpu.memory_space<vmem>>, vector<1x16xf32>,
    %c1_i32 = arith.constant 1 : i32
    %c7_i32_25 = arith.constant 7 : i32
    %58 = arith.subi %c7_i32_25, %c1_i32 : i32
    %59 = arith.index_cast %c1_i32 : i32 to index
    %c0_26 = arith.constant 0 : index
    %60 = vector.load %arg16[%59, %c0_26] : memref<8x128xf32, #tpu.memory_space<vmem>>, vector<1x64xf32>
    %cst_27 = arith.constant dense<0.000000e+00> : vector<1x64xf32>
    %61 = tpu.matmul %33, %7, %cst_27 {dimension_numbers = #tpu.dot_dimension_numbers<[1], [0], [0], [1], [0, 0, 1, 1], [], []>} : vector<1x16xf32>, vector<16x64xf32>, vector<1x64xf32> -> vector<1x64xf32>
    %62 = arith.addf %61, %60 : vector<1x64xf32>
    %63 = vector.extract_strided_slice %62 {offsets = [0, 0], sizes = [1, 48], strides = [1, 1]} : vector<1x64xf32> to vector<1x48xf32>
    %64 = arith.negf %63 : vector<1x48xf32>
    %65 = math.exp %64 : vector<1x48xf32>
    %cst_28 = arith.constant 1.000000e+00 : f32
    %66 = vector.broadcast %cst_28 : f32 to vector<1x48xf32>
    %67 = arith.addf %66, %65 : vector<1x48xf32>
    %68 = arith.divf %66, %67 : vector<1x48xf32>
    %69 = vector.extract_strided_slice %62 {offsets = [0, 48], sizes = [1, 16], strides = [1, 1]} : vector<1x64xf32> to vector<1x16xf32>
    %70 = math.tanh %69 : vector<1x16xf32>
    %71 = vector.extract_strided_slice %68 {offsets = [0, 16], sizes = [1, 16], strides = [1, 1]} : vector<1x48xf32> to vector<1x16xf32>
    %72 = arith.mulf %71, %30 : vector<1x16xf32>
    %73 = vector.extract_strided_slice %68 {offsets = [0, 0], sizes = [1, 16], strides = [1, 1]} : vector<1x48xf32> to vector<1x16xf32>
    %74 = arith.mulf %73, %70 : vector<1x16xf32>
    %75 = arith.addf %72, %74 : vector<1x16xf32>
    %76 = vector.extract_strided_slice %68 {offsets = [0, 32], sizes = [1, 16], strides = [1, 1]} : vector<1x48xf32> to vector<1x16xf32>
    %77 = math.tanh %75 : vector<1x16xf32>
    %78 = arith.mulf %76, %77 : vector<1x16xf32>
    %79 = arith.index_cast %58 : i32 to index
    %c64_29 = arith.constant 64 : index
    %80 = vector.load %arg16[%79, %c64_29] : memref<8x128xf32, #tpu.memory_space<vmem>>, vector<1x64xf32>
    %cst_30 = arith.constant dense<0.000000e+00> : vector<1x64xf32>
    %81 = tpu.matmul %53, %8, %cst_30 {dimension_numbers = #tpu.dot_dimension_numbers<[1], [0], [0], [1], [0, 0, 1, 1], [], []>} : vector<1x16xf32>, vector<16x64xf32>, vector<1x64xf32> -> vector<1x64xf32>
    %82 = arith.addf %81, %80 : vector<1x64xf32>
    %83 = vector.extract_strided_slice %82 {offsets = [0, 0], sizes = [1, 48], strides = [1, 1]} : vector<1x64xf32> to vector<1x48xf32>
    %84 = arith.negf %83 : vector<1x48xf32>
    %85 = math.exp %84 : vector<1x48xf32>
    %cst_31 = arith.constant 1.000000e+00 : f32
    %86 = vector.broadcast %cst_31 : f32 to vector<1x48xf32>
    %87 = arith.addf %86, %85 : vector<1x48xf32>
    %88 = arith.divf %86, %87 : vector<1x48xf32>
    %89 = vector.extract_strided_slice %82 {offsets = [0, 48], sizes = [1, 16], strides = [1, 1]} : vector<1x64xf32> to vector<1x16xf32>
    %90 = math.tanh %89 : vector<1x16xf32>
    %91 = vector.extract_strided_slice %88 {offsets = [0, 16], sizes = [1, 16], strides = [1, 1]} : vector<1x48xf32> to vector<1x16xf32>
    %92 = arith.mulf %91, %50 : vector<1x16xf32>
    %93 = vector.extract_strided_slice %88 {offsets = [0, 0], sizes = [1, 16], strides = [1, 1]} : vector<1x48xf32> to vector<1x16xf32>
    %94 = arith.mulf %93, %90 : vector<1x16xf32>
    %95 = arith.addf %92, %94 : vector<1x16xf32>
    %96 = vector.extract_strided_slice %88 {offsets = [0, 32], sizes = [1, 16], strides = [1, 1]} : vector<1x48xf32> to vector<1x16xf32>
    %97 = math.tanh %95 : vector<1x16xf32>
    %98 = arith.mulf %96, %97 : vector<1x16xf32>
    %99 = arith.index_cast %c1_i32 : i32 to index
    %c0_32 = arith.constant 0 : index
    %100 = vector.load %arg17[%99, %c0_32] : memref<8x16xf32, #tpu.memory_space<vmem>>, vector<1x16xf32>
    tpu.vector_store %arg17[%99, %c0_32], %78 {strides = array<i32>} : memref<8x16xf32, #tpu.memory_space<vmem>>, vector<1x16xf32>,
    %101 = arith.index_cast %58 : i32 to index
    %c0_33 = arith.constant 0 : index
    %102 = vector.load %arg18[%101, %c0_33] : memref<8x16xf32, #tpu.memory_space<vmem>>, vector<1x16xf32>
    tpu.vector_store %arg18[%101, %c0_33], %98 {strides = array<i32>} : memref<8x16xf32, #tpu.memory_space<vmem>>, vector<1x16xf32>,
    %c2_i32 = arith.constant 2 : i32
    %c7_i32_34 = arith.constant 7 : i32
    %103 = arith.subi %c7_i32_34, %c2_i32 : i32
    %104 = arith.index_cast %c2_i32 : i32 to index
    %c0_35 = arith.constant 0 : index
    %105 = vector.load %arg16[%104, %c0_35] : memref<8x128xf32, #tpu.memory_space<vmem>>, vector<1x64xf32>
    %cst_36 = arith.constant dense<0.000000e+00> : vector<1x64xf32>
    %106 = tpu.matmul %78, %7, %cst_36 {dimension_numbers = #tpu.dot_dimension_numbers<[1], [0], [0], [1], [0, 0, 1, 1], [], []>} : vector<1x16xf32>, vector<16x64xf32>, vector<1x64xf32> -> vector<1x64xf32>
    %107 = arith.addf %106, %105 : vector<1x64xf32>
    %108 = vector.extract_strided_slice %107 {offsets = [0, 0], sizes = [1, 48], strides = [1, 1]} : vector<1x64xf32> to vector<1x48xf32>
    %109 = arith.negf %108 : vector<1x48xf32>
    %110 = math.exp %109 : vector<1x48xf32>
    %cst_37 = arith.constant 1.000000e+00 : f32
    %111 = vector.broadcast %cst_37 : f32 to vector<1x48xf32>
    %112 = arith.addf %111, %110 : vector<1x48xf32>
    %113 = arith.divf %111, %112 : vector<1x48xf32>
    %114 = vector.extract_strided_slice %107 {offsets = [0, 48], sizes = [1, 16], strides = [1, 1]} : vector<1x64xf32> to vector<1x16xf32>
    %115 = math.tanh %114 : vector<1x16xf32>
    %116 = vector.extract_strided_slice %113 {offsets = [0, 16], sizes = [1, 16], strides = [1, 1]} : vector<1x48xf32> to vector<1x16xf32>
    %117 = arith.mulf %116, %75 : vector<1x16xf32>
    %118 = vector.extract_strided_slice %113 {offsets = [0, 0], sizes = [1, 16], strides = [1, 1]} : vector<1x48xf32> to vector<1x16xf32>
    %119 = arith.mulf %118, %115 : vector<1x16xf32>
    %120 = arith.addf %117, %119 : vector<1x16xf32>
    %121 = vector.extract_strided_slice %113 {offsets = [0, 32], sizes = [1, 16], strides = [1, 1]} : vector<1x48xf32> to vector<1x16xf32>
    %122 = math.tanh %120 : vector<1x16xf32>
    %123 = arith.mulf %121, %122 : vector<1x16xf32>
    %124 = arith.index_cast %103 : i32 to index
    %c64_38 = arith.constant 64 : index
    %125 = vector.load %arg16[%124, %c64_38] : memref<8x128xf32, #tpu.memory_space<vmem>>, vector<1x64xf32>
    %cst_39 = arith.constant dense<0.000000e+00> : vector<1x64xf32>
    %126 = tpu.matmul %98, %8, %cst_39 {dimension_numbers = #tpu.dot_dimension_numbers<[1], [0], [0], [1], [0, 0, 1, 1], [], []>} : vector<1x16xf32>, vector<16x64xf32>, vector<1x64xf32> -> vector<1x64xf32>
    %127 = arith.addf %126, %125 : vector<1x64xf32>
    %128 = vector.extract_strided_slice %127 {offsets = [0, 0], sizes = [1, 48], strides = [1, 1]} : vector<1x64xf32> to vector<1x48xf32>
    %129 = arith.negf %128 : vector<1x48xf32>
    %130 = math.exp %129 : vector<1x48xf32>
    %cst_40 = arith.constant 1.000000e+00 : f32
    %131 = vector.broadcast %cst_40 : f32 to vector<1x48xf32>
    %132 = arith.addf %131, %130 : vector<1x48xf32>
    %133 = arith.divf %131, %132 : vector<1x48xf32>
    %134 = vector.extract_strided_slice %127 {offsets = [0, 48], sizes = [1, 16], strides = [1, 1]} : vector<1x64xf32> to vector<1x16xf32>
    %135 = math.tanh %134 : vector<1x16xf32>
    %136 = vector.extract_strided_slice %133 {offsets = [0, 16], sizes = [1, 16], strides = [1, 1]} : vector<1x48xf32> to vector<1x16xf32>
    %137 = arith.mulf %136, %95 : vector<1x16xf32>
    %138 = vector.extract_strided_slice %133 {offsets = [0, 0], sizes = [1, 16], strides = [1, 1]} : vector<1x48xf32> to vector<1x16xf32>
    %139 = arith.mulf %138, %135 : vector<1x16xf32>
    %140 = arith.addf %137, %139 : vector<1x16xf32>
    %141 = vector.extract_strided_slice %133 {offsets = [0, 32], sizes = [1, 16], strides = [1, 1]} : vector<1x48xf32> to vector<1x16xf32>
    %142 = math.tanh %140 : vector<1x16xf32>
    %143 = arith.mulf %141, %142 : vector<1x16xf32>
    %144 = arith.index_cast %c2_i32 : i32 to index
    %c0_41 = arith.constant 0 : index
    %145 = vector.load %arg17[%144, %c0_41] : memref<8x16xf32, #tpu.memory_space<vmem>>, vector<1x16xf32>
    tpu.vector_store %arg17[%144, %c0_41], %123 {strides = array<i32>} : memref<8x16xf32, #tpu.memory_space<vmem>>, vector<1x16xf32>,
    %146 = arith.index_cast %103 : i32 to index
    %c0_42 = arith.constant 0 : index
    %147 = vector.load %arg18[%146, %c0_42] : memref<8x16xf32, #tpu.memory_space<vmem>>, vector<1x16xf32>
    tpu.vector_store %arg18[%146, %c0_42], %143 {strides = array<i32>} : memref<8x16xf32, #tpu.memory_space<vmem>>, vector<1x16xf32>,
    %c3_i32 = arith.constant 3 : i32
    %c7_i32_43 = arith.constant 7 : i32
    %148 = arith.subi %c7_i32_43, %c3_i32 : i32
    %149 = arith.index_cast %c3_i32 : i32 to index
    %c0_44 = arith.constant 0 : index
    %150 = vector.load %arg16[%149, %c0_44] : memref<8x128xf32, #tpu.memory_space<vmem>>, vector<1x64xf32>
    %cst_45 = arith.constant dense<0.000000e+00> : vector<1x64xf32>
    %151 = tpu.matmul %123, %7, %cst_45 {dimension_numbers = #tpu.dot_dimension_numbers<[1], [0], [0], [1], [0, 0, 1, 1], [], []>} : vector<1x16xf32>, vector<16x64xf32>, vector<1x64xf32> -> vector<1x64xf32>
    %152 = arith.addf %151, %150 : vector<1x64xf32>
    %153 = vector.extract_strided_slice %152 {offsets = [0, 0], sizes = [1, 48], strides = [1, 1]} : vector<1x64xf32> to vector<1x48xf32>
    %154 = arith.negf %153 : vector<1x48xf32>
    %155 = math.exp %154 : vector<1x48xf32>
    %cst_46 = arith.constant 1.000000e+00 : f32
    %156 = vector.broadcast %cst_46 : f32 to vector<1x48xf32>
    %157 = arith.addf %156, %155 : vector<1x48xf32>
    %158 = arith.divf %156, %157 : vector<1x48xf32>
    %159 = vector.extract_strided_slice %152 {offsets = [0, 48], sizes = [1, 16], strides = [1, 1]} : vector<1x64xf32> to vector<1x16xf32>
    %160 = math.tanh %159 : vector<1x16xf32>
    %161 = vector.extract_strided_slice %158 {offsets = [0, 16], sizes = [1, 16], strides = [1, 1]} : vector<1x48xf32> to vector<1x16xf32>
    %162 = arith.mulf %161, %120 : vector<1x16xf32>
    %163 = vector.extract_strided_slice %158 {offsets = [0, 0], sizes = [1, 16], strides = [1, 1]} : vector<1x48xf32> to vector<1x16xf32>
    %164 = arith.mulf %163, %160 : vector<1x16xf32>
    %165 = arith.addf %162, %164 : vector<1x16xf32>
    %166 = vector.extract_strided_slice %158 {offsets = [0, 32], sizes = [1, 16], strides = [1, 1]} : vector<1x48xf32> to vector<1x16xf32>
    %167 = math.tanh %165 : vector<1x16xf32>
    %168 = arith.mulf %166, %167 : vector<1x16xf32>
    %169 = arith.index_cast %148 : i32 to index
    %c64_47 = arith.constant 64 : index
    %170 = vector.load %arg16[%169, %c64_47] : memref<8x128xf32, #tpu.memory_space<vmem>>, vector<1x64xf32>
    %cst_48 = arith.constant dense<0.000000e+00> : vector<1x64xf32>
    %171 = tpu.matmul %143, %8, %cst_48 {dimension_numbers = #tpu.dot_dimension_numbers<[1], [0], [0], [1], [0, 0, 1, 1], [], []>} : vector<1x16xf32>, vector<16x64xf32>, vector<1x64xf32> -> vector<1x64xf32>
    %172 = arith.addf %171, %170 : vector<1x64xf32>
    %173 = vector.extract_strided_slice %172 {offsets = [0, 0], sizes = [1, 48], strides = [1, 1]} : vector<1x64xf32> to vector<1x48xf32>
    %174 = arith.negf %173 : vector<1x48xf32>
    %175 = math.exp %174 : vector<1x48xf32>
    %cst_49 = arith.constant 1.000000e+00 : f32
    %176 = vector.broadcast %cst_49 : f32 to vector<1x48xf32>
    %177 = arith.addf %176, %175 : vector<1x48xf32>
    %178 = arith.divf %176, %177 : vector<1x48xf32>
    %179 = vector.extract_strided_slice %172 {offsets = [0, 48], sizes = [1, 16], strides = [1, 1]} : vector<1x64xf32> to vector<1x16xf32>
    %180 = math.tanh %179 : vector<1x16xf32>
    %181 = vector.extract_strided_slice %178 {offsets = [0, 16], sizes = [1, 16], strides = [1, 1]} : vector<1x48xf32> to vector<1x16xf32>
    %182 = arith.mulf %181, %140 : vector<1x16xf32>
    %183 = vector.extract_strided_slice %178 {offsets = [0, 0], sizes = [1, 16], strides = [1, 1]} : vector<1x48xf32> to vector<1x16xf32>
    %184 = arith.mulf %183, %180 : vector<1x16xf32>
    %185 = arith.addf %182, %184 : vector<1x16xf32>
    %186 = vector.extract_strided_slice %178 {offsets = [0, 32], sizes = [1, 16], strides = [1, 1]} : vector<1x48xf32> to vector<1x16xf32>
    %187 = math.tanh %185 : vector<1x16xf32>
    %188 = arith.mulf %186, %187 : vector<1x16xf32>
    %189 = arith.index_cast %c3_i32 : i32 to index
    %c0_50 = arith.constant 0 : index
    %190 = vector.load %arg17[%189, %c0_50] : memref<8x16xf32, #tpu.memory_space<vmem>>, vector<1x16xf32>
    tpu.vector_store %arg17[%189, %c0_50], %168 {strides = array<i32>} : memref<8x16xf32, #tpu.memory_space<vmem>>, vector<1x16xf32>,
    %191 = arith.index_cast %148 : i32 to index
    %c0_51 = arith.constant 0 : index
    %192 = vector.load %arg18[%191, %c0_51] : memref<8x16xf32, #tpu.memory_space<vmem>>, vector<1x16xf32>
    tpu.vector_store %arg18[%191, %c0_51], %188 {strides = array<i32>} : memref<8x16xf32, #tpu.memory_space<vmem>>, vector<1x16xf32>,
    %c4_i32 = arith.constant 4 : i32
    %c7_i32_52 = arith.constant 7 : i32
    %193 = arith.subi %c7_i32_52, %c4_i32 : i32
    %194 = arith.index_cast %c4_i32 : i32 to index
    %c0_53 = arith.constant 0 : index
    %195 = vector.load %arg16[%194, %c0_53] : memref<8x128xf32, #tpu.memory_space<vmem>>, vector<1x64xf32>
    %cst_54 = arith.constant dense<0.000000e+00> : vector<1x64xf32>
    %196 = tpu.matmul %168, %7, %cst_54 {dimension_numbers = #tpu.dot_dimension_numbers<[1], [0], [0], [1], [0, 0, 1, 1], [], []>} : vector<1x16xf32>, vector<16x64xf32>, vector<1x64xf32> -> vector<1x64xf32>
    %197 = arith.addf %196, %195 : vector<1x64xf32>
    %198 = vector.extract_strided_slice %197 {offsets = [0, 0], sizes = [1, 48], strides = [1, 1]} : vector<1x64xf32> to vector<1x48xf32>
    %199 = arith.negf %198 : vector<1x48xf32>
    %200 = math.exp %199 : vector<1x48xf32>
    %cst_55 = arith.constant 1.000000e+00 : f32
    %201 = vector.broadcast %cst_55 : f32 to vector<1x48xf32>
    %202 = arith.addf %201, %200 : vector<1x48xf32>
    %203 = arith.divf %201, %202 : vector<1x48xf32>
    %204 = vector.extract_strided_slice %197 {offsets = [0, 48], sizes = [1, 16], strides = [1, 1]} : vector<1x64xf32> to vector<1x16xf32>
    %205 = math.tanh %204 : vector<1x16xf32>
    %206 = vector.extract_strided_slice %203 {offsets = [0, 16], sizes = [1, 16], strides = [1, 1]} : vector<1x48xf32> to vector<1x16xf32>
    %207 = arith.mulf %206, %165 : vector<1x16xf32>
    %208 = vector.extract_strided_slice %203 {offsets = [0, 0], sizes = [1, 16], strides = [1, 1]} : vector<1x48xf32> to vector<1x16xf32>
    %209 = arith.mulf %208, %205 : vector<1x16xf32>
    %210 = arith.addf %207, %209 : vector<1x16xf32>
    %211 = vector.extract_strided_slice %203 {offsets = [0, 32], sizes = [1, 16], strides = [1, 1]} : vector<1x48xf32> to vector<1x16xf32>
    %212 = math.tanh %210 : vector<1x16xf32>
    %213 = arith.mulf %211, %212 : vector<1x16xf32>
    %214 = arith.index_cast %193 : i32 to index
    %c64_56 = arith.constant 64 : index
    %215 = vector.load %arg16[%214, %c64_56] : memref<8x128xf32, #tpu.memory_space<vmem>>, vector<1x64xf32>
    %cst_57 = arith.constant dense<0.000000e+00> : vector<1x64xf32>
    %216 = tpu.matmul %188, %8, %cst_57 {dimension_numbers = #tpu.dot_dimension_numbers<[1], [0], [0], [1], [0, 0, 1, 1], [], []>} : vector<1x16xf32>, vector<16x64xf32>, vector<1x64xf32> -> vector<1x64xf32>
    %217 = arith.addf %216, %215 : vector<1x64xf32>
    %218 = vector.extract_strided_slice %217 {offsets = [0, 0], sizes = [1, 48], strides = [1, 1]} : vector<1x64xf32> to vector<1x48xf32>
    %219 = arith.negf %218 : vector<1x48xf32>
    %220 = math.exp %219 : vector<1x48xf32>
    %cst_58 = arith.constant 1.000000e+00 : f32
    %221 = vector.broadcast %cst_58 : f32 to vector<1x48xf32>
    %222 = arith.addf %221, %220 : vector<1x48xf32>
    %223 = arith.divf %221, %222 : vector<1x48xf32>
    %224 = vector.extract_strided_slice %217 {offsets = [0, 48], sizes = [1, 16], strides = [1, 1]} : vector<1x64xf32> to vector<1x16xf32>
    %225 = math.tanh %224 : vector<1x16xf32>
    %226 = vector.extract_strided_slice %223 {offsets = [0, 16], sizes = [1, 16], strides = [1, 1]} : vector<1x48xf32> to vector<1x16xf32>
    %227 = arith.mulf %226, %185 : vector<1x16xf32>
    %228 = vector.extract_strided_slice %223 {offsets = [0, 0], sizes = [1, 16], strides = [1, 1]} : vector<1x48xf32> to vector<1x16xf32>
    %229 = arith.mulf %228, %225 : vector<1x16xf32>
    %230 = arith.addf %227, %229 : vector<1x16xf32>
    %231 = vector.extract_strided_slice %223 {offsets = [0, 32], sizes = [1, 16], strides = [1, 1]} : vector<1x48xf32> to vector<1x16xf32>
    %232 = math.tanh %230 : vector<1x16xf32>
    %233 = arith.mulf %231, %232 : vector<1x16xf32>
    %234 = arith.index_cast %c4_i32 : i32 to index
    %c0_59 = arith.constant 0 : index
    %235 = vector.load %arg17[%234, %c0_59] : memref<8x16xf32, #tpu.memory_space<vmem>>, vector<1x16xf32>
    tpu.vector_store %arg17[%234, %c0_59], %213 {strides = array<i32>} : memref<8x16xf32, #tpu.memory_space<vmem>>, vector<1x16xf32>,
    %236 = arith.index_cast %193 : i32 to index
    %c0_60 = arith.constant 0 : index
    %237 = vector.load %arg18[%236, %c0_60] : memref<8x16xf32, #tpu.memory_space<vmem>>, vector<1x16xf32>
    tpu.vector_store %arg18[%236, %c0_60], %233 {strides = array<i32>} : memref<8x16xf32, #tpu.memory_space<vmem>>, vector<1x16xf32>,
    %c5_i32 = arith.constant 5 : i32
    %c7_i32_61 = arith.constant 7 : i32
    %238 = arith.subi %c7_i32_61, %c5_i32 : i32
    %239 = arith.index_cast %c5_i32 : i32 to index
    %c0_62 = arith.constant 0 : index
    %240 = vector.load %arg16[%239, %c0_62] : memref<8x128xf32, #tpu.memory_space<vmem>>, vector<1x64xf32>
    %cst_63 = arith.constant dense<0.000000e+00> : vector<1x64xf32>
    %241 = tpu.matmul %213, %7, %cst_63 {dimension_numbers = #tpu.dot_dimension_numbers<[1], [0], [0], [1], [0, 0, 1, 1], [], []>} : vector<1x16xf32>, vector<16x64xf32>, vector<1x64xf32> -> vector<1x64xf32>
    %242 = arith.addf %241, %240 : vector<1x64xf32>
    %243 = vector.extract_strided_slice %242 {offsets = [0, 0], sizes = [1, 48], strides = [1, 1]} : vector<1x64xf32> to vector<1x48xf32>
    %244 = arith.negf %243 : vector<1x48xf32>
    %245 = math.exp %244 : vector<1x48xf32>
    %cst_64 = arith.constant 1.000000e+00 : f32
    %246 = vector.broadcast %cst_64 : f32 to vector<1x48xf32>
    %247 = arith.addf %246, %245 : vector<1x48xf32>
    %248 = arith.divf %246, %247 : vector<1x48xf32>
    %249 = vector.extract_strided_slice %242 {offsets = [0, 48], sizes = [1, 16], strides = [1, 1]} : vector<1x64xf32> to vector<1x16xf32>
    %250 = math.tanh %249 : vector<1x16xf32>
    %251 = vector.extract_strided_slice %248 {offsets = [0, 16], sizes = [1, 16], strides = [1, 1]} : vector<1x48xf32> to vector<1x16xf32>
    %252 = arith.mulf %251, %210 : vector<1x16xf32>
    %253 = vector.extract_strided_slice %248 {offsets = [0, 0], sizes = [1, 16], strides = [1, 1]} : vector<1x48xf32> to vector<1x16xf32>
    %254 = arith.mulf %253, %250 : vector<1x16xf32>
    %255 = arith.addf %252, %254 : vector<1x16xf32>
    %256 = vector.extract_strided_slice %248 {offsets = [0, 32], sizes = [1, 16], strides = [1, 1]} : vector<1x48xf32> to vector<1x16xf32>
    %257 = math.tanh %255 : vector<1x16xf32>
    %258 = arith.mulf %256, %257 : vector<1x16xf32>
    %259 = arith.index_cast %238 : i32 to index
    %c64_65 = arith.constant 64 : index
    %260 = vector.load %arg16[%259, %c64_65] : memref<8x128xf32, #tpu.memory_space<vmem>>, vector<1x64xf32>
    %cst_66 = arith.constant dense<0.000000e+00> : vector<1x64xf32>
    %261 = tpu.matmul %233, %8, %cst_66 {dimension_numbers = #tpu.dot_dimension_numbers<[1], [0], [0], [1], [0, 0, 1, 1], [], []>} : vector<1x16xf32>, vector<16x64xf32>, vector<1x64xf32> -> vector<1x64xf32>
    %262 = arith.addf %261, %260 : vector<1x64xf32>
    %263 = vector.extract_strided_slice %262 {offsets = [0, 0], sizes = [1, 48], strides = [1, 1]} : vector<1x64xf32> to vector<1x48xf32>
    %264 = arith.negf %263 : vector<1x48xf32>
    %265 = math.exp %264 : vector<1x48xf32>
    %cst_67 = arith.constant 1.000000e+00 : f32
    %266 = vector.broadcast %cst_67 : f32 to vector<1x48xf32>
    %267 = arith.addf %266, %265 : vector<1x48xf32>
    %268 = arith.divf %266, %267 : vector<1x48xf32>
    %269 = vector.extract_strided_slice %262 {offsets = [0, 48], sizes = [1, 16], strides = [1, 1]} : vector<1x64xf32> to vector<1x16xf32>
    %270 = math.tanh %269 : vector<1x16xf32>
    %271 = vector.extract_strided_slice %268 {offsets = [0, 16], sizes = [1, 16], strides = [1, 1]} : vector<1x48xf32> to vector<1x16xf32>
    %272 = arith.mulf %271, %230 : vector<1x16xf32>
    %273 = vector.extract_strided_slice %268 {offsets = [0, 0], sizes = [1, 16], strides = [1, 1]} : vector<1x48xf32> to vector<1x16xf32>
    %274 = arith.mulf %273, %270 : vector<1x16xf32>
    %275 = arith.addf %272, %274 : vector<1x16xf32>
    %276 = vector.extract_strided_slice %268 {offsets = [0, 32], sizes = [1, 16], strides = [1, 1]} : vector<1x48xf32> to vector<1x16xf32>
    %277 = math.tanh %275 : vector<1x16xf32>
    %278 = arith.mulf %276, %277 : vector<1x16xf32>
    %279 = arith.index_cast %c5_i32 : i32 to index
    %c0_68 = arith.constant 0 : index
    %280 = vector.load %arg17[%279, %c0_68] : memref<8x16xf32, #tpu.memory_space<vmem>>, vector<1x16xf32>
    tpu.vector_store %arg17[%279, %c0_68], %258 {strides = array<i32>} : memref<8x16xf32, #tpu.memory_space<vmem>>, vector<1x16xf32>,
    %281 = arith.index_cast %238 : i32 to index
    %c0_69 = arith.constant 0 : index
    %282 = vector.load %arg18[%281, %c0_69] : memref<8x16xf32, #tpu.memory_space<vmem>>, vector<1x16xf32>
    tpu.vector_store %arg18[%281, %c0_69], %278 {strides = array<i32>} : memref<8x16xf32, #tpu.memory_space<vmem>>, vector<1x16xf32>,
    %c6_i32 = arith.constant 6 : i32
    %c7_i32_70 = arith.constant 7 : i32
    %283 = arith.subi %c7_i32_70, %c6_i32 : i32
    %284 = arith.index_cast %c6_i32 : i32 to index
    %c0_71 = arith.constant 0 : index
    %285 = vector.load %arg16[%284, %c0_71] : memref<8x128xf32, #tpu.memory_space<vmem>>, vector<1x64xf32>
    %cst_72 = arith.constant dense<0.000000e+00> : vector<1x64xf32>
    %286 = tpu.matmul %258, %7, %cst_72 {dimension_numbers = #tpu.dot_dimension_numbers<[1], [0], [0], [1], [0, 0, 1, 1], [], []>} : vector<1x16xf32>, vector<16x64xf32>, vector<1x64xf32> -> vector<1x64xf32>
    %287 = arith.addf %286, %285 : vector<1x64xf32>
    %288 = vector.extract_strided_slice %287 {offsets = [0, 0], sizes = [1, 48], strides = [1, 1]} : vector<1x64xf32> to vector<1x48xf32>
    %289 = arith.negf %288 : vector<1x48xf32>
    %290 = math.exp %289 : vector<1x48xf32>
    %cst_73 = arith.constant 1.000000e+00 : f32
    %291 = vector.broadcast %cst_73 : f32 to vector<1x48xf32>
    %292 = arith.addf %291, %290 : vector<1x48xf32>
    %293 = arith.divf %291, %292 : vector<1x48xf32>
    %294 = vector.extract_strided_slice %287 {offsets = [0, 48], sizes = [1, 16], strides = [1, 1]} : vector<1x64xf32> to vector<1x16xf32>
    %295 = math.tanh %294 : vector<1x16xf32>
    %296 = vector.extract_strided_slice %293 {offsets = [0, 16], sizes = [1, 16], strides = [1, 1]} : vector<1x48xf32> to vector<1x16xf32>
    %297 = arith.mulf %296, %255 : vector<1x16xf32>
    %298 = vector.extract_strided_slice %293 {offsets = [0, 0], sizes = [1, 16], strides = [1, 1]} : vector<1x48xf32> to vector<1x16xf32>
    %299 = arith.mulf %298, %295 : vector<1x16xf32>
    %300 = arith.addf %297, %299 : vector<1x16xf32>
    %301 = vector.extract_strided_slice %293 {offsets = [0, 32], sizes = [1, 16], strides = [1, 1]} : vector<1x48xf32> to vector<1x16xf32>
    %302 = math.tanh %300 : vector<1x16xf32>
    %303 = arith.mulf %301, %302 : vector<1x16xf32>
    %304 = arith.index_cast %283 : i32 to index
    %c64_74 = arith.constant 64 : index
    %305 = vector.load %arg16[%304, %c64_74] : memref<8x128xf32, #tpu.memory_space<vmem>>, vector<1x64xf32>
    %cst_75 = arith.constant dense<0.000000e+00> : vector<1x64xf32>
    %306 = tpu.matmul %278, %8, %cst_75 {dimension_numbers = #tpu.dot_dimension_numbers<[1], [0], [0], [1], [0, 0, 1, 1], [], []>} : vector<1x16xf32>, vector<16x64xf32>, vector<1x64xf32> -> vector<1x64xf32>
    %307 = arith.addf %306, %305 : vector<1x64xf32>
    %308 = vector.extract_strided_slice %307 {offsets = [0, 0], sizes = [1, 48], strides = [1, 1]} : vector<1x64xf32> to vector<1x48xf32>
    %309 = arith.negf %308 : vector<1x48xf32>
    %310 = math.exp %309 : vector<1x48xf32>
    %cst_76 = arith.constant 1.000000e+00 : f32
    %311 = vector.broadcast %cst_76 : f32 to vector<1x48xf32>
    %312 = arith.addf %311, %310 : vector<1x48xf32>
    %313 = arith.divf %311, %312 : vector<1x48xf32>
    %314 = vector.extract_strided_slice %307 {offsets = [0, 48], sizes = [1, 16], strides = [1, 1]} : vector<1x64xf32> to vector<1x16xf32>
    %315 = math.tanh %314 : vector<1x16xf32>
    %316 = vector.extract_strided_slice %313 {offsets = [0, 16], sizes = [1, 16], strides = [1, 1]} : vector<1x48xf32> to vector<1x16xf32>
    %317 = arith.mulf %316, %275 : vector<1x16xf32>
    %318 = vector.extract_strided_slice %313 {offsets = [0, 0], sizes = [1, 16], strides = [1, 1]} : vector<1x48xf32> to vector<1x16xf32>
    %319 = arith.mulf %318, %315 : vector<1x16xf32>
    %320 = arith.addf %317, %319 : vector<1x16xf32>
    %321 = vector.extract_strided_slice %313 {offsets = [0, 32], sizes = [1, 16], strides = [1, 1]} : vector<1x48xf32> to vector<1x16xf32>
    %322 = math.tanh %320 : vector<1x16xf32>
    %323 = arith.mulf %321, %322 : vector<1x16xf32>
    %324 = arith.index_cast %c6_i32 : i32 to index
    %c0_77 = arith.constant 0 : index
    %325 = vector.load %arg17[%324, %c0_77] : memref<8x16xf32, #tpu.memory_space<vmem>>, vector<1x16xf32>
    tpu.vector_store %arg17[%324, %c0_77], %303 {strides = array<i32>} : memref<8x16xf32, #tpu.memory_space<vmem>>, vector<1x16xf32>,
    %326 = arith.index_cast %283 : i32 to index
    %c0_78 = arith.constant 0 : index
    %327 = vector.load %arg18[%326, %c0_78] : memref<8x16xf32, #tpu.memory_space<vmem>>, vector<1x16xf32>
    tpu.vector_store %arg18[%326, %c0_78], %323 {strides = array<i32>} : memref<8x16xf32, #tpu.memory_space<vmem>>, vector<1x16xf32>,
    %c7_i32_79 = arith.constant 7 : i32
    %c7_i32_80 = arith.constant 7 : i32
    %328 = arith.subi %c7_i32_80, %c7_i32_79 : i32
    %329 = arith.index_cast %c7_i32_79 : i32 to index
    %c0_81 = arith.constant 0 : index
    %330 = vector.load %arg16[%329, %c0_81] : memref<8x128xf32, #tpu.memory_space<vmem>>, vector<1x64xf32>
    %cst_82 = arith.constant dense<0.000000e+00> : vector<1x64xf32>
    %331 = tpu.matmul %303, %7, %cst_82 {dimension_numbers = #tpu.dot_dimension_numbers<[1], [0], [0], [1], [0, 0, 1, 1], [], []>} : vector<1x16xf32>, vector<16x64xf32>, vector<1x64xf32> -> vector<1x64xf32>
    %332 = arith.addf %331, %330 : vector<1x64xf32>
    %333 = vector.extract_strided_slice %332 {offsets = [0, 0], sizes = [1, 48], strides = [1, 1]} : vector<1x64xf32> to vector<1x48xf32>
    %334 = arith.negf %333 : vector<1x48xf32>
    %335 = math.exp %334 : vector<1x48xf32>
    %cst_83 = arith.constant 1.000000e+00 : f32
    %336 = vector.broadcast %cst_83 : f32 to vector<1x48xf32>
    %337 = arith.addf %336, %335 : vector<1x48xf32>
    %338 = arith.divf %336, %337 : vector<1x48xf32>
    %339 = vector.extract_strided_slice %332 {offsets = [0, 48], sizes = [1, 16], strides = [1, 1]} : vector<1x64xf32> to vector<1x16xf32>
    %340 = math.tanh %339 : vector<1x16xf32>
    %341 = vector.extract_strided_slice %338 {offsets = [0, 16], sizes = [1, 16], strides = [1, 1]} : vector<1x48xf32> to vector<1x16xf32>
    %342 = arith.mulf %341, %300 : vector<1x16xf32>
    %343 = vector.extract_strided_slice %338 {offsets = [0, 0], sizes = [1, 16], strides = [1, 1]} : vector<1x48xf32> to vector<1x16xf32>
    %344 = arith.mulf %343, %340 : vector<1x16xf32>
    %345 = arith.addf %342, %344 : vector<1x16xf32>
    %346 = vector.extract_strided_slice %338 {offsets = [0, 32], sizes = [1, 16], strides = [1, 1]} : vector<1x48xf32> to vector<1x16xf32>
    %347 = math.tanh %345 : vector<1x16xf32>
    %348 = arith.mulf %346, %347 : vector<1x16xf32>
    %349 = arith.index_cast %328 : i32 to index
    %c64_84 = arith.constant 64 : index
    %350 = vector.load %arg16[%349, %c64_84] : memref<8x128xf32, #tpu.memory_space<vmem>>, vector<1x64xf32>
    %cst_85 = arith.constant dense<0.000000e+00> : vector<1x64xf32>
    %351 = tpu.matmul %323, %8, %cst_85 {dimension_numbers = #tpu.dot_dimension_numbers<[1], [0], [0], [1], [0, 0, 1, 1], [], []>} : vector<1x16xf32>, vector<16x64xf32>, vector<1x64xf32> -> vector<1x64xf32>
    %352 = arith.addf %351, %350 : vector<1x64xf32>
    %353 = vector.extract_strided_slice %352 {offsets = [0, 0], sizes = [1, 48], strides = [1, 1]} : vector<1x64xf32> to vector<1x48xf32>
    %354 = arith.negf %353 : vector<1x48xf32>
    %355 = math.exp %354 : vector<1x48xf32>
    %cst_86 = arith.constant 1.000000e+00 : f32
    %356 = vector.broadcast %cst_86 : f32 to vector<1x48xf32>
    %357 = arith.addf %356, %355 : vector<1x48xf32>
    %358 = arith.divf %356, %357 : vector<1x48xf32>
    %359 = vector.extract_strided_slice %352 {offsets = [0, 48], sizes = [1, 16], strides = [1, 1]} : vector<1x64xf32> to vector<1x16xf32>
    %360 = math.tanh %359 : vector<1x16xf32>
    %361 = vector.extract_strided_slice %358 {offsets = [0, 16], sizes = [1, 16], strides = [1, 1]} : vector<1x48xf32> to vector<1x16xf32>
    %362 = arith.mulf %361, %320 : vector<1x16xf32>
    %363 = vector.extract_strided_slice %358 {offsets = [0, 0], sizes = [1, 16], strides = [1, 1]} : vector<1x48xf32> to vector<1x16xf32>
    %364 = arith.mulf %363, %360 : vector<1x16xf32>
    %365 = arith.addf %362, %364 : vector<1x16xf32>
    %366 = vector.extract_strided_slice %358 {offsets = [0, 32], sizes = [1, 16], strides = [1, 1]} : vector<1x48xf32> to vector<1x16xf32>
    %367 = math.tanh %365 : vector<1x16xf32>
    %368 = arith.mulf %366, %367 : vector<1x16xf32>
    %369 = arith.index_cast %c7_i32_79 : i32 to index
    %c0_87 = arith.constant 0 : index
    %370 = vector.load %arg17[%369, %c0_87] : memref<8x16xf32, #tpu.memory_space<vmem>>, vector<1x16xf32>
    tpu.vector_store %arg17[%369, %c0_87], %348 {strides = array<i32>} : memref<8x16xf32, #tpu.memory_space<vmem>>, vector<1x16xf32>,
    %371 = arith.index_cast %328 : i32 to index
    %c0_88 = arith.constant 0 : index
    %372 = vector.load %arg18[%371, %c0_88] : memref<8x16xf32, #tpu.memory_space<vmem>>, vector<1x16xf32>
    tpu.vector_store %arg18[%371, %c0_88], %368 {strides = array<i32>} : memref<8x16xf32, #tpu.memory_space<vmem>>, vector<1x16xf32>,
    %c8_i32 = arith.constant 8 : i32
    %c0_89 = arith.constant 0 : index
    %c0_90 = arith.constant 0 : index
    %373 = vector.load %arg8[%c0_89, %c0_90] : memref<32x5xf32, #tpu.memory_space<vmem>>, vector<32x5xf32>
    %c0_91 = arith.constant 0 : index
    %c0_92 = arith.constant 0 : index
    %374 = vector.load %arg17[%c0_91, %c0_92] : memref<8x16xf32, #tpu.memory_space<vmem>>, vector<8x16xf32>
    %375 = vector.extract_strided_slice %373 {offsets = [0, 0], sizes = [16, 5], strides = [1, 1]} : vector<32x5xf32> to vector<16x5xf32>
    %cst_93 = arith.constant dense<0.000000e+00> : vector<8x5xf32>
    %376 = tpu.matmul %374, %375, %cst_93 {dimension_numbers = #tpu.dot_dimension_numbers<[1], [0], [0], [1], [0, 0, 1, 1], [], []>} : vector<8x16xf32>, vector<16x5xf32>, vector<8x5xf32> -> vector<8x5xf32>
    %c0_94 = arith.constant 0 : index
    %c0_95 = arith.constant 0 : index
    %377 = vector.load %arg18[%c0_94, %c0_95] : memref<8x16xf32, #tpu.memory_space<vmem>>, vector<8x16xf32>
    %378 = vector.extract_strided_slice %373 {offsets = [16, 0], sizes = [16, 5], strides = [1, 1]} : vector<32x5xf32> to vector<16x5xf32>
    %cst_96 = arith.constant dense<0.000000e+00> : vector<8x5xf32>
    %379 = tpu.matmul %377, %378, %cst_96 {dimension_numbers = #tpu.dot_dimension_numbers<[1], [0], [0], [1], [0, 0, 1, 1], [], []>} : vector<8x16xf32>, vector<16x5xf32>, vector<8x5xf32> -> vector<8x5xf32>
    %380 = arith.addf %376, %379 : vector<8x5xf32>
    %c0_97 = arith.constant 0 : index
    %c0_98 = arith.constant 0 : index
    %381 = vector.load %arg9[%c0_97, %c0_98] : memref<1x5xf32, #tpu.memory_space<vmem>>, vector<1x5xf32>
    %382 = vector.broadcast %381 : vector<1x5xf32> to vector<8x5xf32>
    %383 = arith.addf %380, %382 : vector<8x5xf32>
    %c0_99 = arith.constant 0 : index
    %c0_100 = arith.constant 0 : index
    %384 = vector.load %arg12[%c0_99, %c0_100] : memref<8x5xf32, #tpu.memory_space<vmem>>, vector<8x5xf32>
    tpu.vector_store %arg12[%c0_99, %c0_100], %383 {strides = array<i32>} : memref<8x5xf32, #tpu.memory_space<vmem>>, vector<8x5xf32>,
    %385 = tpu.iota {dimensions = array<i32: 1>} : vector<1x5xi32>
    %386 = arith.sitofp %385 : vector<1x5xi32> to vector<1x5xf32>
    %387 = tpu.iota {dimensions = array<i32: 0>} : vector<5x1xi32>
    %388 = arith.sitofp %387 : vector<5x1xi32> to vector<5x1xf32>
    %389 = tpu.iota {dimensions = array<i32: 0>} : vector<5x5xi32>
    %390 = arith.sitofp %389 : vector<5x5xi32> to vector<5x5xf32>
    %391 = tpu.iota {dimensions = array<i32: 0>} : vector<5x5xi32>
    %392 = tpu.iota {dimensions = array<i32: 1>} : vector<5x5xi32>
    %393 = arith.cmpi eq, %391, %392 : vector<5x5xi32>
    %394 = arith.extui %393 : vector<5x5xi1> to vector<5x5xi32>
    %395 = arith.sitofp %394 : vector<5x5xi32> to vector<5x5xf32>
    %c0_101 = arith.constant 0 : index
    %c0_102 = arith.constant 0 : index
    %396 = vector.load %arg10[%c0_101, %c0_102] : memref<5x5xf32, #tpu.memory_space<vmem>>, vector<5x5xf32>
    %cst_103 = arith.constant 3.000000e+00 : f32
    %397 = vector.broadcast %cst_103 : f32 to vector<5x1xf32>
    %398 = arith.cmpf oeq, %388, %397 : vector<5x1xf32>
    %cst_104 = arith.constant 0.000000e+00 : f32
    %cst_105 = arith.constant -1.000000e+04 : f32
    %399 = vector.broadcast %cst_104 : f32 to vector<5x1xf32>
    %400 = vector.broadcast %cst_105 : f32 to vector<5x1xf32>
    %401 = arith.select %398, %399, %400 : vector<5x1xi1>, vector<5x1xf32>
    %cst_106 = arith.constant 3.000000e+00 : f32
    %402 = vector.broadcast %cst_106 : f32 to vector<1x5xf32>
    %403 = arith.cmpf oeq, %386, %402 : vector<1x5xf32>
    %cst_107 = arith.constant 0.000000e+00 : f32
    %cst_108 = arith.constant -1.000000e+04 : f32
    %404 = vector.broadcast %cst_107 : f32 to vector<1x5xf32>
    %405 = vector.broadcast %cst_108 : f32 to vector<1x5xf32>
    %406 = arith.select %403, %404, %405 : vector<1x5xi1>, vector<1x5xf32>
    %c0_i32_109 = arith.constant 0 : i32
    %407 = vector.broadcast %401 : vector<5x1xf32> to vector<5x5xf32>
    %408 = arith.addf %396, %407 : vector<5x5xf32>
    %cst_110 = arith.constant dense<0xFF800000> : vector<5xf32>
    %409 = vector.multi_reduction <maximumf>, %408, %cst_110 [0] : vector<5x5xf32> to vector<5xf32>
    %410 = vector.shape_cast %409 : vector<5xf32> to vector<1x5xf32>
    %411 = vector.broadcast %410 : vector<1x5xf32> to vector<5x5xf32>
    %412 = arith.cmpf oeq, %408, %411 : vector<5x5xf32>
    %cst_111 = arith.constant 5.000000e+00 : f32
    %413 = vector.broadcast %cst_111 : f32 to vector<5x5xf32>
    %414 = arith.select %412, %390, %413 : vector<5x5xi1>, vector<5x5xf32>
    %cst_112 = arith.constant dense<0x7F800000> : vector<5xf32>
    %415 = vector.multi_reduction <minimumf>, %414, %cst_112 [0] : vector<5x5xf32> to vector<5xf32>
    %416 = vector.shape_cast %415 : vector<5xf32> to vector<1x5xf32>
    %417 = arith.index_cast %c0_i32_109 : i32 to index
    %c0_113 = arith.constant 0 : index
    %418 = vector.load %arg19[%417, %c0_113] : memref<8x5xf32, #tpu.memory_space<vmem>>, vector<1x5xf32>
    tpu.vector_store %arg19[%417, %c0_113], %416 {strides = array<i32>} : memref<8x5xf32, #tpu.memory_space<vmem>>, vector<1x5xf32>,
    %419 = arith.index_cast %c0_i32_109 : i32 to index
    %c0_114 = arith.constant 0 : index
    %420 = vector.load %arg12[%419, %c0_114] : memref<8x5xf32, #tpu.memory_space<vmem>>, vector<1x5xf32>
    %421 = arith.addf %410, %420 : vector<1x5xf32>
    %422 = vector.broadcast %421 : vector<1x5xf32> to vector<5x5xf32>
    %423 = arith.mulf %395, %422 : vector<5x5xf32>
    %cst_115 = arith.constant dense<0.000000e+00> : vector<5xf32>
    %424 = vector.multi_reduction <add>, %423, %cst_115 [1] : vector<5x5xf32> to vector<5xf32>
    %425 = vector.shape_cast %424 : vector<5xf32> to vector<5x1xf32>
    %c1_i32_116 = arith.constant 1 : i32
    %426 = vector.broadcast %425 : vector<5x1xf32> to vector<5x5xf32>
    %427 = arith.addf %396, %426 : vector<5x5xf32>
    %cst_117 = arith.constant dense<0xFF800000> : vector<5xf32>
    %428 = vector.multi_reduction <maximumf>, %427, %cst_117 [0] : vector<5x5xf32> to vector<5xf32>
    %429 = vector.shape_cast %428 : vector<5xf32> to vector<1x5xf32>
    %430 = vector.broadcast %429 : vector<1x5xf32> to vector<5x5xf32>
    %431 = arith.cmpf oeq, %427, %430 : vector<5x5xf32>
    %cst_118 = arith.constant 5.000000e+00 : f32
    %432 = vector.broadcast %cst_118 : f32 to vector<5x5xf32>
    %433 = arith.select %431, %390, %432 : vector<5x5xi1>, vector<5x5xf32>
    %cst_119 = arith.constant dense<0x7F800000> : vector<5xf32>
    %434 = vector.multi_reduction <minimumf>, %433, %cst_119 [0] : vector<5x5xf32> to vector<5xf32>
    %435 = vector.shape_cast %434 : vector<5xf32> to vector<1x5xf32>
    %436 = arith.index_cast %c1_i32_116 : i32 to index
    %c0_120 = arith.constant 0 : index
    %437 = vector.load %arg19[%436, %c0_120] : memref<8x5xf32, #tpu.memory_space<vmem>>, vector<1x5xf32>
    tpu.vector_store %arg19[%436, %c0_120], %435 {strides = array<i32>} : memref<8x5xf32, #tpu.memory_space<vmem>>, vector<1x5xf32>,
    %438 = arith.index_cast %c1_i32_116 : i32 to index
    %c0_121 = arith.constant 0 : index
    %439 = vector.load %arg12[%438, %c0_121] : memref<8x5xf32, #tpu.memory_space<vmem>>, vector<1x5xf32>
    %440 = arith.addf %429, %439 : vector<1x5xf32>
    %441 = vector.broadcast %440 : vector<1x5xf32> to vector<5x5xf32>
    %442 = arith.mulf %395, %441 : vector<5x5xf32>
    %cst_122 = arith.constant dense<0.000000e+00> : vector<5xf32>
    %443 = vector.multi_reduction <add>, %442, %cst_122 [1] : vector<5x5xf32> to vector<5xf32>
    %444 = vector.shape_cast %443 : vector<5xf32> to vector<5x1xf32>
    %c2_i32_123 = arith.constant 2 : i32
    %445 = vector.broadcast %444 : vector<5x1xf32> to vector<5x5xf32>
    %446 = arith.addf %396, %445 : vector<5x5xf32>
    %cst_124 = arith.constant dense<0xFF800000> : vector<5xf32>
    %447 = vector.multi_reduction <maximumf>, %446, %cst_124 [0] : vector<5x5xf32> to vector<5xf32>
    %448 = vector.shape_cast %447 : vector<5xf32> to vector<1x5xf32>
    %449 = vector.broadcast %448 : vector<1x5xf32> to vector<5x5xf32>
    %450 = arith.cmpf oeq, %446, %449 : vector<5x5xf32>
    %cst_125 = arith.constant 5.000000e+00 : f32
    %451 = vector.broadcast %cst_125 : f32 to vector<5x5xf32>
    %452 = arith.select %450, %390, %451 : vector<5x5xi1>, vector<5x5xf32>
    %cst_126 = arith.constant dense<0x7F800000> : vector<5xf32>
    %453 = vector.multi_reduction <minimumf>, %452, %cst_126 [0] : vector<5x5xf32> to vector<5xf32>
    %454 = vector.shape_cast %453 : vector<5xf32> to vector<1x5xf32>
    %455 = arith.index_cast %c2_i32_123 : i32 to index
    %c0_127 = arith.constant 0 : index
    %456 = vector.load %arg19[%455, %c0_127] : memref<8x5xf32, #tpu.memory_space<vmem>>, vector<1x5xf32>
    tpu.vector_store %arg19[%455, %c0_127], %454 {strides = array<i32>} : memref<8x5xf32, #tpu.memory_space<vmem>>, vector<1x5xf32>,
    %457 = arith.index_cast %c2_i32_123 : i32 to index
    %c0_128 = arith.constant 0 : index
    %458 = vector.load %arg12[%457, %c0_128] : memref<8x5xf32, #tpu.memory_space<vmem>>, vector<1x5xf32>
    %459 = arith.addf %448, %458 : vector<1x5xf32>
    %460 = vector.broadcast %459 : vector<1x5xf32> to vector<5x5xf32>
    %461 = arith.mulf %395, %460 : vector<5x5xf32>
    %cst_129 = arith.constant dense<0.000000e+00> : vector<5xf32>
    %462 = vector.multi_reduction <add>, %461, %cst_129 [1] : vector<5x5xf32> to vector<5xf32>
    %463 = vector.shape_cast %462 : vector<5xf32> to vector<5x1xf32>
    %c3_i32_130 = arith.constant 3 : i32
    %464 = vector.broadcast %463 : vector<5x1xf32> to vector<5x5xf32>
    %465 = arith.addf %396, %464 : vector<5x5xf32>
    %cst_131 = arith.constant dense<0xFF800000> : vector<5xf32>
    %466 = vector.multi_reduction <maximumf>, %465, %cst_131 [0] : vector<5x5xf32> to vector<5xf32>
    %467 = vector.shape_cast %466 : vector<5xf32> to vector<1x5xf32>
    %468 = vector.broadcast %467 : vector<1x5xf32> to vector<5x5xf32>
    %469 = arith.cmpf oeq, %465, %468 : vector<5x5xf32>
    %cst_132 = arith.constant 5.000000e+00 : f32
    %470 = vector.broadcast %cst_132 : f32 to vector<5x5xf32>
    %471 = arith.select %469, %390, %470 : vector<5x5xi1>, vector<5x5xf32>
    %cst_133 = arith.constant dense<0x7F800000> : vector<5xf32>
    %472 = vector.multi_reduction <minimumf>, %471, %cst_133 [0] : vector<5x5xf32> to vector<5xf32>
    %473 = vector.shape_cast %472 : vector<5xf32> to vector<1x5xf32>
    %474 = arith.index_cast %c3_i32_130 : i32 to index
    %c0_134 = arith.constant 0 : index
    %475 = vector.load %arg19[%474, %c0_134] : memref<8x5xf32, #tpu.memory_space<vmem>>, vector<1x5xf32>
    tpu.vector_store %arg19[%474, %c0_134], %473 {strides = array<i32>} : memref<8x5xf32, #tpu.memory_space<vmem>>, vector<1x5xf32>,
    %476 = arith.index_cast %c3_i32_130 : i32 to index
    %c0_135 = arith.constant 0 : index
    %477 = vector.load %arg12[%476, %c0_135] : memref<8x5xf32, #tpu.memory_space<vmem>>, vector<1x5xf32>
    %478 = arith.addf %467, %477 : vector<1x5xf32>
    %479 = vector.broadcast %478 : vector<1x5xf32> to vector<5x5xf32>
    %480 = arith.mulf %395, %479 : vector<5x5xf32>
    %cst_136 = arith.constant dense<0.000000e+00> : vector<5xf32>
    %481 = vector.multi_reduction <add>, %480, %cst_136 [1] : vector<5x5xf32> to vector<5xf32>
    %482 = vector.shape_cast %481 : vector<5xf32> to vector<5x1xf32>
    %c4_i32_137 = arith.constant 4 : i32
    %483 = vector.broadcast %482 : vector<5x1xf32> to vector<5x5xf32>
    %484 = arith.addf %396, %483 : vector<5x5xf32>
    %cst_138 = arith.constant dense<0xFF800000> : vector<5xf32>
    %485 = vector.multi_reduction <maximumf>, %484, %cst_138 [0] : vector<5x5xf32> to vector<5xf32>
    %486 = vector.shape_cast %485 : vector<5xf32> to vector<1x5xf32>
    %487 = vector.broadcast %486 : vector<1x5xf32> to vector<5x5xf32>
    %488 = arith.cmpf oeq, %484, %487 : vector<5x5xf32>
    %cst_139 = arith.constant 5.000000e+00 : f32
    %489 = vector.broadcast %cst_139 : f32 to vector<5x5xf32>
    %490 = arith.select %488, %390, %489 : vector<5x5xi1>, vector<5x5xf32>
    %cst_140 = arith.constant dense<0x7F800000> : vector<5xf32>
    %491 = vector.multi_reduction <minimumf>, %490, %cst_140 [0] : vector<5x5xf32> to vector<5xf32>
    %492 = vector.shape_cast %491 : vector<5xf32> to vector<1x5xf32>
    %493 = arith.index_cast %c4_i32_137 : i32 to index
    %c0_141 = arith.constant 0 : index
    %494 = vector.load %arg19[%493, %c0_141] : memref<8x5xf32, #tpu.memory_space<vmem>>, vector<1x5xf32>
    tpu.vector_store %arg19[%493, %c0_141], %492 {strides = array<i32>} : memref<8x5xf32, #tpu.memory_space<vmem>>, vector<1x5xf32>,
    %495 = arith.index_cast %c4_i32_137 : i32 to index
    %c0_142 = arith.constant 0 : index
    %496 = vector.load %arg12[%495, %c0_142] : memref<8x5xf32, #tpu.memory_space<vmem>>, vector<1x5xf32>
    %497 = arith.addf %486, %496 : vector<1x5xf32>
    %498 = vector.broadcast %497 : vector<1x5xf32> to vector<5x5xf32>
    %499 = arith.mulf %395, %498 : vector<5x5xf32>
    %cst_143 = arith.constant dense<0.000000e+00> : vector<5xf32>
    %500 = vector.multi_reduction <add>, %499, %cst_143 [1] : vector<5x5xf32> to vector<5xf32>
    %501 = vector.shape_cast %500 : vector<5xf32> to vector<5x1xf32>
    %c5_i32_144 = arith.constant 5 : i32
    %502 = vector.broadcast %501 : vector<5x1xf32> to vector<5x5xf32>
    %503 = arith.addf %396, %502 : vector<5x5xf32>
    %cst_145 = arith.constant dense<0xFF800000> : vector<5xf32>
    %504 = vector.multi_reduction <maximumf>, %503, %cst_145 [0] : vector<5x5xf32> to vector<5xf32>
    %505 = vector.shape_cast %504 : vector<5xf32> to vector<1x5xf32>
    %506 = vector.broadcast %505 : vector<1x5xf32> to vector<5x5xf32>
    %507 = arith.cmpf oeq, %503, %506 : vector<5x5xf32>
    %cst_146 = arith.constant 5.000000e+00 : f32
    %508 = vector.broadcast %cst_146 : f32 to vector<5x5xf32>
    %509 = arith.select %507, %390, %508 : vector<5x5xi1>, vector<5x5xf32>
    %cst_147 = arith.constant dense<0x7F800000> : vector<5xf32>
    %510 = vector.multi_reduction <minimumf>, %509, %cst_147 [0] : vector<5x5xf32> to vector<5xf32>
    %511 = vector.shape_cast %510 : vector<5xf32> to vector<1x5xf32>
    %512 = arith.index_cast %c5_i32_144 : i32 to index
    %c0_148 = arith.constant 0 : index
    %513 = vector.load %arg19[%512, %c0_148] : memref<8x5xf32, #tpu.memory_space<vmem>>, vector<1x5xf32>
    tpu.vector_store %arg19[%512, %c0_148], %511 {strides = array<i32>} : memref<8x5xf32, #tpu.memory_space<vmem>>, vector<1x5xf32>,
    %514 = arith.index_cast %c5_i32_144 : i32 to index
    %c0_149 = arith.constant 0 : index
    %515 = vector.load %arg12[%514, %c0_149] : memref<8x5xf32, #tpu.memory_space<vmem>>, vector<1x5xf32>
    %516 = arith.addf %505, %515 : vector<1x5xf32>
    %517 = vector.broadcast %516 : vector<1x5xf32> to vector<5x5xf32>
    %518 = arith.mulf %395, %517 : vector<5x5xf32>
    %cst_150 = arith.constant dense<0.000000e+00> : vector<5xf32>
    %519 = vector.multi_reduction <add>, %518, %cst_150 [1] : vector<5x5xf32> to vector<5xf32>
    %520 = vector.shape_cast %519 : vector<5xf32> to vector<5x1xf32>
    %c6_i32_151 = arith.constant 6 : i32
    %521 = vector.broadcast %520 : vector<5x1xf32> to vector<5x5xf32>
    %522 = arith.addf %396, %521 : vector<5x5xf32>
    %cst_152 = arith.constant dense<0xFF800000> : vector<5xf32>
    %523 = vector.multi_reduction <maximumf>, %522, %cst_152 [0] : vector<5x5xf32> to vector<5xf32>
    %524 = vector.shape_cast %523 : vector<5xf32> to vector<1x5xf32>
    %525 = vector.broadcast %524 : vector<1x5xf32> to vector<5x5xf32>
    %526 = arith.cmpf oeq, %522, %525 : vector<5x5xf32>
    %cst_153 = arith.constant 5.000000e+00 : f32
    %527 = vector.broadcast %cst_153 : f32 to vector<5x5xf32>
    %528 = arith.select %526, %390, %527 : vector<5x5xi1>, vector<5x5xf32>
    %cst_154 = arith.constant dense<0x7F800000> : vector<5xf32>
    %529 = vector.multi_reduction <minimumf>, %528, %cst_154 [0] : vector<5x5xf32> to vector<5xf32>
    %530 = vector.shape_cast %529 : vector<5xf32> to vector<1x5xf32>
    %531 = arith.index_cast %c6_i32_151 : i32 to index
    %c0_155 = arith.constant 0 : index
    %532 = vector.load %arg19[%531, %c0_155] : memref<8x5xf32, #tpu.memory_space<vmem>>, vector<1x5xf32>
    tpu.vector_store %arg19[%531, %c0_155], %530 {strides = array<i32>} : memref<8x5xf32, #tpu.memory_space<vmem>>, vector<1x5xf32>,
    %533 = arith.index_cast %c6_i32_151 : i32 to index
    %c0_156 = arith.constant 0 : index
    %534 = vector.load %arg12[%533, %c0_156] : memref<8x5xf32, #tpu.memory_space<vmem>>, vector<1x5xf32>
    %535 = arith.addf %524, %534 : vector<1x5xf32>
    %536 = vector.broadcast %535 : vector<1x5xf32> to vector<5x5xf32>
    %537 = arith.mulf %395, %536 : vector<5x5xf32>
    %cst_157 = arith.constant dense<0.000000e+00> : vector<5xf32>
    %538 = vector.multi_reduction <add>, %537, %cst_157 [1] : vector<5x5xf32> to vector<5xf32>
    %539 = vector.shape_cast %538 : vector<5xf32> to vector<5x1xf32>
    %c7_i32_158 = arith.constant 7 : i32
    %540 = vector.broadcast %539 : vector<5x1xf32> to vector<5x5xf32>
    %541 = arith.addf %396, %540 : vector<5x5xf32>
    %cst_159 = arith.constant dense<0xFF800000> : vector<5xf32>
    %542 = vector.multi_reduction <maximumf>, %541, %cst_159 [0] : vector<5x5xf32> to vector<5xf32>
    %543 = vector.shape_cast %542 : vector<5xf32> to vector<1x5xf32>
    %544 = vector.broadcast %543 : vector<1x5xf32> to vector<5x5xf32>
    %545 = arith.cmpf oeq, %541, %544 : vector<5x5xf32>
    %cst_160 = arith.constant 5.000000e+00 : f32
    %546 = vector.broadcast %cst_160 : f32 to vector<5x5xf32>
    %547 = arith.select %545, %390, %546 : vector<5x5xi1>, vector<5x5xf32>
    %cst_161 = arith.constant dense<0x7F800000> : vector<5xf32>
    %548 = vector.multi_reduction <minimumf>, %547, %cst_161 [0] : vector<5x5xf32> to vector<5xf32>
    %549 = vector.shape_cast %548 : vector<5xf32> to vector<1x5xf32>
    %550 = arith.index_cast %c7_i32_158 : i32 to index
    %c0_162 = arith.constant 0 : index
    %551 = vector.load %arg19[%550, %c0_162] : memref<8x5xf32, #tpu.memory_space<vmem>>, vector<1x5xf32>
    tpu.vector_store %arg19[%550, %c0_162], %549 {strides = array<i32>} : memref<8x5xf32, #tpu.memory_space<vmem>>, vector<1x5xf32>,
    %552 = arith.index_cast %c7_i32_158 : i32 to index
    %c0_163 = arith.constant 0 : index
    %553 = vector.load %arg12[%552, %c0_163] : memref<8x5xf32, #tpu.memory_space<vmem>>, vector<1x5xf32>
    %554 = arith.addf %543, %553 : vector<1x5xf32>
    %555 = vector.broadcast %554 : vector<1x5xf32> to vector<5x5xf32>
    %556 = arith.mulf %395, %555 : vector<5x5xf32>
    %cst_164 = arith.constant dense<0.000000e+00> : vector<5xf32>
    %557 = vector.multi_reduction <add>, %556, %cst_164 [1] : vector<5x5xf32> to vector<5xf32>
    %558 = vector.shape_cast %557 : vector<5xf32> to vector<5x1xf32>
    %c8_i32_165 = arith.constant 8 : i32
    %c0_166 = arith.constant 0 : index
    %c0_167 = arith.constant 0 : index
    %559 = vector.load %arg11[%c0_166, %c0_167] : memref<1x5xf32, #tpu.memory_space<vmem>>, vector<1x5xf32>
    %560 = arith.addf %554, %559 : vector<1x5xf32>
    %cst_168 = arith.constant dense<0xFF800000> : vector<1xf32>
    %561 = vector.multi_reduction <maximumf>, %560, %cst_168 [1] : vector<1x5xf32> to vector<1xf32>
    %562 = vector.shape_cast %561 : vector<1xf32> to vector<1x1xf32>
    %563 = vector.broadcast %562 : vector<1x1xf32> to vector<1x5xf32>
    %564 = arith.cmpf oeq, %560, %563 : vector<1x5xf32>
    %cst_169 = arith.constant 5.000000e+00 : f32
    %565 = vector.broadcast %cst_169 : f32 to vector<1x5xf32>
    %566 = arith.select %564, %386, %565 : vector<1x5xi1>, vector<1x5xf32>
    %cst_170 = arith.constant dense<0x7F800000> : vector<1xf32>
    %567 = vector.multi_reduction <minimumf>, %566, %cst_170 [1] : vector<1x5xf32> to vector<1xf32>
    %568 = vector.shape_cast %567 : vector<1xf32> to vector<1x1xf32>
    %c0_171 = arith.constant 0 : index
    %c0_172 = arith.constant 0 : index
    %569 = vector.load %arg14[%c0_171, %c0_172] : memref<1x1xf32, #tpu.memory_space<vmem>>, vector<1x1xf32>
    tpu.vector_store %arg14[%c0_171, %c0_172], %562 {strides = array<i32>} : memref<1x1xf32, #tpu.memory_space<vmem>>, vector<1x1xf32>,
    %570 = vector.broadcast %568 : vector<1x1xf32> to vector<1x5xf32>
    %571 = arith.cmpf oeq, %386, %570 : vector<1x5xf32>
    %572 = arith.extui %571 : vector<1x5xi1> to vector<1x5xi32>
    %573 = arith.sitofp %572 : vector<1x5xi32> to vector<1x5xf32>
    %c7 = arith.constant 7 : index
    %c0_173 = arith.constant 0 : index
    %574 = vector.load %arg20[%c7, %c0_173] : memref<8x5xf32, #tpu.memory_space<vmem>>, vector<1x5xf32>
    tpu.vector_store %arg20[%c7, %c0_173], %573 {strides = array<i32>} : memref<8x5xf32, #tpu.memory_space<vmem>>, vector<1x5xf32>,
    %c0_i32_174 = arith.constant 0 : i32
    %c7_i32_175 = arith.constant 7 : i32
    %575 = arith.subi %c7_i32_175, %c0_i32_174 : i32
    %576 = arith.index_cast %575 : i32 to index
    %c0_176 = arith.constant 0 : index
    %577 = vector.load %arg19[%576, %c0_176] : memref<8x5xf32, #tpu.memory_space<vmem>>, vector<1x5xf32>
    %578 = arith.mulf %577, %573 : vector<1x5xf32>
    %cst_177 = arith.constant dense<0.000000e+00> : vector<1xf32>
    %579 = vector.multi_reduction <add>, %578, %cst_177 [1] : vector<1x5xf32> to vector<1xf32>
    %580 = vector.shape_cast %579 : vector<1xf32> to vector<1x1xf32>
    %581 = vector.broadcast %580 : vector<1x1xf32> to vector<1x5xf32>
    %582 = arith.cmpf oeq, %386, %581 : vector<1x5xf32>
    %583 = arith.extui %582 : vector<1x5xi1> to vector<1x5xi32>
    %584 = arith.sitofp %583 : vector<1x5xi32> to vector<1x5xf32>
    %c1_i32_178 = arith.constant 1 : i32
    %585 = arith.subi %575, %c1_i32_178 : i32
    %586 = arith.index_cast %585 : i32 to index
    %c0_179 = arith.constant 0 : index
    %587 = vector.load %arg20[%586, %c0_179] : memref<8x5xf32, #tpu.memory_space<vmem>>, vector<1x5xf32>
    tpu.vector_store %arg20[%586, %c0_179], %584 {strides = array<i32>} : memref<8x5xf32, #tpu.memory_space<vmem>>, vector<1x5xf32>,
    %c1_i32_180 = arith.constant 1 : i32
    %c7_i32_181 = arith.constant 7 : i32
    %588 = arith.subi %c7_i32_181, %c1_i32_180 : i32
    %589 = arith.index_cast %588 : i32 to index
    %c0_182 = arith.constant 0 : index
    %590 = vector.load %arg19[%589, %c0_182] : memref<8x5xf32, #tpu.memory_space<vmem>>, vector<1x5xf32>
    %591 = arith.mulf %590, %584 : vector<1x5xf32>
    %cst_183 = arith.constant dense<0.000000e+00> : vector<1xf32>
    %592 = vector.multi_reduction <add>, %591, %cst_183 [1] : vector<1x5xf32> to vector<1xf32>
    %593 = vector.shape_cast %592 : vector<1xf32> to vector<1x1xf32>
    %594 = vector.broadcast %593 : vector<1x1xf32> to vector<1x5xf32>
    %595 = arith.cmpf oeq, %386, %594 : vector<1x5xf32>
    %596 = arith.extui %595 : vector<1x5xi1> to vector<1x5xi32>
    %597 = arith.sitofp %596 : vector<1x5xi32> to vector<1x5xf32>
    %c1_i32_184 = arith.constant 1 : i32
    %598 = arith.subi %588, %c1_i32_184 : i32
    %599 = arith.index_cast %598 : i32 to index
    %c0_185 = arith.constant 0 : index
    %600 = vector.load %arg20[%599, %c0_185] : memref<8x5xf32, #tpu.memory_space<vmem>>, vector<1x5xf32>
    tpu.vector_store %arg20[%599, %c0_185], %597 {strides = array<i32>} : memref<8x5xf32, #tpu.memory_space<vmem>>, vector<1x5xf32>,
    %c2_i32_186 = arith.constant 2 : i32
    %c7_i32_187 = arith.constant 7 : i32
    %601 = arith.subi %c7_i32_187, %c2_i32_186 : i32
    %602 = arith.index_cast %601 : i32 to index
    %c0_188 = arith.constant 0 : index
    %603 = vector.load %arg19[%602, %c0_188] : memref<8x5xf32, #tpu.memory_space<vmem>>, vector<1x5xf32>
    %604 = arith.mulf %603, %597 : vector<1x5xf32>
    %cst_189 = arith.constant dense<0.000000e+00> : vector<1xf32>
    %605 = vector.multi_reduction <add>, %604, %cst_189 [1] : vector<1x5xf32> to vector<1xf32>
    %606 = vector.shape_cast %605 : vector<1xf32> to vector<1x1xf32>
    %607 = vector.broadcast %606 : vector<1x1xf32> to vector<1x5xf32>
    %608 = arith.cmpf oeq, %386, %607 : vector<1x5xf32>
    %609 = arith.extui %608 : vector<1x5xi1> to vector<1x5xi32>
    %610 = arith.sitofp %609 : vector<1x5xi32> to vector<1x5xf32>
    %c1_i32_190 = arith.constant 1 : i32
    %611 = arith.subi %601, %c1_i32_190 : i32
    %612 = arith.index_cast %611 : i32 to index
    %c0_191 = arith.constant 0 : index
    %613 = vector.load %arg20[%612, %c0_191] : memref<8x5xf32, #tpu.memory_space<vmem>>, vector<1x5xf32>
    tpu.vector_store %arg20[%612, %c0_191], %610 {strides = array<i32>} : memref<8x5xf32, #tpu.memory_space<vmem>>, vector<1x5xf32>,
    %c3_i32_192 = arith.constant 3 : i32
    %c7_i32_193 = arith.constant 7 : i32
    %614 = arith.subi %c7_i32_193, %c3_i32_192 : i32
    %615 = arith.index_cast %614 : i32 to index
    %c0_194 = arith.constant 0 : index
    %616 = vector.load %arg19[%615, %c0_194] : memref<8x5xf32, #tpu.memory_space<vmem>>, vector<1x5xf32>
    %617 = arith.mulf %616, %610 : vector<1x5xf32>
    %cst_195 = arith.constant dense<0.000000e+00> : vector<1xf32>
    %618 = vector.multi_reduction <add>, %617, %cst_195 [1] : vector<1x5xf32> to vector<1xf32>
    %619 = vector.shape_cast %618 : vector<1xf32> to vector<1x1xf32>
    %620 = vector.broadcast %619 : vector<1x1xf32> to vector<1x5xf32>
    %621 = arith.cmpf oeq, %386, %620 : vector<1x5xf32>
    %622 = arith.extui %621 : vector<1x5xi1> to vector<1x5xi32>
    %623 = arith.sitofp %622 : vector<1x5xi32> to vector<1x5xf32>
    %c1_i32_196 = arith.constant 1 : i32
    %624 = arith.subi %614, %c1_i32_196 : i32
    %625 = arith.index_cast %624 : i32 to index
    %c0_197 = arith.constant 0 : index
    %626 = vector.load %arg20[%625, %c0_197] : memref<8x5xf32, #tpu.memory_space<vmem>>, vector<1x5xf32>
    tpu.vector_store %arg20[%625, %c0_197], %623 {strides = array<i32>} : memref<8x5xf32, #tpu.memory_space<vmem>>, vector<1x5xf32>,
    %c4_i32_198 = arith.constant 4 : i32
    %c7_i32_199 = arith.constant 7 : i32
    %627 = arith.subi %c7_i32_199, %c4_i32_198 : i32
    %628 = arith.index_cast %627 : i32 to index
    %c0_200 = arith.constant 0 : index
    %629 = vector.load %arg19[%628, %c0_200] : memref<8x5xf32, #tpu.memory_space<vmem>>, vector<1x5xf32>
    %630 = arith.mulf %629, %623 : vector<1x5xf32>
    %cst_201 = arith.constant dense<0.000000e+00> : vector<1xf32>
    %631 = vector.multi_reduction <add>, %630, %cst_201 [1] : vector<1x5xf32> to vector<1xf32>
    %632 = vector.shape_cast %631 : vector<1xf32> to vector<1x1xf32>
    %633 = vector.broadcast %632 : vector<1x1xf32> to vector<1x5xf32>
    %634 = arith.cmpf oeq, %386, %633 : vector<1x5xf32>
    %635 = arith.extui %634 : vector<1x5xi1> to vector<1x5xi32>
    %636 = arith.sitofp %635 : vector<1x5xi32> to vector<1x5xf32>
    %c1_i32_202 = arith.constant 1 : i32
    %637 = arith.subi %627, %c1_i32_202 : i32
    %638 = arith.index_cast %637 : i32 to index
    %c0_203 = arith.constant 0 : index
    %639 = vector.load %arg20[%638, %c0_203] : memref<8x5xf32, #tpu.memory_space<vmem>>, vector<1x5xf32>
    tpu.vector_store %arg20[%638, %c0_203], %636 {strides = array<i32>} : memref<8x5xf32, #tpu.memory_space<vmem>>, vector<1x5xf32>,
    %c5_i32_204 = arith.constant 5 : i32
    %c7_i32_205 = arith.constant 7 : i32
    %640 = arith.subi %c7_i32_205, %c5_i32_204 : i32
    %641 = arith.index_cast %640 : i32 to index
    %c0_206 = arith.constant 0 : index
    %642 = vector.load %arg19[%641, %c0_206] : memref<8x5xf32, #tpu.memory_space<vmem>>, vector<1x5xf32>
    %643 = arith.mulf %642, %636 : vector<1x5xf32>
    %cst_207 = arith.constant dense<0.000000e+00> : vector<1xf32>
    %644 = vector.multi_reduction <add>, %643, %cst_207 [1] : vector<1x5xf32> to vector<1xf32>
    %645 = vector.shape_cast %644 : vector<1xf32> to vector<1x1xf32>
    %646 = vector.broadcast %645 : vector<1x1xf32> to vector<1x5xf32>
    %647 = arith.cmpf oeq, %386, %646 : vector<1x5xf32>
    %648 = arith.extui %647 : vector<1x5xi1> to vector<1x5xi32>
    %649 = arith.sitofp %648 : vector<1x5xi32> to vector<1x5xf32>
    %c1_i32_208 = arith.constant 1 : i32
    %650 = arith.subi %640, %c1_i32_208 : i32
    %651 = arith.index_cast %650 : i32 to index
    %c0_209 = arith.constant 0 : index
    %652 = vector.load %arg20[%651, %c0_209] : memref<8x5xf32, #tpu.memory_space<vmem>>, vector<1x5xf32>
    tpu.vector_store %arg20[%651, %c0_209], %649 {strides = array<i32>} : memref<8x5xf32, #tpu.memory_space<vmem>>, vector<1x5xf32>,
    %c6_i32_210 = arith.constant 6 : i32
    %c7_i32_211 = arith.constant 7 : i32
    %653 = arith.subi %c7_i32_211, %c6_i32_210 : i32
    %654 = arith.index_cast %653 : i32 to index
    %c0_212 = arith.constant 0 : index
    %655 = vector.load %arg19[%654, %c0_212] : memref<8x5xf32, #tpu.memory_space<vmem>>, vector<1x5xf32>
    %656 = arith.mulf %655, %649 : vector<1x5xf32>
    %cst_213 = arith.constant dense<0.000000e+00> : vector<1xf32>
    %657 = vector.multi_reduction <add>, %656, %cst_213 [1] : vector<1x5xf32> to vector<1xf32>
    %658 = vector.shape_cast %657 : vector<1xf32> to vector<1x1xf32>
    %659 = vector.broadcast %658 : vector<1x1xf32> to vector<1x5xf32>
    %660 = arith.cmpf oeq, %386, %659 : vector<1x5xf32>
    %661 = arith.extui %660 : vector<1x5xi1> to vector<1x5xi32>
    %662 = arith.sitofp %661 : vector<1x5xi32> to vector<1x5xf32>
    %c1_i32_214 = arith.constant 1 : i32
    %663 = arith.subi %653, %c1_i32_214 : i32
    %664 = arith.index_cast %663 : i32 to index
    %c0_215 = arith.constant 0 : index
    %665 = vector.load %arg20[%664, %c0_215] : memref<8x5xf32, #tpu.memory_space<vmem>>, vector<1x5xf32>
    tpu.vector_store %arg20[%664, %c0_215], %662 {strides = array<i32>} : memref<8x5xf32, #tpu.memory_space<vmem>>, vector<1x5xf32>,
    %c7_i32_216 = arith.constant 7 : i32
    %c0_217 = arith.constant 0 : index
    %c0_218 = arith.constant 0 : index
    %666 = vector.load %arg19[%c0_217, %c0_218] : memref<8x5xf32, #tpu.memory_space<vmem>>, vector<1x5xf32>
    %667 = arith.mulf %666, %662 : vector<1x5xf32>
    %cst_219 = arith.constant dense<0.000000e+00> : vector<1xf32>
    %668 = vector.multi_reduction <add>, %667, %cst_219 [1] : vector<1x5xf32> to vector<1xf32>
    %669 = vector.shape_cast %668 : vector<1xf32> to vector<1x1xf32>
    %670 = arith.fptosi %669 : vector<1x1xf32> to vector<1x1xi32>
    %c0_220 = arith.constant 0 : index
    %c0_221 = arith.constant 0 : index
    %671 = vector.load %arg15[%c0_220, %c0_221] : memref<1x1xi32, #tpu.memory_space<vmem>>, vector<1x1xi32>
    tpu.vector_store %arg15[%c0_220, %c0_221], %670 {strides = array<i32>} : memref<1x1xi32, #tpu.memory_space<vmem>>, vector<1x1xi32>,
    %c0_222 = arith.constant 0 : index
    %c0_223 = arith.constant 0 : index
    %672 = vector.load %arg20[%c0_222, %c0_223] : memref<8x5xf32, #tpu.memory_space<vmem>>, vector<8x5xf32>
    %673 = vector.broadcast %386 : vector<1x5xf32> to vector<8x5xf32>
    %674 = arith.mulf %672, %673 : vector<8x5xf32>
    %cst_224 = arith.constant dense<0.000000e+00> : vector<8xf32>
    %675 = vector.multi_reduction <add>, %674, %cst_224 [1] : vector<8x5xf32> to vector<8xf32>
    %676 = vector.shape_cast %675 : vector<8xf32> to vector<8x1xf32>
    %677 = arith.fptosi %676 : vector<8x1xf32> to vector<8x1xi32>
    %c0_225 = arith.constant 0 : index
    %c0_226 = arith.constant 0 : index
    %678 = vector.load %arg13[%c0_225, %c0_226] : memref<8x1xi32, #tpu.memory_space<vmem>>, vector<8x1xi32>
    tpu.vector_store %arg13[%c0_225, %c0_226], %677 {strides = array<i32>} : memref<8x1xi32, #tpu.memory_space<vmem>>, vector<8x1xi32>,
    return
  }
  func.func @transform_0(%arg0: i32) -> (i32, i32) {
    %c0_i32 = arith.constant 0 : i32
    %c0_i32_0 = arith.constant 0 : i32
    %c0_i32_1 = arith.constant 0 : i32
    return %c0_i32, %c0_i32_0 : i32, i32
  }
  func.func @transform_1(%arg0: i32) -> (i32, i32) {
    %c0_i32 = arith.constant 0 : i32
    %c0_i32_0 = arith.constant 0 : i32
    %c0_i32_1 = arith.constant 0 : i32
    return %c0_i32, %c0_i32_0 : i32, i32
  }
  func.func @transform_2(%arg0: i32) -> (i32, i32) {
    %c0_i32 = arith.constant 0 : i32
    %c0_i32_0 = arith.constant 0 : i32
    %c0_i32_1 = arith.constant 0 : i32
    return %c0_i32, %c0_i32_0 : i32, i32
  }
  func.func @transform_3(%arg0: i32) -> (i32, i32) {
    %c0_i32 = arith.constant 0 : i32
    %c0_i32_0 = arith.constant 0 : i32
    %c0_i32_1 = arith.constant 0 : i32
    return %c0_i32, %c0_i32_0 : i32, i32
  }
  func.func @transform_4(%arg0: i32) -> (i32, i32) {
    %c0_i32 = arith.constant 0 : i32
    %c0_i32_0 = arith.constant 0 : i32
    %c0_i32_1 = arith.constant 0 : i32
    return %c0_i32, %c0_i32_0 : i32, i32
  }
  func.func @transform_5(%arg0: i32) -> (i32, i32) {
    %c0_i32 = arith.constant 0 : i32
    %c0_i32_0 = arith.constant 0 : i32
    %c0_i32_1 = arith.constant 0 : i32
    return %c0_i32, %c0_i32_0 : i32, i32
  }
  func.func @transform_6(%arg0: i32) -> (i32, i32) {
    %c0_i32 = arith.constant 0 : i32
    %c0_i32_0 = arith.constant 0 : i32
    %c0_i32_1 = arith.constant 0 : i32
    return %c0_i32, %c0_i32_0 : i32, i32
  }
  func.func @transform_7(%arg0: i32) -> (i32, i32) {
    %c0_i32 = arith.constant 0 : i32
    %c0_i32_0 = arith.constant 0 : i32
    %c0_i32_1 = arith.constant 0 : i32
    return %c0_i32, %c0_i32_0 : i32, i32
  }
  func.func @transform_8(%arg0: i32) -> (i32, i32) {
    %c0_i32 = arith.constant 0 : i32
    %c0_i32_0 = arith.constant 0 : i32
    %c0_i32_1 = arith.constant 0 : i32
    return %c0_i32, %c0_i32_0 : i32, i32
  }
  func.func @transform_9(%arg0: i32) -> (i32, i32) {
    %c0_i32 = arith.constant 0 : i32
    %c0_i32_0 = arith.constant 0 : i32
    %c0_i32_1 = arith.constant 0 : i32
    return %c0_i32, %c0_i32_0 : i32, i32
  }
  func.func @transform_10(%arg0: i32) -> (i32, i32) {
    %c0_i32 = arith.constant 0 : i32
    %c0_i32_0 = arith.constant 0 : i32
    %c0_i32_1 = arith.constant 0 : i32
    return %c0_i32, %c0_i32_0 : i32, i32
  }
  func.func @transform_11(%arg0: i32) -> (i32, i32) {
    %c0_i32 = arith.constant 0 : i32
    %c0_i32_0 = arith.constant 0 : i32
    %c0_i32_1 = arith.constant 0 : i32
    return %c0_i32, %c0_i32_0 : i32, i32
  }
  func.func @transform_12(%arg0: i32) -> (i32, i32) {
    %c0_i32 = arith.constant 0 : i32
    %c0_i32_0 = arith.constant 0 : i32
    %c0_i32_1 = arith.constant 0 : i32
    return %c0_i32, %c0_i32_0 : i32, i32
  }
  func.func @transform_13(%arg0: i32) -> (i32, i32) {
    %c0_i32 = arith.constant 0 : i32
    %c0_i32_0 = arith.constant 0 : i32
    %c0_i32_1 = arith.constant 0 : i32
    return %c0_i32, %c0_i32_0 : i32, i32
  }
  func.func @transform_14(%arg0: i32) -> (i32, i32) {
    %c0_i32 = arith.constant 0 : i32
    %c0_i32_0 = arith.constant 0 : i32
    %c0_i32_1 = arith.constant 0 : i32
    return %c0_i32, %c0_i32_0 : i32, i32
  }
}

</mosaic_0001>

<llo_original>
// kernel: tpu_custom_call.1
$region0: #{tpu_custom_call.1}
  #allocation0 [shape = 'u32[]', space=smem, size = 0x4, offset = 0x4, fixed_abs, tag = 'smem constant byte address 0x4 - core index']
  #allocation1 [shape = 'u32[144,128]{1,0:T(1,128)}', space=vmem, size = 0x12000, scoped, tag = 'internal scratch']
  #allocation2 [shape = 'f32[8,128]{1,0:T(8,128)}', space=vmem, size = 0x1000, scoped, tag = 'scratch operand']
  #allocation3 [shape = 'f32[8,16]{1,0:T(8,128)}', space=vmem, size = 0x1000, scoped, tag = 'scratch operand']
  #allocation4 [shape = 'f32[8,16]{1,0:T(8,128)}', space=vmem, size = 0x1000, scoped, tag = 'scratch operand']
  #allocation5 [shape = 'f32[8,5]{1,0:T(8,128)}', space=vmem, size = 0x1000, scoped, tag = 'scratch operand']
  #allocation6 [shape = 'f32[8,5]{1,0:T(8,128)}', space=vmem, size = 0x1000, scoped, tag = 'scratch operand']
  %s0 = inlined_call_operand.hbm [shape: f32[8,16], index: 0, kind: input, shape index: {}]
  %s1 = inlined_call_operand.vmem [shape: f32[16,128], index: 1, kind: input, shape index: {}]
  %s2 = inlined_call_operand.hbm [shape: f32[1,128], index: 2, kind: input, shape index: {}]
  %s3 = inlined_call_operand.vmem [shape: f32[16,64], index: 3, kind: input, shape index: {}]
  %s4 = inlined_call_operand.vmem [shape: f32[16,64], index: 4, kind: input, shape index: {}]
  %s5 = inlined_call_operand.vmem [shape: f32[2,16], index: 5, kind: input, shape index: {}]
  %s6 = inlined_call_operand.hbm [shape: f32[2,16], index: 6, kind: input, shape index: {}]
  %s7 = inlined_call_operand.vmem [shape: f32[32,5], index: 7, kind: input, shape index: {}]
  %s8 = inlined_call_operand.vmem [shape: f32[1,5], index: 8, kind: input, shape index: {}]
  %s9 = inlined_call_operand.vmem [shape: f32[5,5], index: 9, kind: input, shape index: {}]
  %s10 = inlined_call_operand.vmem [shape: f32[1,5], index: 10, kind: input, shape index: {}]
  %s11 = inlined_call_operand.hbm [shape: f32[8,5], index: 11, kind: output, shape index: {0}]
  %s12 = inlined_call_operand.vmem [shape: s32[8,1], index: 12, kind: output, shape index: {1}]
  %s13 = inlined_call_operand.hbm [shape: f32[1,1], index: 13, kind: output, shape index: {2}]
  %s14 = inlined_call_operand.hbm [shape: s32[1,1], index: 14, kind: output, shape index: {3}]
  %15 = xla_tuple %s11, %s12, %s13, %s14
  %s16 = sld [smem:[#allocation0]]
  $region90: #{tpu_custom_call.1} parent=0
    _
  %s18 = ssub.s32 1, %s16
  %s19 = scalar_select 0, %s18, %s16
  $region1: #{tpu_custom_call.1} parent=0
    #allocation7 [shape = 'u8[4096]{0}', space=vmem, size = 0x1000, scoped, tag = 'input window, operand 0, single buffered']
    #allocation8 [shape = 's32[1]{0}', space=sflag, size = 0x4, scoped, tag = 'scoped memory for tpu_custom_call.1']
    #allocation9 [shape = 's32[1]{0}', space=sflag, size = 0x4, scoped, tag = 'scoped memory for tpu_custom_call.1']
    #allocation10 [shape = 'u8[512]{0}', space=vmem, size = 0x400, scoped, tag = 'input window, operand 2, single buffered']
    #allocation11 [shape = 's32[1]{0}', space=sflag, size = 0x4, scoped, tag = 'scoped memory for tpu_custom_call.1']
    #allocation12 [shape = 'u8[1024]{0}', space=vmem, size = 0x400, scoped, tag = 'input window, operand 6, single buffered']
    #allocation13 [shape = 'u8[4096]{0}', space=vmem, size = 0x1000, scoped, tag = 'output window, operand 0, single buffered']
    #allocation14 [shape = 'u8[512]{0}', space=vmem, size = 0x400, scoped, tag = 'output window, operand 2, single buffered']
    #allocation15 [shape = 's32[1]{0}', space=sflag, size = 0x4, scoped, tag = 'scoped memory for tpu_custom_call.1']
    #allocation16 [shape = 'u8[512]{0}', space=vmem, size = 0x400, scoped, tag = 'output window, operand 3, single buffered']
    %20 = vsyncpa [#allocation8], 0
    %21 = vsyncpa [#allocation11], 0
    %22 = vsyncpa [#allocation9], 0
    %23 = vsyncpa [#allocation15], 0
    // Predicated region
    $region2: #{tpu_custom_call.1} parent=1 // pred_check
      _
    $region3: #{tpu_custom_call.1} parent=1 // pred_check_branch
      %25 = sbr.rel (0) target = $region5
    $region4: #{tpu_custom_call.1} parent=1 // pred_region
      %s27 = ssub.s32 128, 128
      %28 = vsyncadd [#allocation8], %s27
      %s30 = sshll.u32 [#allocation7], 4
      %s31 = int_to_ptr.vmem [resolvable:$true] %s30
      %33 = dma.hbm_to_vmem [thread:$0]  %s0, 128, %s31, [#allocation8]
    $region5: #{tpu_custom_call.1} parent=1 // pred_fallthru
      _
    // Predicated region
    $region6: #{tpu_custom_call.1} parent=1 // pred_check
      _
    $region7: #{tpu_custom_call.1} parent=1 // pred_check_branch
      %35 = sbr.rel (0) target = $region9
    $region8: #{tpu_custom_call.1} parent=1 // pred_region
      _
    $region9: #{tpu_custom_call.1} parent=1 // pred_fallthru
      _
    // Predicated region
    $region10: #{tpu_custom_call.1} parent=1 // pred_check
      _
    $region11: #{tpu_custom_call.1} parent=1 // pred_check_branch
      %37 = sbr.rel (0) target = $region13
    $region12: #{tpu_custom_call.1} parent=1 // pred_region
      %s39 = ssub.s32 16, 16
      %40 = vsyncadd [#allocation11], %s39
      %s42 = sshll.u32 [#allocation10], 4
      %s43 = int_to_ptr.vmem [resolvable:$true] %s42
      %45 = dma.hbm_to_vmem [thread:$0]  %s2, 16, %s43, [#allocation11]
    $region13: #{tpu_custom_call.1} parent=1 // pred_fallthru
      _
    // Predicated region
    $region14: #{tpu_custom_call.1} parent=1 // pred_check
      _
    $region15: #{tpu_custom_call.1} parent=1 // pred_check_branch
      %47 = sbr.rel (0) target = $region17
    $region16: #{tpu_custom_call.1} parent=1 // pred_region
      _
    $region17: #{tpu_custom_call.1} parent=1 // pred_fallthru
      _
    // Predicated region
    $region18: #{tpu_custom_call.1} parent=1 // pred_check
      _
    $region19: #{tpu_custom_call.1} parent=1 // pred_check_branch
      %49 = sbr.rel (0) target = $region21
    $region20: #{tpu_custom_call.1} parent=1 // pred_region
      _
    $region21: #{tpu_custom_call.1} parent=1 // pred_fallthru
      _
    // Predicated region
    $region22: #{tpu_custom_call.1} parent=1 // pred_check
      _
    $region23: #{tpu_custom_call.1} parent=1 // pred_check_branch
      %51 = sbr.rel (0) target = $region25
    $region24: #{tpu_custom_call.1} parent=1 // pred_region
      _
    $region25: #{tpu_custom_call.1} parent=1 // pred_fallthru
      _
    // Predicated region
    $region26: #{tpu_custom_call.1} parent=1 // pred_check
      _
    $region27: #{tpu_custom_call.1} parent=1 // pred_check_branch
      %53 = sbr.rel (0) target = $region29
    $region28: #{tpu_custom_call.1} parent=1 // pred_region
      %s55 = ssub.s32 32, 32
      %56 = vsyncadd [#allocation11], %s55
      %s58 = sshll.u32 [#allocation12], 4
      %s59 = int_to_ptr.vmem [resolvable:$true] %s58
      %61 = dma.hbm_to_vmem [thread:$0]  %s6, 32, %s59, [#allocation11]
    $region29: #{tpu_custom_call.1} parent=1 // pred_fallthru
      _
    // Predicated region
    $region30: #{tpu_custom_call.1} parent=1 // pred_check
      _
    $region31: #{tpu_custom_call.1} parent=1 // pred_check_branch
      %63 = sbr.rel (0) target = $region33
    $region32: #{tpu_custom_call.1} parent=1 // pred_region
      _
    $region33: #{tpu_custom_call.1} parent=1 // pred_fallthru
      _
    // Predicated region
    $region34: #{tpu_custom_call.1} parent=1 // pred_check
      _
    $region35: #{tpu_custom_call.1} parent=1 // pred_check_branch
      %65 = sbr.rel (0) target = $region37
    $region36: #{tpu_custom_call.1} parent=1 // pred_region
      _
    $region37: #{tpu_custom_call.1} parent=1 // pred_fallthru
      _
    // Predicated region
    $region38: #{tpu_custom_call.1} parent=1 // pred_check
      _
    $region39: #{tpu_custom_call.1} parent=1 // pred_check_branch
      %67 = sbr.rel (0) target = $region41
    $region40: #{tpu_custom_call.1} parent=1 // pred_region
      _
    $region41: #{tpu_custom_call.1} parent=1 // pred_fallthru
      _
    // Predicated region
    $region42: #{tpu_custom_call.1} parent=1 // pred_check
      _
    $region43: #{tpu_custom_call.1} parent=1 // pred_check_branch
      %69 = sbr.rel (0) target = $region45
    $region44: #{tpu_custom_call.1} parent=1 // pred_region
      _
    $region45: #{tpu_custom_call.1} parent=1 // pred_fallthru
      _
    // Predicated region
    $region46: #{tpu_custom_call.1} parent=1 // pred_check
      _
    $region47: #{tpu_custom_call.1} parent=1 // pred_check_branch
      %71 = sbr.rel (0) target = $region49
    $region48: #{tpu_custom_call.1} parent=1 // pred_region
      %72 = dma.done [#allocation8], 128
    $region49: #{tpu_custom_call.1} parent=1 // pred_fallthru
      _
    // Predicated region
    $region50: #{tpu_custom_call.1} parent=1 // pred_check
      _
    $region51: #{tpu_custom_call.1} parent=1 // pred_check_branch
      %74 = sbr.rel (0) target = $region53
    $region52: #{tpu_custom_call.1} parent=1 // pred_region
      %75 = dma.done [#allocation11], 16
    $region53: #{tpu_custom_call.1} parent=1 // pred_fallthru
      _
    // Predicated region
    $region54: #{tpu_custom_call.1} parent=1 // pred_check
      _
    $region55: #{tpu_custom_call.1} parent=1 // pred_check_branch
      %77 = sbr.rel (0) target = $region57
    $region56: #{tpu_custom_call.1} parent=1 // pred_region
      %78 = dma.done [#allocation11], 32
    $region57: #{tpu_custom_call.1} parent=1 // pred_fallthru
      _
    %v79 = vld [vmem:[#allocation7] sm:$0xff]
    %v80 = vld [vmem:[%s1] sm:$0xff]
    %v81 = vld [vmem:[%s1 + $0x8] sm:$0xff]
    %v82 = vld [vmem:[#allocation10] sm:$0x1]
    %v84 = vlaneseq
    %v85 = vshrl.u32 %v84, 7
    %v86 = vsub.s32 0, %v85
    %v87 = vrot.slane %v82, %v86
    %vm89 = vcmask 130048
    %v91 = vsel %vm89, %v79, 0
    %93 = vmatprep.subr.mxu0 0.0
    %94 = vmatpush1.msra.mxu0 %v80
    %95 = vmatprep.subr.mxu0 0.0
    %96 = vmatpush1.msra.mxu0 %v81
    %97 = vmatprep.subr.mxu0 0.0
    %98 = vmatpush1.msra.mxu0 0.0
    %99 = vmatprep.subr.mxu0 0.0
    %100 = vmatpush1.msra.mxu0 0.0
    %101 = vmatprep.subr.mxu0 0.0
    %102 = vmatpush1.msra.mxu0 0.0
    %103 = vmatprep.subr.mxu0 0.0
    %104 = vmatpush1.msra.mxu0 0.0
    %105 = vmatprep.subr.mxu0 0.0
    %106 = vmatpush1.msra.mxu0 0.0
    %107 = vmatprep.subr.mxu0 0.0
    %108 = vmatpush1.msra.mxu0 0.0
    %109 = vmatprep.subr.mxu0 0.0
    %110 = vmatpush1.msra.mxu0 0.0
    %111 = vmatprep.subr.mxu0 0.0
    %112 = vmatpush1.msra.mxu0 0.0
    %113 = vmatprep.subr.mxu0 0.0
    %114 = vmatpush1.msra.mxu0 0.0
    %115 = vmatprep.subr.mxu0 0.0
    %116 = vmatpush1.msra.mxu0 0.0
    %117 = vmatprep.subr.mxu0 0.0
    %118 = vmatpush1.msra.mxu0 0.0
    %119 = vmatprep.subr.mxu0 0.0
    %120 = vmatpush1.msra.mxu0 0.0
    %121 = vmatprep.subr.mxu0 0.0
    %122 = vmatpush1.msra.mxu0 0.0
    %123 = vmatprep.subr.mxu0 0.0
    %124 = vmatpush1.msra.mxu0 0.0
    %125 = vmatprep.subr.mxu0 0.0
    %126 = vmatpush1.msra.mxu0 0.0
    %127 = vmatprep.subr.mxu0 0.0
    %128 = vmatpush1.msra.mxu0 0.0
    %129 = vmatprep.subr.mxu0 0.0
    %130 = vmatpush1.msra.mxu0 0.0
    %131 = vmatprep.subr.mxu0 0.0
    %132 = vmatpush1.msra.mxu0 0.0
    %133 = vmatprep.subr.mxu0 0.0
    %134 = vmatpush1.msra.mxu0 0.0
    %135 = vmatprep.subr.mxu0 0.0
    %136 = vmatpush1.msra.mxu0 0.0
    %137 = vmatprep.subr.mxu0 0.0
    %138 = vmatpush1.msra.mxu0 0.0
    %139 = vmatprep.subr.mxu0 0.0
    %140 = vmatpush1.msra.mxu0 0.0
    %141 = vmatprep.subr.mxu0 0.0
    %142 = vmatpush1.msra.mxu0 0.0
    %143 = vmatprep.subr.mxu0 0.0
    %144 = vmatpush1.msra.mxu0 0.0
    %145 = vmatprep.subr.mxu0 0.0
    %146 = vmatpush1.msra.mxu0 0.0
    %147 = vmatprep.subr.mxu0 0.0
    %148 = vmatpush1.msra.mxu0 0.0
    %149 = vmatprep.subr.mxu0 0.0
    %150 = vmatpush1.msra.mxu0 0.0
    %151 = vmatprep.subr.mxu0 0.0
    %152 = vmatpush1.msra.mxu0 0.0
    %153 = vmatprep.subr.mxu0 0.0
    %154 = vmatpush1.msra.mxu0 0.0
    %155 = vmatprep.subr.mxu0 0.0
    %156 = vmatpush1.msra.mxu0 0.0
    %157 = vmatprep.mubr.f32.mxu0 0.0
    %158 = vmatmul.mubr.f32.gmra.mrb[0].mxu0 %v91
    %v159 = vpop.f32.mrb[0].mxu0
    %v160 = vadd.f32 %v87, %v159
    %v161 = vpop.f32.mrb[0].mxu0
    %162 = vdwg.mxu0
    %163 = vst [vmem:[#allocation2] sm:$0xff] %v160
    %v164 = vld [vmem:[%s3] sm:$0xff]
    %v165 = vld [vmem:[%s3 + $0x8] sm:$0xff]
    %v166 = vld [vmem:[%s4] sm:$0xff]
    %v167 = vld [vmem:[%s4 + $0x8] sm:$0xff]
    %v168 = vld [vmem:[%s5] sm:$0x1]
    %v169 = vld [vmem:[#allocation12] sm:$0x1]
    %v170 = vld [vmem:[%s5 + $0x1] sm:$0x1]
    %v171 = vld [vmem:[#allocation12 + $0x1] sm:$0x1]
    %v172 = vld [vmem:[#allocation2] sm:$0x1]
    %v174 = vsel %vm89, %v168, 0
    %176 = vmatprep.subr.mxu0 0.0
    %177 = vmatpush1.msra.mxu0 %v164
    %178 = vmatprep.subr.mxu0 0.0
    %179 = vmatpush1.msra.mxu0 %v165
    %180 = vmatprep.subr.mxu0 0.0
    %181 = vmatpush1.msra.mxu0 0.0
    %182 = vmatprep.subr.mxu0 0.0
    %183 = vmatpush1.msra.mxu0 0.0
    %184 = vmatprep.subr.mxu0 0.0
    %185 = vmatpush1.msra.mxu0 0.0
    %186 = vmatprep.subr.mxu0 0.0
    %187 = vmatpush1.msra.mxu0 0.0
    %188 = vmatprep.subr.mxu0 0.0
    %189 = vmatpush1.msra.mxu0 0.0
    %190 = vmatprep.subr.mxu0 0.0
    %191 = vmatpush1.msra.mxu0 0.0
    %192 = vmatprep.subr.mxu0 0.0
    %193 = vmatpush1.msra.mxu0 0.0
    %194 = vmatprep.subr.mxu0 0.0
    %195 = vmatpush1.msra.mxu0 0.0
    %196 = vmatprep.subr.mxu0 0.0
    %197 = vmatpush1.msra.mxu0 0.0
    %198 = vmatprep.subr.mxu0 0.0
    %199 = vmatpush1.msra.mxu0 0.0
    %200 = vmatprep.subr.mxu0 0.0
    %201 = vmatpush1.msra.mxu0 0.0
    %202 = vmatprep.subr.mxu0 0.0
    %203 = vmatpush1.msra.mxu0 0.0
    %204 = vmatprep.subr.mxu0 0.0
    %205 = vmatpush1.msra.mxu0 0.0
    %206 = vmatprep.subr.mxu0 0.0
    %207 = vmatpush1.msra.mxu0 0.0
    %208 = vmatprep.subr.mxu0 0.0
    %209 = vmatpush1.msra.mxu0 0.0
    %210 = vmatprep.subr.mxu0 0.0
    %211 = vmatpush1.msra.mxu0 0.0
    %212 = vmatprep.subr.mxu0 0.0
    %213 = vmatpush1.msra.mxu0 0.0
    %214 = vmatprep.subr.mxu0 0.0
    %215 = vmatpush1.msra.mxu0 0.0
    %216 = vmatprep.subr.mxu0 0.0
    %217 = vmatpush1.msra.mxu0 0.0
    %218 = vmatprep.subr.mxu0 0.0
    %219 = vmatpush1.msra.mxu0 0.0
    %220 = vmatprep.subr.mxu0 0.0
    %221 = vmatpush1.msra.mxu0 0.0
    %222 = vmatprep.subr.mxu0 0.0
    %223 = vmatpush1.msra.mxu0 0.0
    %224 = vmatprep.subr.mxu0 0.0
    %225 = vmatpush1.msra.mxu0 0.0
    %226 = vmatprep.subr.mxu0 0.0
    %227 = vmatpush1.msra.mxu0 0.0
    %228 = vmatprep.subr.mxu0 0.0
    %229 = vmatpush1.msra.mxu0 0.0
    %230 = vmatprep.subr.mxu0 0.0
    %231 = vmatpush1.msra.mxu0 0.0
    %232 = vmatprep.subr.mxu0 0.0
    %233 = vmatpush1.msra.mxu0 0.0
    %234 = vmatprep.subr.mxu0 0.0
    %235 = vmatpush1.msra.mxu0 0.0
    %236 = vmatprep.subr.mxu0 0.0
    %237 = vmatpush1.msra.mxu0 0.0
    %238 = vmatprep.subr.mxu0 0.0
    %239 = vmatpush1.msra.mxu0 0.0
    %240 = vmatprep.mubr.f32.mxu0 0.0
    %241 = vmatmul.mubr.f32.gmra.mrb[0].mxu0 %v174
    %v242 = vpop.f32.mrb[0].mxu0
    %v243 = vadd.f32 %v172, %v242
    %v244 = vpop.f32.mrb[0].mxu0
    %245 = vdwg.mxu0
    %v246 = vxor.u32 %v243, 2147483648
    %v247 = vmul.f32 %v246, 1.442695
    %v248 = vpow.pop %v247
    %v249 = vadd.f32 %v248, 1.0
    %v250 = vrcp.pop %v249
    %v251 = vmul.f32 1.0, %v250
    %v252 = vtanh.pop %v243
    %254 = vrot.lane.b32.xlu0 %v169, 16
    %v255 = vpop.permute.xlu0 %254
    %v257 = vmul.f32 %v251, %v255
    %259 = vrot.lane.b32.xlu0 %v252, 80
    %v260 = vpop.permute.xlu0 %259
    %v262 = vmul.f32 %v251, %v260
    %264 = vrot.lane.b32.xlu0 %v262, 16
    %v265 = vpop.permute.xlu0 %264
    %v267 = vadd.f32 %v257, %v265
    %v268 = vtanh.pop %v267
    %270 = vrot.lane.b32.xlu0 %v268, 16
    %v271 = vpop.permute.xlu0 %270
    %v273 = vmul.f32 %v251, %v271
    %v274 = vld [vmem:[#allocation2 + $0x7] sm:$0x1]
    %276 = vrot.lane.b32.xlu0 %v274, 64
    %v277 = vpop.permute.xlu0 %276
    %v280 = vsel %vm89, %v170, 0
    %282 = vmatprep.subr.mxu0 0.0
    %283 = vmatpush1.msra.mxu0 %v166
    %284 = vmatprep.subr.mxu0 0.0
    %285 = vmatpush1.msra.mxu0 %v167
    %286 = vmatprep.subr.mxu0 0.0
    %287 = vmatpush1.msra.mxu0 0.0
    %288 = vmatprep.subr.mxu0 0.0
    %289 = vmatpush1.msra.mxu0 0.0
    %290 = vmatprep.subr.mxu0 0.0
    %291 = vmatpush1.msra.mxu0 0.0
    %292 = vmatprep.subr.mxu0 0.0
    %293 = vmatpush1.msra.mxu0 0.0
    %294 = vmatprep.subr.mxu0 0.0
    %295 = vmatpush1.msra.mxu0 0.0
    %296 = vmatprep.subr.mxu0 0.0
    %297 = vmatpush1.msra.mxu0 0.0
    %298 = vmatprep.subr.mxu0 0.0
    %299 = vmatpush1.msra.mxu0 0.0
    %300 = vmatprep.subr.mxu0 0.0
    %301 = vmatpush1.msra.mxu0 0.0
    %302 = vmatprep.subr.mxu0 0.0
    %303 = vmatpush1.msra.mxu0 0.0
    %304 = vmatprep.subr.mxu0 0.0
    %305 = vmatpush1.msra.mxu0 0.0
    %306 = vmatprep.subr.mxu0 0.0
    %307 = vmatpush1.msra.mxu0 0.0
    %308 = vmatprep.subr.mxu0 0.0
    %309 = vmatpush1.msra.mxu0 0.0
    %310 = vmatprep.subr.mxu0 0.0
    %311 = vmatpush1.msra.mxu0 0.0
    %312 = vmatprep.subr.mxu0 0.0
    %313 = vmatpush1.msra.mxu0 0.0
    %314 = vmatprep.subr.mxu0 0.0
    %315 = vmatpush1.msra.mxu0 0.0
    %316 = vmatprep.subr.mxu0 0.0
    %317 = vmatpush1.msra.mxu0 0.0
    %318 = vmatprep.subr.mxu0 0.0
    %319 = vmatpush1.msra.mxu0 0.0
    %320 = vmatprep.subr.mxu0 0.0
    %321 = vmatpush1.msra.mxu0 0.0
    %322 = vmatprep.subr.mxu0 0.0
    %323 = vmatpush1.msra.mxu0 0.0
    %324 = vmatprep.subr.mxu0 0.0
    %325 = vmatpush1.msra.mxu0 0.0
    %326 = vmatprep.subr.mxu0 0.0
    %327 = vmatpush1.msra.mxu0 0.0
    %328 = vmatprep.subr.mxu0 0.0
    %329 = vmatpush1.msra.mxu0 0.0
    %330 = vmatprep.subr.mxu0 0.0
    %331 = vmatpush1.msra.mxu0 0.0
    %332 = vmatprep.subr.mxu0 0.0
    %333 = vmatpush1.msra.mxu0 0.0
    %334 = vmatprep.subr.mxu0 0.0
    %335 = vmatpush1.msra.mxu0 0.0
    %336 = vmatprep.subr.mxu0 0.0
    %337 = vmatpush1.msra.mxu0 0.0
    %338 = vmatprep.subr.mxu0 0.0
    %339 = vmatpush1.msra.mxu0 0.0
    %340 = vmatprep.subr.mxu0 0.0
    %341 = vmatpush1.msra.mxu0 0.0
    %342 = vmatprep.subr.mxu0 0.0
    %343 = vmatpush1.msra.mxu0 0.0
    %344 = vmatprep.subr.mxu0 0.0
    %345 = vmatpush1.msra.mxu0 0.0
    %346 = vmatprep.mubr.f32.mxu0 0.0
    %347 = vmatmul.mubr.f32.gmra.mrb[0].mxu0 %v280
    %v348 = vpop.f32.mrb[0].mxu0
    %v349 = vadd.f32 %v277, %v348
    %v350 = vpop.f32.mrb[0].mxu0
    %351 = vdwg.mxu0
    %v352 = vxor.u32 %v349, 2147483648
    %v353 = vmul.f32 %v352, 1.442695
    %v354 = vpow.pop %v353
    %v355 = vadd.f32 %v354, 1.0
    %v356 = vrcp.pop %v355
    %v357 = vmul.f32 1.0, %v356
    %v358 = vtanh.pop %v349
    %360 = vrot.lane.b32.xlu0 %v171, 16
    %v361 = vpop.permute.xlu0 %360
    %v363 = vmul.f32 %v357, %v361
    %365 = vrot.lane.b32.xlu0 %v358, 80
    %v366 = vpop.permute.xlu0 %365
    %v368 = vmul.f32 %v357, %v366
    %370 = vrot.lane.b32.xlu0 %v368, 16
    %v371 = vpop.permute.xlu0 %370
    %v373 = vadd.f32 %v363, %v371
    %v374 = vtanh.pop %v373
    %376 = vrot.lane.b32.xlu0 %v374, 16
    %v377 = vpop.permute.xlu0 %376
    %v379 = vmul.f32 %v357, %v377
    %381 = vrot.lane.b32.xlu0 %v273, 96
    %v382 = vpop.permute.xlu0 %381
    %vm384 = vcmask 122880
    %385 = vst.msk [vmem:[#allocation3] sm:$0x1] %vm384, %v382
    %387 = vrot.lane.b32.xlu0 %v379, 96
    %v388 = vpop.permute.xlu0 %387
    %390 = vst.msk [vmem:[#allocation4 + $0x7] sm:$0x1] %vm384, %v388
    %v391 = vld [vmem:[#allocation2 + $0x1] sm:$0x1]
    %v392 = vsel %vm89, %v382, 0
    %394 = vmatprep.subr.mxu0 0.0
    %395 = vmatpush1.msra.mxu0 %v164
    %396 = vmatprep.subr.mxu0 0.0
    %397 = vmatpush1.msra.mxu0 %v165
    %398 = vmatprep.subr.mxu0 0.0
    %399 = vmatpush1.msra.mxu0 0.0
    %400 = vmatprep.subr.mxu0 0.0
    %401 = vmatpush1.msra.mxu0 0.0
    %402 = vmatprep.subr.mxu0 0.0
    %403 = vmatpush1.msra.mxu0 0.0
    %404 = vmatprep.subr.mxu0 0.0
    %405 = vmatpush1.msra.mxu0 0.0
    %406 = vmatprep.subr.mxu0 0.0
    %407 = vmatpush1.msra.mxu0 0.0
    %408 = vmatprep.subr.mxu0 0.0
    %409 = vmatpush1.msra.mxu0 0.0
    %410 = vmatprep.subr.mxu0 0.0
    %411 = vmatpush1.msra.mxu0 0.0
    %412 = vmatprep.subr.mxu0 0.0
    %413 = vmatpush1.msra.mxu0 0.0
    %414 = vmatprep.subr.mxu0 0.0
    %415 = vmatpush1.msra.mxu0 0.0
    %416 = vmatprep.subr.mxu0 0.0
    %417 = vmatpush1.msra.mxu0 0.0
    %418 = vmatprep.subr.mxu0 0.0
    %419 = vmatpush1.msra.mxu0 0.0
    %420 = vmatprep.subr.mxu0 0.0
    %421 = vmatpush1.msra.mxu0 0.0
    %422 = vmatprep.subr.mxu0 0.0
    %423 = vmatpush1.msra.mxu0 0.0
    %424 = vmatprep.subr.mxu0 0.0
    %425 = vmatpush1.msra.mxu0 0.0
    %426 = vmatprep.subr.mxu0 0.0
    %427 = vmatpush1.msra.mxu0 0.0
    %428 = vmatprep.subr.mxu0 0.0
    %429 = vmatpush1.msra.mxu0 0.0
    %430 = vmatprep.subr.mxu0 0.0
    %431 = vmatpush1.msra.mxu0 0.0
    %432 = vmatprep.subr.mxu0 0.0
    %433 = vmatpush1.msra.mxu0 0.0
    %434 = vmatprep.subr.mxu0 0.0
    %435 = vmatpush1.msra.mxu0 0.0
    %436 = vmatprep.subr.mxu0 0.0
    %437 = vmatpush1.msra.mxu0 0.0
    %438 = vmatprep.subr.mxu0 0.0
    %439 = vmatpush1.msra.mxu0 0.0
    %440 = vmatprep.subr.mxu0 0.0
    %441 = vmatpush1.msra.mxu0 0.0
    %442 = vmatprep.subr.mxu0 0.0
    %443 = vmatpush1.msra.mxu0 0.0
    %444 = vmatprep.subr.mxu0 0.0
    %445 = vmatpush1.msra.mxu0 0.0
    %446 = vmatprep.subr.mxu0 0.0
    %447 = vmatpush1.msra.mxu0 0.0
    %448 = vmatprep.subr.mxu0 0.0
    %449 = vmatpush1.msra.mxu0 0.0
    %450 = vmatprep.subr.mxu0 0.0
    %451 = vmatpush1.msra.mxu0 0.0
    %452 = vmatprep.subr.mxu0 0.0
    %453 = vmatpush1.msra.mxu0 0.0
    %454 = vmatprep.subr.mxu0 0.0
    %455 = vmatpush1.msra.mxu0 0.0
    %456 = vmatprep.subr.mxu0 0.0
    %457 = vmatpush1.msra.mxu0 0.0
    %458 = vmatprep.mubr.f32.mxu0 0.0
    %459 = vmatmul.mubr.f32.gmra.mrb[0].mxu0 %v392
    %v460 = vpop.f32.mrb[0].mxu0
    %v461 = vadd.f32 %v391, %v460
    %v462 = vpop.f32.mrb[0].mxu0
    %463 = vdwg.mxu0
    %v464 = vxor.u32 %v461, 2147483648
    %v465 = vmul.f32 %v464, 1.442695
    %v466 = vpow.pop %v465
    %v467 = vadd.f32 %v466, 1.0
    %v468 = vrcp.pop %v467
    %v469 = vmul.f32 1.0, %v468
    %v470 = vtanh.pop %v461
    %v471 = vmul.f32 %v469, %v267
    %473 = vrot.lane.b32.xlu0 %v470, 80
    %v474 = vpop.permute.xlu0 %473
    %v476 = vmul.f32 %v469, %v474
    %478 = vrot.lane.b32.xlu0 %v476, 16
    %v479 = vpop.permute.xlu0 %478
    %v481 = vadd.f32 %v471, %v479
    %v482 = vtanh.pop %v481
    %484 = vrot.lane.b32.xlu0 %v482, 16
    %v485 = vpop.permute.xlu0 %484
    %v487 = vmul.f32 %v469, %v485
    %v488 = vld [vmem:[#allocation2 + $0x6] sm:$0x1]
    %490 = vrot.lane.b32.xlu0 %v488, 64
    %v491 = vpop.permute.xlu0 %490
    %v493 = vsel %vm89, %v388, 0
    %495 = vmatprep.subr.mxu0 0.0
    %496 = vmatpush1.msra.mxu0 %v166
    %497 = vmatprep.subr.mxu0 0.0
    %498 = vmatpush1.msra.mxu0 %v167
    %499 = vmatprep.subr.mxu0 0.0
    %500 = vmatpush1.msra.mxu0 0.0
    %501 = vmatprep.subr.mxu0 0.0
    %502 = vmatpush1.msra.mxu0 0.0
    %503 = vmatprep.subr.mxu0 0.0
    %504 = vmatpush1.msra.mxu0 0.0
    %505 = vmatprep.subr.mxu0 0.0
    %506 = vmatpush1.msra.mxu0 0.0
    %507 = vmatprep.subr.mxu0 0.0
    %508 = vmatpush1.msra.mxu0 0.0
    %509 = vmatprep.subr.mxu0 0.0
    %510 = vmatpush1.msra.mxu0 0.0
    %511 = vmatprep.subr.mxu0 0.0
    %512 = vmatpush1.msra.mxu0 0.0
    %513 = vmatprep.subr.mxu0 0.0
    %514 = vmatpush1.msra.mxu0 0.0
    %515 = vmatprep.subr.mxu0 0.0
    %516 = vmatpush1.msra.mxu0 0.0
    %517 = vmatprep.subr.mxu0 0.0
    %518 = vmatpush1.msra.mxu0 0.0
    %519 = vmatprep.subr.mxu0 0.0
    %520 = vmatpush1.msra.mxu0 0.0
    %521 = vmatprep.subr.mxu0 0.0
    %522 = vmatpush1.msra.mxu0 0.0
    %523 = vmatprep.subr.mxu0 0.0
    %524 = vmatpush1.msra.mxu0 0.0
    %525 = vmatprep.subr.mxu0 0.0
    %526 = vmatpush1.msra.mxu0 0.0
    %527 = vmatprep.subr.mxu0 0.0
    %528 = vmatpush1.msra.mxu0 0.0
    %529 = vmatprep.subr.mxu0 0.0
    %530 = vmatpush1.msra.mxu0 0.0
    %531 = vmatprep.subr.mxu0 0.0
    %532 = vmatpush1.msra.mxu0 0.0
    %533 = vmatprep.subr.mxu0 0.0
    %534 = vmatpush1.msra.mxu0 0.0
    %535 = vmatprep.subr.mxu0 0.0
    %536 = vmatpush1.msra.mxu0 0.0
    %537 = vmatprep.subr.mxu0 0.0
    %538 = vmatpush1.msra.mxu0 0.0
    %539 = vmatprep.subr.mxu0 0.0
    %540 = vmatpush1.msra.mxu0 0.0
    %541 = vmatprep.subr.mxu0 0.0
    %542 = vmatpush1.msra.mxu0 0.0
    %543 = vmatprep.subr.mxu0 0.0
    %544 = vmatpush1.msra.mxu0 0.0
    %545 = vmatprep.subr.mxu0 0.0
    %546 = vmatpush1.msra.mxu0 0.0
    %547 = vmatprep.subr.mxu0 0.0
    %548 = vmatpush1.msra.mxu0 0.0
    %549 = vmatprep.subr.mxu0 0.0
    %550 = vmatpush1.msra.mxu0 0.0
    %551 = vmatprep.subr.mxu0 0.0
    %552 = vmatpush1.msra.mxu0 0.0
    %553 = vmatprep.subr.mxu0 0.0
    %554 = vmatpush1.msra.mxu0 0.0
    %555 = vmatprep.subr.mxu0 0.0
    %556 = vmatpush1.msra.mxu0 0.0
    %557 = vmatprep.subr.mxu0 0.0
    %558 = vmatpush1.msra.mxu0 0.0
    %559 = vmatprep.mubr.f32.mxu0 0.0
    %560 = vmatmul.mubr.f32.gmra.mrb[0].mxu0 %v493
    %v561 = vpop.f32.mrb[0].mxu0
    %v562 = vadd.f32 %v491, %v561
    %v563 = vpop.f32.mrb[0].mxu0
    %564 = vdwg.mxu0
    %v565 = vxor.u32 %v562, 2147483648
    %v566 = vmul.f32 %v565, 1.442695
    %v567 = vpow.pop %v566
    %v568 = vadd.f32 %v567, 1.0
    %v569 = vrcp.pop %v568
    %v570 = vmul.f32 1.0, %v569
    %v571 = vtanh.pop %v562
    %v572 = vmul.f32 %v570, %v373
    %574 = vrot.lane.b32.xlu0 %v571, 80
    %v575 = vpop.permute.xlu0 %574
    %v577 = vmul.f32 %v570, %v575
    %579 = vrot.lane.b32.xlu0 %v577, 16
    %v580 = vpop.permute.xlu0 %579
    %v582 = vadd.f32 %v572, %v580
    %v583 = vtanh.pop %v582
    %585 = vrot.lane.b32.xlu0 %v583, 16
    %v586 = vpop.permute.xlu0 %585
    %v588 = vmul.f32 %v570, %v586
    %590 = vrot.lane.b32.xlu0 %v487, 96
    %v591 = vpop.permute.xlu0 %590
    %593 = vst.msk [vmem:[#allocation3 + $0x1] sm:$0x1] %vm384, %v591
    %595 = vrot.lane.b32.xlu0 %v588, 96
    %v596 = vpop.permute.xlu0 %595
    %598 = vst.msk [vmem:[#allocation4 + $0x6] sm:$0x1] %vm384, %v596
    %v599 = vld [vmem:[#allocation2 + $0x2] sm:$0x1]
    %v600 = vsel %vm89, %v591, 0
    %602 = vmatprep.subr.mxu0 0.0
    %603 = vmatpush1.msra.mxu0 %v164
    %604 = vmatprep.subr.mxu0 0.0
    %605 = vmatpush1.msra.mxu0 %v165
    %606 = vmatprep.subr.mxu0 0.0
    %607 = vmatpush1.msra.mxu0 0.0
    %608 = vmatprep.subr.mxu0 0.0
    %609 = vmatpush1.msra.mxu0 0.0
    %610 = vmatprep.subr.mxu0 0.0
    %611 = vmatpush1.msra.mxu0 0.0
    %612 = vmatprep.subr.mxu0 0.0
    %613 = vmatpush1.msra.mxu0 0.0
    %614 = vmatprep.subr.mxu0 0.0
    %615 = vmatpush1.msra.mxu0 0.0
    %616 = vmatprep.subr.mxu0 0.0
    %617 = vmatpush1.msra.mxu0 0.0
    %618 = vmatprep.subr.mxu0 0.0
    %619 = vmatpush1.msra.mxu0 0.0
    %620 = vmatprep.subr.mxu0 0.0
    %621 = vmatpush1.msra.mxu0 0.0
    %622 = vmatprep.subr.mxu0 0.0
    %623 = vmatpush1.msra.mxu0 0.0
    %624 = vmatprep.subr.mxu0 0.0
    %625 = vmatpush1.msra.mxu0 0.0
    %626 = vmatprep.subr.mxu0 0.0
    %627 = vmatpush1.msra.mxu0 0.0
    %628 = vmatprep.subr.mxu0 0.0
    %629 = vmatpush1.msra.mxu0 0.0
    %630 = vmatprep.subr.mxu0 0.0
    %631 = vmatpush1.msra.mxu0 0.0
    %632 = vmatprep.subr.mxu0 0.0
    %633 = vmatpush1.msra.mxu0 0.0
    %634 = vmatprep.subr.mxu0 0.0
    %635 = vmatpush1.msra.mxu0 0.0
    %636 = vmatprep.subr.mxu0 0.0
    %637 = vmatpush1.msra.mxu0 0.0
    %638 = vmatprep.subr.mxu0 0.0
    %639 = vmatpush1.msra.mxu0 0.0
    %640 = vmatprep.subr.mxu0 0.0
    %641 = vmatpush1.msra.mxu0 0.0
    %642 = vmatprep.subr.mxu0 0.0
    %643 = vmatpush1.msra.mxu0 0.0
    %644 = vmatprep.subr.mxu0 0.0
    %645 = vmatpush1.msra.mxu0 0.0
    %646 = vmatprep.subr.mxu0 0.0
    %647 = vmatpush1.msra.mxu0 0.0
    %648 = vmatprep.subr.mxu0 0.0
    %649 = vmatpush1.msra.mxu0 0.0
    %650 = vmatprep.subr.mxu0 0.0
    %651 = vmatpush1.msra.mxu0 0.0
    %652 = vmatprep.subr.mxu0 0.0
    %653 = vmatpush1.msra.mxu0 0.0
    %654 = vmatprep.subr.mxu0 0.0
    %655 = vmatpush1.msra.mxu0 0.0
    %656 = vmatprep.subr.mxu0 0.0
    %657 = vmatpush1.msra.mxu0 0.0
    %658 = vmatprep.subr.mxu0 0.0
    %659 = vmatpush1.msra.mxu0 0.0
    %660 = vmatprep.subr.mxu0 0.0
    %661 = vmatpush1.msra.mxu0 0.0
    %662 = vmatprep.subr.mxu0 0.0
    %663 = vmatpush1.msra.mxu0 0.0
    %664 = vmatprep.subr.mxu0 0.0
    %665 = vmatpush1.msra.mxu0 0.0
    %666 = vmatprep.mubr.f32.mxu0 0.0
    %667 = vmatmul.mubr.f32.gmra.mrb[0].mxu0 %v600
    %v668 = vpop.f32.mrb[0].mxu0
    %v669 = vadd.f32 %v599, %v668
    %v670 = vpop.f32.mrb[0].mxu0
    %671 = vdwg.mxu0
    %v672 = vxor.u32 %v669, 2147483648
    %v673 = vmul.f32 %v672, 1.442695
    %v674 = vpow.pop %v673
    %v675 = vadd.f32 %v674, 1.0
    %v676 = vrcp.pop %v675
    %v677 = vmul.f32 1.0, %v676
    %v678 = vtanh.pop %v669
    %v679 = vmul.f32 %v677, %v481
    %681 = vrot.lane.b32.xlu0 %v678, 80
    %v682 = vpop.permute.xlu0 %681
    %v684 = vmul.f32 %v677, %v682
    %686 = vrot.lane.b32.xlu0 %v684, 16
    %v687 = vpop.permute.xlu0 %686
    %v689 = vadd.f32 %v679, %v687
    %v690 = vtanh.pop %v689
    %692 = vrot.lane.b32.xlu0 %v690, 16
    %v693 = vpop.permute.xlu0 %692
    %v695 = vmul.f32 %v677, %v693
    %v696 = vld [vmem:[#allocation2 + $0x5] sm:$0x1]
    %698 = vrot.lane.b32.xlu0 %v696, 64
    %v699 = vpop.permute.xlu0 %698
    %v701 = vsel %vm89, %v596, 0
    %703 = vmatprep.subr.mxu0 0.0
    %704 = vmatpush1.msra.mxu0 %v166
    %705 = vmatprep.subr.mxu0 0.0
    %706 = vmatpush1.msra.mxu0 %v167
    %707 = vmatprep.subr.mxu0 0.0
    %708 = vmatpush1.msra.mxu0 0.0
    %709 = vmatprep.subr.mxu0 0.0
    %710 = vmatpush1.msra.mxu0 0.0
    %711 = vmatprep.subr.mxu0 0.0
    %712 = vmatpush1.msra.mxu0 0.0
    %713 = vmatprep.subr.mxu0 0.0
    %714 = vmatpush1.msra.mxu0 0.0
    %715 = vmatprep.subr.mxu0 0.0
    %716 = vmatpush1.msra.mxu0 0.0
    %717 = vmatprep.subr.mxu0 0.0
    %718 = vmatpush1.msra.mxu0 0.0
    %719 = vmatprep.subr.mxu0 0.0
    %720 = vmatpush1.msra.mxu0 0.0
    %721 = vmatprep.subr.mxu0 0.0
    %722 = vmatpush1.msra.mxu0 0.0
    %723 = vmatprep.subr.mxu0 0.0
    %724 = vmatpush1.msra.mxu0 0.0
    %725 = vmatprep.subr.mxu0 0.0
    %726 = vmatpush1.msra.mxu0 0.0
    %727 = vmatprep.subr.mxu0 0.0
    %728 = vmatpush1.msra.mxu0 0.0
    %729 = vmatprep.subr.mxu0 0.0
    %730 = vmatpush1.msra.mxu0 0.0
    %731 = vmatprep.subr.mxu0 0.0
    %732 = vmatpush1.msra.mxu0 0.0
    %733 = vmatprep.subr.mxu0 0.0
    %734 = vmatpush1.msra.mxu0 0.0
    %735 = vmatprep.subr.mxu0 0.0
    %736 = vmatpush1.msra.mxu0 0.0
    %737 = vmatprep.subr.mxu0 0.0
    %738 = vmatpush1.msra.mxu0 0.0
    %739 = vmatprep.subr.mxu0 0.0
    %740 = vmatpush1.msra.mxu0 0.0
    %741 = vmatprep.subr.mxu0 0.0
    %742 = vmatpush1.msra.mxu0 0.0
    %743 = vmatprep.subr.mxu0 0.0
    %744 = vmatpush1.msra.mxu0 0.0
    %745 = vmatprep.subr.mxu0 0.0
    %746 = vmatpush1.msra.mxu0 0.0
    %747 = vmatprep.subr.mxu0 0.0
    %748 = vmatpush1.msra.mxu0 0.0
    %749 = vmatprep.subr.mxu0 0.0
    %750 = vmatpush1.msra.mxu0 0.0
    %751 = vmatprep.subr.mxu0 0.0
    %752 = vmatpush1.msra.mxu0 0.0
    %753 = vmatprep.subr.mxu0 0.0
    %754 = vmatpush1.msra.mxu0 0.0
    %755 = vmatprep.subr.mxu0 0.0
    %756 = vmatpush1.msra.mxu0 0.0
    %757 = vmatprep.subr.mxu0 0.0
    %758 = vmatpush1.msra.mxu0 0.0
    %759 = vmatprep.subr.mxu0 0.0
    %760 = vmatpush1.msra.mxu0 0.0
    %761 = vmatprep.subr.mxu0 0.0
    %762 = vmatpush1.msra.mxu0 0.0
    %763 = vmatprep.subr.mxu0 0.0
    %764 = vmatpush1.msra.mxu0 0.0
    %765 = vmatprep.subr.mxu0 0.0
    %766 = vmatpush1.msra.mxu0 0.0
    %767 = vmatprep.mubr.f32.mxu0 0.0
    %768 = vmatmul.mubr.f32.gmra.mrb[0].mxu0 %v701
    %v769 = vpop.f32.mrb[0].mxu0
    %v770 = vadd.f32 %v699, %v769
    %v771 = vpop.f32.mrb[0].mxu0
    %772 = vdwg.mxu0
    %v773 = vxor.u32 %v770, 2147483648
    %v774 = vmul.f32 %v773, 1.442695
    %v775 = vpow.pop %v774
    %v776 = vadd.f32 %v775, 1.0
    %v777 = vrcp.pop %v776
    %v778 = vmul.f32 1.0, %v777
    %v779 = vtanh.pop %v770
    %v780 = vmul.f32 %v778, %v582
    %782 = vrot.lane.b32.xlu0 %v779, 80
    %v783 = vpop.permute.xlu0 %782
    %v785 = vmul.f32 %v778, %v783
    %787 = vrot.lane.b32.xlu0 %v785, 16
    %v788 = vpop.permute.xlu0 %787
    %v790 = vadd.f32 %v780, %v788
    %v791 = vtanh.pop %v790
    %793 = vrot.lane.b32.xlu0 %v791, 16
    %v794 = vpop.permute.xlu0 %793
    %v796 = vmul.f32 %v778, %v794
    %798 = vrot.lane.b32.xlu0 %v695, 96
    %v799 = vpop.permute.xlu0 %798
    %801 = vst.msk [vmem:[#allocation3 + $0x2] sm:$0x1] %vm384, %v799
    %803 = vrot.lane.b32.xlu0 %v796, 96
    %v804 = vpop.permute.xlu0 %803
    %806 = vst.msk [vmem:[#allocation4 + $0x5] sm:$0x1] %vm384, %v804
    %v807 = vld [vmem:[#allocation2 + $0x3] sm:$0x1]
    %v808 = vsel %vm89, %v799, 0
    %810 = vmatprep.subr.mxu0 0.0
    %811 = vmatpush1.msra.mxu0 %v164
    %812 = vmatprep.subr.mxu0 0.0
    %813 = vmatpush1.msra.mxu0 %v165
    %814 = vmatprep.subr.mxu0 0.0
    %815 = vmatpush1.msra.mxu0 0.0
    %816 = vmatprep.subr.mxu0 0.0
    %817 = vmatpush1.msra.mxu0 0.0
    %818 = vmatprep.subr.mxu0 0.0
    %819 = vmatpush1.msra.mxu0 0.0
    %820 = vmatprep.subr.mxu0 0.0
    %821 = vmatpush1.msra.mxu0 0.0
    %822 = vmatprep.subr.mxu0 0.0
    %823 = vmatpush1.msra.mxu0 0.0
    %824 = vmatprep.subr.mxu0 0.0
    %825 = vmatpush1.msra.mxu0 0.0
    %826 = vmatprep.subr.mxu0 0.0
    %827 = vmatpush1.msra.mxu0 0.0
    %828 = vmatprep.subr.mxu0 0.0
    %829 = vmatpush1.msra.mxu0 0.0
    %830 = vmatprep.subr.mxu0 0.0
    %831 = vmatpush1.msra.mxu0 0.0
    %832 = vmatprep.subr.mxu0 0.0
    %833 = vmatpush1.msra.mxu0 0.0
    %834 = vmatprep.subr.mxu0 0.0
    %835 = vmatpush1.msra.mxu0 0.0
    %836 = vmatprep.subr.mxu0 0.0
    %837 = vmatpush1.msra.mxu0 0.0
    %838 = vmatprep.subr.mxu0 0.0
    %839 = vmatpush1.msra.mxu0 0.0
    %840 = vmatprep.subr.mxu0 0.0
    %841 = vmatpush1.msra.mxu0 0.0
    %842 = vmatprep.subr.mxu0 0.0
    %843 = vmatpush1.msra.mxu0 0.0
    %844 = vmatprep.subr.mxu0 0.0
    %845 = vmatpush1.msra.mxu0 0.0
    %846 = vmatprep.subr.mxu0 0.0
    %847 = vmatpush1.msra.mxu0 0.0
    %848 = vmatprep.subr.mxu0 0.0
    %849 = vmatpush1.msra.mxu0 0.0
    %850 = vmatprep.subr.mxu0 0.0
    %851 = vmatpush1.msra.mxu0 0.0
    %852 = vmatprep.subr.mxu0 0.0
    %853 = vmatpush1.msra.mxu0 0.0
    %854 = vmatprep.subr.mxu0 0.0
    %855 = vmatpush1.msra.mxu0 0.0
    %856 = vmatprep.subr.mxu0 0.0
    %857 = vmatpush1.msra.mxu0 0.0
    %858 = vmatprep.subr.mxu0 0.0
    %859 = vmatpush1.msra.mxu0 0.0
    %860 = vmatprep.subr.mxu0 0.0
    %861 = vmatpush1.msra.mxu0 0.0
    %862 = vmatprep.subr.mxu0 0.0
    %863 = vmatpush1.msra.mxu0 0.0
    %864 = vmatprep.subr.mxu0 0.0
    %865 = vmatpush1.msra.mxu0 0.0
    %866 = vmatprep.subr.mxu0 0.0
    %867 = vmatpush1.msra.mxu0 0.0
    %868 = vmatprep.subr.mxu0 0.0
    %869 = vmatpush1.msra.mxu0 0.0
    %870 = vmatprep.subr.mxu0 0.0
    %871 = vmatpush1.msra.mxu0 0.0
    %872 = vmatprep.subr.mxu0 0.0
    %873 = vmatpush1.msra.mxu0 0.0
    %874 = vmatprep.mubr.f32.mxu0 0.0
    %875 = vmatmul.mubr.f32.gmra.mrb[0].mxu0 %v808
    %v876 = vpop.f32.mrb[0].mxu0
    %v877 = vadd.f32 %v807, %v876
    %v878 = vpop.f32.mrb[0].mxu0
    %879 = vdwg.mxu0
    %v880 = vxor.u32 %v877, 2147483648
    %v881 = vmul.f32 %v880, 1.442695
    %v882 = vpow.pop %v881
    %v883 = vadd.f32 %v882, 1.0
    %v884 = vrcp.pop %v883
    %v885 = vmul.f32 1.0, %v884
    %v886 = vtanh.pop %v877
    %v887 = vmul.f32 %v885, %v689
    %889 = vrot.lane.b32.xlu0 %v886, 80
    %v890 = vpop.permute.xlu0 %889
    %v892 = vmul.f32 %v885, %v890
    %894 = vrot.lane.b32.xlu0 %v892, 16
    %v895 = vpop.permute.xlu0 %894
    %v897 = vadd.f32 %v887, %v895
    %v898 = vtanh.pop %v897
    %900 = vrot.lane.b32.xlu0 %v898, 16
    %v901 = vpop.permute.xlu0 %900
    %v903 = vmul.f32 %v885, %v901
    %v904 = vld [vmem:[#allocation2 + $0x4] sm:$0x1]
    %906 = vrot.lane.b32.xlu0 %v904, 64
    %v907 = vpop.permute.xlu0 %906
    %v909 = vsel %vm89, %v804, 0
    %911 = vmatprep.subr.mxu0 0.0
    %912 = vmatpush1.msra.mxu0 %v166
    %913 = vmatprep.subr.mxu0 0.0
    %914 = vmatpush1.msra.mxu0 %v167
    %915 = vmatprep.subr.mxu0 0.0
    %916 = vmatpush1.msra.mxu0 0.0
    %917 = vmatprep.subr.mxu0 0.0
    %918 = vmatpush1.msra.mxu0 0.0
    %919 = vmatprep.subr.mxu0 0.0
    %920 = vmatpush1.msra.mxu0 0.0
    %921 = vmatprep.subr.mxu0 0.0
    %922 = vmatpush1.msra.mxu0 0.0
    %923 = vmatprep.subr.mxu0 0.0
    %924 = vmatpush1.msra.mxu0 0.0
    %925 = vmatprep.subr.mxu0 0.0
    %926 = vmatpush1.msra.mxu0 0.0
    %927 = vmatprep.subr.mxu0 0.0
    %928 = vmatpush1.msra.mxu0 0.0
    %929 = vmatprep.subr.mxu0 0.0
    %930 = vmatpush1.msra.mxu0 0.0
    %931 = vmatprep.subr.mxu0 0.0
    %932 = vmatpush1.msra.mxu0 0.0
    %933 = vmatprep.subr.mxu0 0.0
    %934 = vmatpush1.msra.mxu0 0.0
    %935 = vmatprep.subr.mxu0 0.0
    %936 = vmatpush1.msra.mxu0 0.0
    %937 = vmatprep.subr.mxu0 0.0
    %938 = vmatpush1.msra.mxu0 0.0
    %939 = vmatprep.subr.mxu0 0.0
    %940 = vmatpush1.msra.mxu0 0.0
    %941 = vmatprep.subr.mxu0 0.0
    %942 = vmatpush1.msra.mxu0 0.0
    %943 = vmatprep.subr.mxu0 0.0
    %944 = vmatpush1.msra.mxu0 0.0
    %945 = vmatprep.subr.mxu0 0.0
    %946 = vmatpush1.msra.mxu0 0.0
    %947 = vmatprep.subr.mxu0 0.0
    %948 = vmatpush1.msra.mxu0 0.0
    %949 = vmatprep.subr.mxu0 0.0
    %950 = vmatpush1.msra.mxu0 0.0
    %951 = vmatprep.subr.mxu0 0.0
    %952 = vmatpush1.msra.mxu0 0.0
    %953 = vmatprep.subr.mxu0 0.0
    %954 = vmatpush1.msra.mxu0 0.0
    %955 = vmatprep.subr.mxu0 0.0
    %956 = vmatpush1.msra.mxu0 0.0
    %957 = vmatprep.subr.mxu0 0.0
    %958 = vmatpush1.msra.mxu0 0.0
    %959 = vmatprep.subr.mxu0 0.0
    %960 = vmatpush1.msra.mxu0 0.0
    %961 = vmatprep.subr.mxu0 0.0
    %962 = vmatpush1.msra.mxu0 0.0
    %963 = vmatprep.subr.mxu0 0.0
    %964 = vmatpush1.msra.mxu0 0.0
    %965 = vmatprep.subr.mxu0 0.0
    %966 = vmatpush1.msra.mxu0 0.0
    %967 = vmatprep.subr.mxu0 0.0
    %968 = vmatpush1.msra.mxu0 0.0
    %969 = vmatprep.subr.mxu0 0.0
    %970 = vmatpush1.msra.mxu0 0.0
    %971 = vmatprep.subr.mxu0 0.0
    %972 = vmatpush1.msra.mxu0 0.0
    %973 = vmatprep.subr.mxu0 0.0
    %974 = vmatpush1.msra.mxu0 0.0
    %975 = vmatprep.mubr.f32.mxu0 0.0
    %976 = vmatmul.mubr.f32.gmra.mrb[0].mxu0 %v909
    %v977 = vpop.f32.mrb[0].mxu0
    %v978 = vadd.f32 %v907, %v977
    %v979 = vpop.f32.mrb[0].mxu0
    %980 = vdwg.mxu0
    %v981 = vxor.u32 %v978, 2147483648
    %v982 = vmul.f32 %v981, 1.442695
    %v983 = vpow.pop %v982
    %v984 = vadd.f32 %v983, 1.0
    %v985 = vrcp.pop %v984
    %v986 = vmul.f32 1.0, %v985
    %v987 = vtanh.pop %v978
    %v988 = vmul.f32 %v986, %v790
    %990 = vrot.lane.b32.xlu0 %v987, 80
    %v991 = vpop.permute.xlu0 %990
    %v993 = vmul.f32 %v986, %v991
    %995 = vrot.lane.b32.xlu0 %v993, 16
    %v996 = vpop.permute.xlu0 %995
    %v998 = vadd.f32 %v988, %v996
    %v999 = vtanh.pop %v998
    %1001 = vrot.lane.b32.xlu0 %v999, 16
    %v1002 = vpop.permute.xlu0 %1001
    %v1004 = vmul.f32 %v986, %v1002
    %1006 = vrot.lane.b32.xlu0 %v903, 96
    %v1007 = vpop.permute.xlu0 %1006
    %1009 = vst.msk [vmem:[#allocation3 + $0x3] sm:$0x1] %vm384, %v1007
    %1011 = vrot.lane.b32.xlu0 %v1004, 96
    %v1012 = vpop.permute.xlu0 %1011
    %1014 = vst.msk [vmem:[#allocation4 + $0x4] sm:$0x1] %vm384, %v1012
    %v1015 = vld [vmem:[#allocation2 + $0x4] sm:$0x1]
    %v1016 = vsel %vm89, %v1007, 0
    %1018 = vmatprep.subr.mxu0 0.0
    %1019 = vmatpush1.msra.mxu0 %v164
    %1020 = vmatprep.subr.mxu0 0.0
    %1021 = vmatpush1.msra.mxu0 %v165
    %1022 = vmatprep.subr.mxu0 0.0
    %1023 = vmatpush1.msra.mxu0 0.0
    %1024 = vmatprep.subr.mxu0 0.0
    %1025 = vmatpush1.msra.mxu0 0.0
    %1026 = vmatprep.subr.mxu0 0.0
    %1027 = vmatpush1.msra.mxu0 0.0
    %1028 = vmatprep.subr.mxu0 0.0
    %1029 = vmatpush1.msra.mxu0 0.0
    %1030 = vmatprep.subr.mxu0 0.0
    %1031 = vmatpush1.msra.mxu0 0.0
    %1032 = vmatprep.subr.mxu0 0.0
    %1033 = vmatpush1.msra.mxu0 0.0
    %1034 = vmatprep.subr.mxu0 0.0
    %1035 = vmatpush1.msra.mxu0 0.0
    %1036 = vmatprep.subr.mxu0 0.0
    %1037 = vmatpush1.msra.mxu0 0.0
    %1038 = vmatprep.subr.mxu0 0.0
    %1039 = vmatpush1.msra.mxu0 0.0
    %1040 = vmatprep.subr.mxu0 0.0
    %1041 = vmatpush1.msra.mxu0 0.0
    %1042 = vmatprep.subr.mxu0 0.0
    %1043 = vmatpush1.msra.mxu0 0.0
    %1044 = vmatprep.subr.mxu0 0.0
    %1045 = vmatpush1.msra.mxu0 0.0
    %1046 = vmatprep.subr.mxu0 0.0
    %1047 = vmatpush1.msra.mxu0 0.0
    %1048 = vmatprep.subr.mxu0 0.0
    %1049 = vmatpush1.msra.mxu0 0.0
    %1050 = vmatprep.subr.mxu0 0.0
    %1051 = vmatpush1.msra.mxu0 0.0
    %1052 = vmatprep.subr.mxu0 0.0
    %1053 = vmatpush1.msra.mxu0 0.0
    %1054 = vmatprep.subr.mxu0 0.0
    %1055 = vmatpush1.msra.mxu0 0.0
    %1056 = vmatprep.subr.mxu0 0.0
    %1057 = vmatpush1.msra.mxu0 0.0
    %1058 = vmatprep.subr.mxu0 0.0
    %1059 = vmatpush1.msra.mxu0 0.0
    %1060 = vmatprep.subr.mxu0 0.0
    %1061 = vmatpush1.msra.mxu0 0.0
    %1062 = vmatprep.subr.mxu0 0.0
    %1063 = vmatpush1.msra.mxu0 0.0
    %1064 = vmatprep.subr.mxu0 0.0
    %1065 = vmatpush1.msra.mxu0 0.0
    %1066 = vmatprep.subr.mxu0 0.0
    %1067 = vmatpush1.msra.mxu0 0.0
    %1068 = vmatprep.subr.mxu0 0.0
    %1069 = vmatpush1.msra.mxu0 0.0
    %1070 = vmatprep.subr.mxu0 0.0
    %1071 = vmatpush1.msra.mxu0 0.0
    %1072 = vmatprep.subr.mxu0 0.0
    %1073 = vmatpush1.msra.mxu0 0.0
    %1074 = vmatprep.subr.mxu0 0.0
    %1075 = vmatpush1.msra.mxu0 0.0
    %1076 = vmatprep.subr.mxu0 0.0
    %1077 = vmatpush1.msra.mxu0 0.0
    %1078 = vmatprep.subr.mxu0 0.0
    %1079 = vmatpush1.msra.mxu0 0.0
    %1080 = vmatprep.subr.mxu0 0.0
    %1081 = vmatpush1.msra.mxu0 0.0
    %1082 = vmatprep.mubr.f32.mxu0 0.0
    %1083 = vmatmul.mubr.f32.gmra.mrb[0].mxu0 %v1016
    %v1084 = vpop.f32.mrb[0].mxu0
    %v1085 = vadd.f32 %v1015, %v1084
    %v1086 = vpop.f32.mrb[0].mxu0
    %1087 = vdwg.mxu0
    %v1088 = vxor.u32 %v1085, 2147483648
    %v1089 = vmul.f32 %v1088, 1.442695
    %v1090 = vpow.pop %v1089
    %v1091 = vadd.f32 %v1090, 1.0
    %v1092 = vrcp.pop %v1091
    %v1093 = vmul.f32 1.0, %v1092
    %v1094 = vtanh.pop %v1085
    %v1095 = vmul.f32 %v1093, %v897
    %1097 = vrot.lane.b32.xlu0 %v1094, 80
    %v1098 = vpop.permute.xlu0 %1097
    %v1100 = vmul.f32 %v1093, %v1098
    %1102 = vrot.lane.b32.xlu0 %v1100, 16
    %v1103 = vpop.permute.xlu0 %1102
    %v1105 = vadd.f32 %v1095, %v1103
    %v1106 = vtanh.pop %v1105
    %1108 = vrot.lane.b32.xlu0 %v1106, 16
    %v1109 = vpop.permute.xlu0 %1108
    %v1111 = vmul.f32 %v1093, %v1109
    %v1112 = vld [vmem:[#allocation2 + $0x3] sm:$0x1]
    %1114 = vrot.lane.b32.xlu0 %v1112, 64
    %v1115 = vpop.permute.xlu0 %1114
    %v1117 = vsel %vm89, %v1012, 0
    %1119 = vmatprep.subr.mxu0 0.0
    %1120 = vmatpush1.msra.mxu0 %v166
    %1121 = vmatprep.subr.mxu0 0.0
    %1122 = vmatpush1.msra.mxu0 %v167
    %1123 = vmatprep.subr.mxu0 0.0
    %1124 = vmatpush1.msra.mxu0 0.0
    %1125 = vmatprep.subr.mxu0 0.0
    %1126 = vmatpush1.msra.mxu0 0.0
    %1127 = vmatprep.subr.mxu0 0.0
    %1128 = vmatpush1.msra.mxu0 0.0
    %1129 = vmatprep.subr.mxu0 0.0
    %1130 = vmatpush1.msra.mxu0 0.0
    %1131 = vmatprep.subr.mxu0 0.0
    %1132 = vmatpush1.msra.mxu0 0.0
    %1133 = vmatprep.subr.mxu0 0.0
    %1134 = vmatpush1.msra.mxu0 0.0
    %1135 = vmatprep.subr.mxu0 0.0
    %1136 = vmatpush1.msra.mxu0 0.0
    %1137 = vmatprep.subr.mxu0 0.0
    %1138 = vmatpush1.msra.mxu0 0.0
    %1139 = vmatprep.subr.mxu0 0.0
    %1140 = vmatpush1.msra.mxu0 0.0
    %1141 = vmatprep.subr.mxu0 0.0
    %1142 = vmatpush1.msra.mxu0 0.0
    %1143 = vmatprep.subr.mxu0 0.0
    %1144 = vmatpush1.msra.mxu0 0.0
    %1145 = vmatprep.subr.mxu0 0.0
    %1146 = vmatpush1.msra.mxu0 0.0
    %1147 = vmatprep.subr.mxu0 0.0
    %1148 = vmatpush1.msra.mxu0 0.0
    %1149 = vmatprep.subr.mxu0 0.0
    %1150 = vmatpush1.msra.mxu0 0.0
    %1151 = vmatprep.subr.mxu0 0.0
    %1152 = vmatpush1.msra.mxu0 0.0
    %1153 = vmatprep.subr.mxu0 0.0
    %1154 = vmatpush1.msra.mxu0 0.0
    %1155 = vmatprep.subr.mxu0 0.0
    %1156 = vmatpush1.msra.mxu0 0.0
    %1157 = vmatprep.subr.mxu0 0.0
    %1158 = vmatpush1.msra.mxu0 0.0
    %1159 = vmatprep.subr.mxu0 0.0
    %1160 = vmatpush1.msra.mxu0 0.0
    %1161 = vmatprep.subr.mxu0 0.0
    %1162 = vmatpush1.msra.mxu0 0.0
    %1163 = vmatprep.subr.mxu0 0.0
    %1164 = vmatpush1.msra.mxu0 0.0
    %1165 = vmatprep.subr.mxu0 0.0
    %1166 = vmatpush1.msra.mxu0 0.0
    %1167 = vmatprep.subr.mxu0 0.0
    %1168 = vmatpush1.msra.mxu0 0.0
    %1169 = vmatprep.subr.mxu0 0.0
    %1170 = vmatpush1.msra.mxu0 0.0
    %1171 = vmatprep.subr.mxu0 0.0
    %1172 = vmatpush1.msra.mxu0 0.0
    %1173 = vmatprep.subr.mxu0 0.0
    %1174 = vmatpush1.msra.mxu0 0.0
    %1175 = vmatprep.subr.mxu0 0.0
    %1176 = vmatpush1.msra.mxu0 0.0
    %1177 = vmatprep.subr.mxu0 0.0
    %1178 = vmatpush1.msra.mxu0 0.0
    %1179 = vmatprep.subr.mxu0 0.0
    %1180 = vmatpush1.msra.mxu0 0.0
    %1181 = vmatprep.subr.mxu0 0.0
    %1182 = vmatpush1.msra.mxu0 0.0
    %1183 = vmatprep.mubr.f32.mxu0 0.0
    %1184 = vmatmul.mubr.f32.gmra.mrb[0].mxu0 %v1117
    %v1185 = vpop.f32.mrb[0].mxu0
    %v1186 = vadd.f32 %v1115, %v1185
    %v1187 = vpop.f32.mrb[0].mxu0
    %1188 = vdwg.mxu0
    %v1189 = vxor.u32 %v1186, 2147483648
    %v1190 = vmul.f32 %v1189, 1.442695
    %v1191 = vpow.pop %v1190
    %v1192 = vadd.f32 %v1191, 1.0
    %v1193 = vrcp.pop %v1192
    %v1194 = vmul.f32 1.0, %v1193
    %v1195 = vtanh.pop %v1186
    %v1196 = vmul.f32 %v1194, %v998
    %1198 = vrot.lane.b32.xlu0 %v1195, 80
    %v1199 = vpop.permute.xlu0 %1198
    %v1201 = vmul.f32 %v1194, %v1199
    %1203 = vrot.lane.b32.xlu0 %v1201, 16
    %v1204 = vpop.permute.xlu0 %1203
    %v1206 = vadd.f32 %v1196, %v1204
    %v1207 = vtanh.pop %v1206
    %1209 = vrot.lane.b32.xlu0 %v1207, 16
    %v1210 = vpop.permute.xlu0 %1209
    %v1212 = vmul.f32 %v1194, %v1210
    %1214 = vrot.lane.b32.xlu0 %v1111, 96
    %v1215 = vpop.permute.xlu0 %1214
    %1217 = vst.msk [vmem:[#allocation3 + $0x4] sm:$0x1] %vm384, %v1215
    %1219 = vrot.lane.b32.xlu0 %v1212, 96
    %v1220 = vpop.permute.xlu0 %1219
    %1222 = vst.msk [vmem:[#allocation4 + $0x3] sm:$0x1] %vm384, %v1220
    %v1223 = vld [vmem:[#allocation2 + $0x5] sm:$0x1]
    %v1224 = vsel %vm89, %v1215, 0
    %1226 = vmatprep.subr.mxu0 0.0
    %1227 = vmatpush1.msra.mxu0 %v164
    %1228 = vmatprep.subr.mxu0 0.0
    %1229 = vmatpush1.msra.mxu0 %v165
    %1230 = vmatprep.subr.mxu0 0.0
    %1231 = vmatpush1.msra.mxu0 0.0
    %1232 = vmatprep.subr.mxu0 0.0
    %1233 = vmatpush1.msra.mxu0 0.0
    %1234 = vmatprep.subr.mxu0 0.0
    %1235 = vmatpush1.msra.mxu0 0.0
    %1236 = vmatprep.subr.mxu0 0.0
    %1237 = vmatpush1.msra.mxu0 0.0
    %1238 = vmatprep.subr.mxu0 0.0
    %1239 = vmatpush1.msra.mxu0 0.0
    %1240 = vmatprep.subr.mxu0 0.0
    %1241 = vmatpush1.msra.mxu0 0.0
    %1242 = vmatprep.subr.mxu0 0.0
    %1243 = vmatpush1.msra.mxu0 0.0
    %1244 = vmatprep.subr.mxu0 0.0
    %1245 = vmatpush1.msra.mxu0 0.0
    %1246 = vmatprep.subr.mxu0 0.0
    %1247 = vmatpush1.msra.mxu0 0.0
    %1248 = vmatprep.subr.mxu0 0.0
    %1249 = vmatpush1.msra.mxu0 0.0
    %1250 = vmatprep.subr.mxu0 0.0
    %1251 = vmatpush1.msra.mxu0 0.0
    %1252 = vmatprep.subr.mxu0 0.0
    %1253 = vmatpush1.msra.mxu0 0.0
    %1254 = vmatprep.subr.mxu0 0.0
    %1255 = vmatpush1.msra.mxu0 0.0
    %1256 = vmatprep.subr.mxu0 0.0
    %1257 = vmatpush1.msra.mxu0 0.0
    %1258 = vmatprep.subr.mxu0 0.0
    %1259 = vmatpush1.msra.mxu0 0.0
    %1260 = vmatprep.subr.mxu0 0.0
    %1261 = vmatpush1.msra.mxu0 0.0
    %1262 = vmatprep.subr.mxu0 0.0
    %1263 = vmatpush1.msra.mxu0 0.0
    %1264 = vmatprep.subr.mxu0 0.0
    %1265 = vmatpush1.msra.mxu0 0.0
    %1266 = vmatprep.subr.mxu0 0.0
    %1267 = vmatpush1.msra.mxu0 0.0
    %1268 = vmatprep.subr.mxu0 0.0
    %1269 = vmatpush1.msra.mxu0 0.0
    %1270 = vmatprep.subr.mxu0 0.0
    %1271 = vmatpush1.msra.mxu0 0.0
    %1272 = vmatprep.subr.mxu0 0.0
    %1273 = vmatpush1.msra.mxu0 0.0
    %1274 = vmatprep.subr.mxu0 0.0
    %1275 = vmatpush1.msra.mxu0 0.0
    %1276 = vmatprep.subr.mxu0 0.0
    %1277 = vmatpush1.msra.mxu0 0.0
    %1278 = vmatprep.subr.mxu0 0.0
    %1279 = vmatpush1.msra.mxu0 0.0
    %1280 = vmatprep.subr.mxu0 0.0
    %1281 = vmatpush1.msra.mxu0 0.0
    %1282 = vmatprep.subr.mxu0 0.0
    %1283 = vmatpush1.msra.mxu0 0.0
    %1284 = vmatprep.subr.mxu0 0.0
    %1285 = vmatpush1.msra.mxu0 0.0
    %1286 = vmatprep.subr.mxu0 0.0
    %1287 = vmatpush1.msra.mxu0 0.0
    %1288 = vmatprep.subr.mxu0 0.0
    %1289 = vmatpush1.msra.mxu0 0.0
    %1290 = vmatprep.mubr.f32.mxu0 0.0
    %1291 = vmatmul.mubr.f32.gmra.mrb[0].mxu0 %v1224
    %v1292 = vpop.f32.mrb[0].mxu0
    %v1293 = vadd.f32 %v1223, %v1292
    %v1294 = vpop.f32.mrb[0].mxu0
    %1295 = vdwg.mxu0
    %v1296 = vxor.u32 %v1293, 2147483648
    %v1297 = vmul.f32 %v1296, 1.442695
    %v1298 = vpow.pop %v1297
    %v1299 = vadd.f32 %v1298, 1.0
    %v1300 = vrcp.pop %v1299
    %v1301 = vmul.f32 1.0, %v1300
    %v1302 = vtanh.pop %v1293
    %v1303 = vmul.f32 %v1301, %v1105
    %1305 = vrot.lane.b32.xlu0 %v1302, 80
    %v1306 = vpop.permute.xlu0 %1305
    %v1308 = vmul.f32 %v1301, %v1306
    %1310 = vrot.lane.b32.xlu0 %v1308, 16
    %v1311 = vpop.permute.xlu0 %1310
    %v1313 = vadd.f32 %v1303, %v1311
    %v1314 = vtanh.pop %v1313
    %1316 = vrot.lane.b32.xlu0 %v1314, 16
    %v1317 = vpop.permute.xlu0 %1316
    %v1319 = vmul.f32 %v1301, %v1317
    %v1320 = vld [vmem:[#allocation2 + $0x2] sm:$0x1]
    %1322 = vrot.lane.b32.xlu0 %v1320, 64
    %v1323 = vpop.permute.xlu0 %1322
    %v1325 = vsel %vm89, %v1220, 0
    %1327 = vmatprep.subr.mxu0 0.0
    %1328 = vmatpush1.msra.mxu0 %v166
    %1329 = vmatprep.subr.mxu0 0.0
    %1330 = vmatpush1.msra.mxu0 %v167
    %1331 = vmatprep.subr.mxu0 0.0
    %1332 = vmatpush1.msra.mxu0 0.0
    %1333 = vmatprep.subr.mxu0 0.0
    %1334 = vmatpush1.msra.mxu0 0.0
    %1335 = vmatprep.subr.mxu0 0.0
    %1336 = vmatpush1.msra.mxu0 0.0
    %1337 = vmatprep.subr.mxu0 0.0
    %1338 = vmatpush1.msra.mxu0 0.0
    %1339 = vmatprep.subr.mxu0 0.0
    %1340 = vmatpush1.msra.mxu0 0.0
    %1341 = vmatprep.subr.mxu0 0.0
    %1342 = vmatpush1.msra.mxu0 0.0
    %1343 = vmatprep.subr.mxu0 0.0
    %1344 = vmatpush1.msra.mxu0 0.0
    %1345 = vmatprep.subr.mxu0 0.0
    %1346 = vmatpush1.msra.mxu0 0.0
    %1347 = vmatprep.subr.mxu0 0.0
    %1348 = vmatpush1.msra.mxu0 0.0
    %1349 = vmatprep.subr.mxu0 0.0
    %1350 = vmatpush1.msra.mxu0 0.0
    %1351 = vmatprep.subr.mxu0 0.0
    %1352 = vmatpush1.msra.mxu0 0.0
    %1353 = vmatprep.subr.mxu0 0.0
    %1354 = vmatpush1.msra.mxu0 0.0
    %1355 = vmatprep.subr.mxu0 0.0
    %1356 = vmatpush1.msra.mxu0 0.0
    %1357 = vmatprep.subr.mxu0 0.0
    %1358 = vmatpush1.msra.mxu0 0.0
    %1359 = vmatprep.subr.mxu0 0.0
    %1360 = vmatpush1.msra.mxu0 0.0
    %1361 = vmatprep.subr.mxu0 0.0
    %1362 = vmatpush1.msra.mxu0 0.0
    %1363 = vmatprep.subr.mxu0 0.0
    %1364 = vmatpush1.msra.mxu0 0.0
    %1365 = vmatprep.subr.mxu0 0.0
    %1366 = vmatpush1.msra.mxu0 0.0
    %1367 = vmatprep.subr.mxu0 0.0
    %1368 = vmatpush1.msra.mxu0 0.0
    %1369 = vmatprep.subr.mxu0 0.0
    %1370 = vmatpush1.msra.mxu0 0.0
    %1371 = vmatprep.subr.mxu0 0.0
    %1372 = vmatpush1.msra.mxu0 0.0
    %1373 = vmatprep.subr.mxu0 0.0
    %1374 = vmatpush1.msra.mxu0 0.0
    %1375 = vmatprep.subr.mxu0 0.0
    %1376 = vmatpush1.msra.mxu0 0.0
    %1377 = vmatprep.subr.mxu0 0.0
    %1378 = vmatpush1.msra.mxu0 0.0
    %1379 = vmatprep.subr.mxu0 0.0
    %1380 = vmatpush1.msra.mxu0 0.0
    %1381 = vmatprep.subr.mxu0 0.0
    %1382 = vmatpush1.msra.mxu0 0.0
    %1383 = vmatprep.subr.mxu0 0.0
    %1384 = vmatpush1.msra.mxu0 0.0
    %1385 = vmatprep.subr.mxu0 0.0
    %1386 = vmatpush1.msra.mxu0 0.0
    %1387 = vmatprep.subr.mxu0 0.0
    %1388 = vmatpush1.msra.mxu0 0.0
    %1389 = vmatprep.subr.mxu0 0.0
    %1390 = vmatpush1.msra.mxu0 0.0
    %1391 = vmatprep.mubr.f32.mxu0 0.0
    %1392 = vmatmul.mubr.f32.gmra.mrb[0].mxu0 %v1325
    %v1393 = vpop.f32.mrb[0].mxu0
    %v1394 = vadd.f32 %v1323, %v1393
    %v1395 = vpop.f32.mrb[0].mxu0
    %1396 = vdwg.mxu0
    %v1397 = vxor.u32 %v1394, 2147483648
    %v1398 = vmul.f32 %v1397, 1.442695
    %v1399 = vpow.pop %v1398
    %v1400 = vadd.f32 %v1399, 1.0
    %v1401 = vrcp.pop %v1400
    %v1402 = vmul.f32 1.0, %v1401
    %v1403 = vtanh.pop %v1394
    %v1404 = vmul.f32 %v1402, %v1206
    %1406 = vrot.lane.b32.xlu0 %v1403, 80
    %v1407 = vpop.permute.xlu0 %1406
    %v1409 = vmul.f32 %v1402, %v1407
    %1411 = vrot.lane.b32.xlu0 %v1409, 16
    %v1412 = vpop.permute.xlu0 %1411
    %v1414 = vadd.f32 %v1404, %v1412
    %v1415 = vtanh.pop %v1414
    %1417 = vrot.lane.b32.xlu0 %v1415, 16
    %v1418 = vpop.permute.xlu0 %1417
    %v1420 = vmul.f32 %v1402, %v1418
    %1422 = vrot.lane.b32.xlu0 %v1319, 96
    %v1423 = vpop.permute.xlu0 %1422
    %1425 = vst.msk [vmem:[#allocation3 + $0x5] sm:$0x1] %vm384, %v1423
    %1427 = vrot.lane.b32.xlu0 %v1420, 96
    %v1428 = vpop.permute.xlu0 %1427
    %1430 = vst.msk [vmem:[#allocation4 + $0x2] sm:$0x1] %vm384, %v1428
    %v1431 = vld [vmem:[#allocation2 + $0x6] sm:$0x1]
    %v1432 = vsel %vm89, %v1423, 0
    %1434 = vmatprep.subr.mxu0 0.0
    %1435 = vmatpush1.msra.mxu0 %v164
    %1436 = vmatprep.subr.mxu0 0.0
    %1437 = vmatpush1.msra.mxu0 %v165
    %1438 = vmatprep.subr.mxu0 0.0
    %1439 = vmatpush1.msra.mxu0 0.0
    %1440 = vmatprep.subr.mxu0 0.0
    %1441 = vmatpush1.msra.mxu0 0.0
    %1442 = vmatprep.subr.mxu0 0.0
    %1443 = vmatpush1.msra.mxu0 0.0
    %1444 = vmatprep.subr.mxu0 0.0
    %1445 = vmatpush1.msra.mxu0 0.0
    %1446 = vmatprep.subr.mxu0 0.0
    %1447 = vmatpush1.msra.mxu0 0.0
    %1448 = vmatprep.subr.mxu0 0.0
    %1449 = vmatpush1.msra.mxu0 0.0
    %1450 = vmatprep.subr.mxu0 0.0
    %1451 = vmatpush1.msra.mxu0 0.0
    %1452 = vmatprep.subr.mxu0 0.0
    %1453 = vmatpush1.msra.mxu0 0.0
    %1454 = vmatprep.subr.mxu0 0.0
    %1455 = vmatpush1.msra.mxu0 0.0
    %1456 = vmatprep.subr.mxu0 0.0
    %1457 = vmatpush1.msra.mxu0 0.0
    %1458 = vmatprep.subr.mxu0 0.0
    %1459 = vmatpush1.msra.mxu0 0.0
    %1460 = vmatprep.subr.mxu0 0.0
    %1461 = vmatpush1.msra.mxu0 0.0
    %1462 = vmatprep.subr.mxu0 0.0
    %1463 = vmatpush1.msra.mxu0 0.0
    %1464 = vmatprep.subr.mxu0 0.0
    %1465 = vmatpush1.msra.mxu0 0.0
    %1466 = vmatprep.subr.mxu0 0.0
    %1467 = vmatpush1.msra.mxu0 0.0
    %1468 = vmatprep.subr.mxu0 0.0
    %1469 = vmatpush1.msra.mxu0 0.0
    %1470 = vmatprep.subr.mxu0 0.0
    %1471 = vmatpush1.msra.mxu0 0.0
    %1472 = vmatprep.subr.mxu0 0.0
    %1473 = vmatpush1.msra.mxu0 0.0
    %1474 = vmatprep.subr.mxu0 0.0
    %1475 = vmatpush1.msra.mxu0 0.0
    %1476 = vmatprep.subr.mxu0 0.0
    %1477 = vmatpush1.msra.mxu0 0.0
    %1478 = vmatprep.subr.mxu0 0.0
    %1479 = vmatpush1.msra.mxu0 0.0
    %1480 = vmatprep.subr.mxu0 0.0
    %1481 = vmatpush1.msra.mxu0 0.0
    %1482 = vmatprep.subr.mxu0 0.0
    %1483 = vmatpush1.msra.mxu0 0.0
    %1484 = vmatprep.subr.mxu0 0.0
    %1485 = vmatpush1.msra.mxu0 0.0
    %1486 = vmatprep.subr.mxu0 0.0
    %1487 = vmatpush1.msra.mxu0 0.0
    %1488 = vmatprep.subr.mxu0 0.0
    %1489 = vmatpush1.msra.mxu0 0.0
    %1490 = vmatprep.subr.mxu0 0.0
    %1491 = vmatpush1.msra.mxu0 0.0
    %1492 = vmatprep.subr.mxu0 0.0
    %1493 = vmatpush1.msra.mxu0 0.0
    %1494 = vmatprep.subr.mxu0 0.0
    %1495 = vmatpush1.msra.mxu0 0.0
    %1496 = vmatprep.subr.mxu0 0.0
    %1497 = vmatpush1.msra.mxu0 0.0
    %1498 = vmatprep.mubr.f32.mxu0 0.0
    %1499 = vmatmul.mubr.f32.gmra.mrb[0].mxu0 %v1432
    %v1500 = vpop.f32.mrb[0].mxu0
    %v1501 = vadd.f32 %v1431, %v1500
    %v1502 = vpop.f32.mrb[0].mxu0
    %1503 = vdwg.mxu0
    %v1504 = vxor.u32 %v1501, 2147483648
    %v1505 = vmul.f32 %v1504, 1.442695
    %v1506 = vpow.pop %v1505
    %v1507 = vadd.f32 %v1506, 1.0
    %v1508 = vrcp.pop %v1507
    %v1509 = vmul.f32 1.0, %v1508
    %v1510 = vtanh.pop %v1501
    %v1511 = vmul.f32 %v1509, %v1313
    %1513 = vrot.lane.b32.xlu0 %v1510, 80
    %v1514 = vpop.permute.xlu0 %1513
    %v1516 = vmul.f32 %v1509, %v1514
    %1518 = vrot.lane.b32.xlu0 %v1516, 16
    %v1519 = vpop.permute.xlu0 %1518
    %v1521 = vadd.f32 %v1511, %v1519
    %v1522 = vtanh.pop %v1521
    %1524 = vrot.lane.b32.xlu0 %v1522, 16
    %v1525 = vpop.permute.xlu0 %1524
    %v1527 = vmul.f32 %v1509, %v1525
    %v1528 = vld [vmem:[#allocation2 + $0x1] sm:$0x1]
    %1530 = vrot.lane.b32.xlu0 %v1528, 64
    %v1531 = vpop.permute.xlu0 %1530
    %v1533 = vsel %vm89, %v1428, 0
    %1535 = vmatprep.subr.mxu0 0.0
    %1536 = vmatpush1.msra.mxu0 %v166
    %1537 = vmatprep.subr.mxu0 0.0
    %1538 = vmatpush1.msra.mxu0 %v167
    %1539 = vmatprep.subr.mxu0 0.0
    %1540 = vmatpush1.msra.mxu0 0.0
    %1541 = vmatprep.subr.mxu0 0.0
    %1542 = vmatpush1.msra.mxu0 0.0
    %1543 = vmatprep.subr.mxu0 0.0
    %1544 = vmatpush1.msra.mxu0 0.0
    %1545 = vmatprep.subr.mxu0 0.0
    %1546 = vmatpush1.msra.mxu0 0.0
    %1547 = vmatprep.subr.mxu0 0.0
    %1548 = vmatpush1.msra.mxu0 0.0
    %1549 = vmatprep.subr.mxu0 0.0
    %1550 = vmatpush1.msra.mxu0 0.0
    %1551 = vmatprep.subr.mxu0 0.0
    %1552 = vmatpush1.msra.mxu0 0.0
    %1553 = vmatprep.subr.mxu0 0.0
    %1554 = vmatpush1.msra.mxu0 0.0
    %1555 = vmatprep.subr.mxu0 0.0
    %1556 = vmatpush1.msra.mxu0 0.0
    %1557 = vmatprep.subr.mxu0 0.0
    %1558 = vmatpush1.msra.mxu0 0.0
    %1559 = vmatprep.subr.mxu0 0.0
    %1560 = vmatpush1.msra.mxu0 0.0
    %1561 = vmatprep.subr.mxu0 0.0
    %1562 = vmatpush1.msra.mxu0 0.0
    %1563 = vmatprep.subr.mxu0 0.0
    %1564 = vmatpush1.msra.mxu0 0.0
    %1565 = vmatprep.subr.mxu0 0.0
    %1566 = vmatpush1.msra.mxu0 0.0
    %1567 = vmatprep.subr.mxu0 0.0
    %1568 = vmatpush1.msra.mxu0 0.0
    %1569 = vmatprep.subr.mxu0 0.0
    %1570 = vmatpush1.msra.mxu0 0.0
    %1571 = vmatprep.subr.mxu0 0.0
    %1572 = vmatpush1.msra.mxu0 0.0
    %1573 = vmatprep.subr.mxu0 0.0
    %1574 = vmatpush1.msra.mxu0 0.0
    %1575 = vmatprep.subr.mxu0 0.0
    %1576 = vmatpush1.msra.mxu0 0.0
    %1577 = vmatprep.subr.mxu0 0.0
    %1578 = vmatpush1.msra.mxu0 0.0
    %1579 = vmatprep.subr.mxu0 0.0
    %1580 = vmatpush1.msra.mxu0 0.0
    %1581 = vmatprep.subr.mxu0 0.0
    %1582 = vmatpush1.msra.mxu0 0.0
    %1583 = vmatprep.subr.mxu0 0.0
    %1584 = vmatpush1.msra.mxu0 0.0
    %1585 = vmatprep.subr.mxu0 0.0
    %1586 = vmatpush1.msra.mxu0 0.0
    %1587 = vmatprep.subr.mxu0 0.0
    %1588 = vmatpush1.msra.mxu0 0.0
    %1589 = vmatprep.subr.mxu0 0.0
    %1590 = vmatpush1.msra.mxu0 0.0
    %1591 = vmatprep.subr.mxu0 0.0
    %1592 = vmatpush1.msra.mxu0 0.0
    %1593 = vmatprep.subr.mxu0 0.0
    %1594 = vmatpush1.msra.mxu0 0.0
    %1595 = vmatprep.subr.mxu0 0.0
    %1596 = vmatpush1.msra.mxu0 0.0
    %1597 = vmatprep.subr.mxu0 0.0
    %1598 = vmatpush1.msra.mxu0 0.0
    %1599 = vmatprep.mubr.f32.mxu0 0.0
    %1600 = vmatmul.mubr.f32.gmra.mrb[0].mxu0 %v1533
    %v1601 = vpop.f32.mrb[0].mxu0
    %v1602 = vadd.f32 %v1531, %v1601
    %v1603 = vpop.f32.mrb[0].mxu0
    %1604 = vdwg.mxu0
    %v1605 = vxor.u32 %v1602, 2147483648
    %v1606 = vmul.f32 %v1605, 1.442695
    %v1607 = vpow.pop %v1606
    %v1608 = vadd.f32 %v1607, 1.0
    %v1609 = vrcp.pop %v1608
    %v1610 = vmul.f32 1.0, %v1609
    %v1611 = vtanh.pop %v1602
    %v1612 = vmul.f32 %v1610, %v1414
    %1614 = vrot.lane.b32.xlu0 %v1611, 80
    %v1615 = vpop.permute.xlu0 %1614
    %v1617 = vmul.f32 %v1610, %v1615
    %1619 = vrot.lane.b32.xlu0 %v1617, 16
    %v1620 = vpop.permute.xlu0 %1619
    %v1622 = vadd.f32 %v1612, %v1620
    %v1623 = vtanh.pop %v1622
    %1625 = vrot.lane.b32.xlu0 %v1623, 16
    %v1626 = vpop.permute.xlu0 %1625
    %v1628 = vmul.f32 %v1610, %v1626
    %1630 = vrot.lane.b32.xlu0 %v1527, 96
    %v1631 = vpop.permute.xlu0 %1630
    %1633 = vst.msk [vmem:[#allocation3 + $0x6] sm:$0x1] %vm384, %v1631
    %1635 = vrot.lane.b32.xlu0 %v1628, 96
    %v1636 = vpop.permute.xlu0 %1635
    %1638 = vst.msk [vmem:[#allocation4 + $0x1] sm:$0x1] %vm384, %v1636
    %v1639 = vld [vmem:[#allocation2 + $0x7] sm:$0x1]
    %v1640 = vsel %vm89, %v1631, 0
    %1642 = vmatprep.subr.mxu0 0.0
    %1643 = vmatpush1.msra.mxu0 %v164
    %1644 = vmatprep.subr.mxu0 0.0
    %1645 = vmatpush1.msra.mxu0 %v165
    %1646 = vmatprep.subr.mxu0 0.0
    %1647 = vmatpush1.msra.mxu0 0.0
    %1648 = vmatprep.subr.mxu0 0.0
    %1649 = vmatpush1.msra.mxu0 0.0
    %1650 = vmatprep.subr.mxu0 0.0
    %1651 = vmatpush1.msra.mxu0 0.0
    %1652 = vmatprep.subr.mxu0 0.0
    %1653 = vmatpush1.msra.mxu0 0.0
    %1654 = vmatprep.subr.mxu0 0.0
    %1655 = vmatpush1.msra.mxu0 0.0
    %1656 = vmatprep.subr.mxu0 0.0
    %1657 = vmatpush1.msra.mxu0 0.0
    %1658 = vmatprep.subr.mxu0 0.0
    %1659 = vmatpush1.msra.mxu0 0.0
    %1660 = vmatprep.subr.mxu0 0.0
    %1661 = vmatpush1.msra.mxu0 0.0
    %1662 = vmatprep.subr.mxu0 0.0
    %1663 = vmatpush1.msra.mxu0 0.0
    %1664 = vmatprep.subr.mxu0 0.0
    %1665 = vmatpush1.msra.mxu0 0.0
    %1666 = vmatprep.subr.mxu0 0.0
    %1667 = vmatpush1.msra.mxu0 0.0
    %1668 = vmatprep.subr.mxu0 0.0
    %1669 = vmatpush1.msra.mxu0 0.0
    %1670 = vmatprep.subr.mxu0 0.0
    %1671 = vmatpush1.msra.mxu0 0.0
    %1672 = vmatprep.subr.mxu0 0.0
    %1673 = vmatpush1.msra.mxu0 0.0
    %1674 = vmatprep.subr.mxu0 0.0
    %1675 = vmatpush1.msra.mxu0 0.0
    %1676 = vmatprep.subr.mxu0 0.0
    %1677 = vmatpush1.msra.mxu0 0.0
    %1678 = vmatprep.subr.mxu0 0.0
    %1679 = vmatpush1.msra.mxu0 0.0
    %1680 = vmatprep.subr.mxu0 0.0
    %1681 = vmatpush1.msra.mxu0 0.0
    %1682 = vmatprep.subr.mxu0 0.0
    %1683 = vmatpush1.msra.mxu0 0.0
    %1684 = vmatprep.subr.mxu0 0.0
    %1685 = vmatpush1.msra.mxu0 0.0
    %1686 = vmatprep.subr.mxu0 0.0
    %1687 = vmatpush1.msra.mxu0 0.0
    %1688 = vmatprep.subr.mxu0 0.0
    %1689 = vmatpush1.msra.mxu0 0.0
    %1690 = vmatprep.subr.mxu0 0.0
    %1691 = vmatpush1.msra.mxu0 0.0
    %1692 = vmatprep.subr.mxu0 0.0
    %1693 = vmatpush1.msra.mxu0 0.0
    %1694 = vmatprep.subr.mxu0 0.0
    %1695 = vmatpush1.msra.mxu0 0.0
    %1696 = vmatprep.subr.mxu0 0.0
    %1697 = vmatpush1.msra.mxu0 0.0
    %1698 = vmatprep.subr.mxu0 0.0
    %1699 = vmatpush1.msra.mxu0 0.0
    %1700 = vmatprep.subr.mxu0 0.0
    %1701 = vmatpush1.msra.mxu0 0.0
    %1702 = vmatprep.subr.mxu0 0.0
    %1703 = vmatpush1.msra.mxu0 0.0
    %1704 = vmatprep.subr.mxu0 0.0
    %1705 = vmatpush1.msra.mxu0 0.0
    %1706 = vmatprep.mubr.f32.mxu0 0.0
    %1707 = vmatmul.mubr.f32.gmra.mrb[0].mxu0 %v1640
    %v1708 = vpop.f32.mrb[0].mxu0
    %v1709 = vadd.f32 %v1639, %v1708
    %v1710 = vpop.f32.mrb[0].mxu0
    %1711 = vdwg.mxu0
    %v1712 = vxor.u32 %v1709, 2147483648
    %v1713 = vmul.f32 %v1712, 1.442695
    %v1714 = vpow.pop %v1713
    %v1715 = vadd.f32 %v1714, 1.0
    %v1716 = vrcp.pop %v1715
    %v1717 = vmul.f32 1.0, %v1716
    %v1718 = vtanh.pop %v1709
    %v1719 = vmul.f32 %v1717, %v1521
    %1721 = vrot.lane.b32.xlu0 %v1718, 80
    %v1722 = vpop.permute.xlu0 %1721
    %v1724 = vmul.f32 %v1717, %v1722
    %1726 = vrot.lane.b32.xlu0 %v1724, 16
    %v1727 = vpop.permute.xlu0 %1726
    %v1729 = vadd.f32 %v1719, %v1727
    %v1730 = vtanh.pop %v1729
    %1732 = vrot.lane.b32.xlu0 %v1730, 16
    %v1733 = vpop.permute.xlu0 %1732
    %v1735 = vmul.f32 %v1717, %v1733
    %v1736 = vld [vmem:[#allocation2] sm:$0x1]
    %1738 = vrot.lane.b32.xlu0 %v1736, 64
    %v1739 = vpop.permute.xlu0 %1738
    %v1741 = vsel %vm89, %v1636, 0
    %1743 = vmatprep.subr.mxu0 0.0
    %1744 = vmatpush1.msra.mxu0 %v166
    %1745 = vmatprep.subr.mxu0 0.0
    %1746 = vmatpush1.msra.mxu0 %v167
    %1747 = vmatprep.subr.mxu0 0.0
    %1748 = vmatpush1.msra.mxu0 0.0
    %1749 = vmatprep.subr.mxu0 0.0
    %1750 = vmatpush1.msra.mxu0 0.0
    %1751 = vmatprep.subr.mxu0 0.0
    %1752 = vmatpush1.msra.mxu0 0.0
    %1753 = vmatprep.subr.mxu0 0.0
    %1754 = vmatpush1.msra.mxu0 0.0
    %1755 = vmatprep.subr.mxu0 0.0
    %1756 = vmatpush1.msra.mxu0 0.0
    %1757 = vmatprep.subr.mxu0 0.0
    %1758 = vmatpush1.msra.mxu0 0.0
    %1759 = vmatprep.subr.mxu0 0.0
    %1760 = vmatpush1.msra.mxu0 0.0
    %1761 = vmatprep.subr.mxu0 0.0
    %1762 = vmatpush1.msra.mxu0 0.0
    %1763 = vmatprep.subr.mxu0 0.0
    %1764 = vmatpush1.msra.mxu0 0.0
    %1765 = vmatprep.subr.mxu0 0.0
    %1766 = vmatpush1.msra.mxu0 0.0
    %1767 = vmatprep.subr.mxu0 0.0
    %1768 = vmatpush1.msra.mxu0 0.0
    %1769 = vmatprep.subr.mxu0 0.0
    %1770 = vmatpush1.msra.mxu0 0.0
    %1771 = vmatprep.subr.mxu0 0.0
    %1772 = vmatpush1.msra.mxu0 0.0
    %1773 = vmatprep.subr.mxu0 0.0
    %1774 = vmatpush1.msra.mxu0 0.0
    %1775 = vmatprep.subr.mxu0 0.0
    %1776 = vmatpush1.msra.mxu0 0.0
    %1777 = vmatprep.subr.mxu0 0.0
    %1778 = vmatpush1.msra.mxu0 0.0
    %1779 = vmatprep.subr.mxu0 0.0
    %1780 = vmatpush1.msra.mxu0 0.0
    %1781 = vmatprep.subr.mxu0 0.0
    %1782 = vmatpush1.msra.mxu0 0.0
    %1783 = vmatprep.subr.mxu0 0.0
    %1784 = vmatpush1.msra.mxu0 0.0
    %1785 = vmatprep.subr.mxu0 0.0
    %1786 = vmatpush1.msra.mxu0 0.0
    %1787 = vmatprep.subr.mxu0 0.0
    %1788 = vmatpush1.msra.mxu0 0.0
    %1789 = vmatprep.subr.mxu0 0.0
    %1790 = vmatpush1.msra.mxu0 0.0
    %1791 = vmatprep.subr.mxu0 0.0
    %1792 = vmatpush1.msra.mxu0 0.0
    %1793 = vmatprep.subr.mxu0 0.0
    %1794 = vmatpush1.msra.mxu0 0.0
    %1795 = vmatprep.subr.mxu0 0.0
    %1796 = vmatpush1.msra.mxu0 0.0
    %1797 = vmatprep.subr.mxu0 0.0
    %1798 = vmatpush1.msra.mxu0 0.0
    %1799 = vmatprep.subr.mxu0 0.0
    %1800 = vmatpush1.msra.mxu0 0.0
    %1801 = vmatprep.subr.mxu0 0.0
    %1802 = vmatpush1.msra.mxu0 0.0
    %1803 = vmatprep.subr.mxu0 0.0
    %1804 = vmatpush1.msra.mxu0 0.0
    %1805 = vmatprep.subr.mxu0 0.0
    %1806 = vmatpush1.msra.mxu0 0.0
    %1807 = vmatprep.mubr.f32.mxu0 0.0
    %1808 = vmatmul.mubr.f32.gmra.mrb[0].mxu0 %v1741
    %v1809 = vpop.f32.mrb[0].mxu0
    %v1810 = vadd.f32 %v1739, %v1809
    %v1811 = vpop.f32.mrb[0].mxu0
    %1812 = vdwg.mxu0
    %v1813 = vxor.u32 %v1810, 2147483648
    %v1814 = vmul.f32 %v1813, 1.442695
    %v1815 = vpow.pop %v1814
    %v1816 = vadd.f32 %v1815, 1.0
    %v1817 = vrcp.pop %v1816
    %v1818 = vmul.f32 1.0, %v1817
    %v1819 = vtanh.pop %v1810
    %v1820 = vmul.f32 %v1818, %v1622
    %1822 = vrot.lane.b32.xlu0 %v1819, 80
    %v1823 = vpop.permute.xlu0 %1822
    %v1825 = vmul.f32 %v1818, %v1823
    %1827 = vrot.lane.b32.xlu0 %v1825, 16
    %v1828 = vpop.permute.xlu0 %1827
    %v1830 = vadd.f32 %v1820, %v1828
    %v1831 = vtanh.pop %v1830
    %1833 = vrot.lane.b32.xlu0 %v1831, 16
    %v1834 = vpop.permute.xlu0 %1833
    %v1836 = vmul.f32 %v1818, %v1834
    %1838 = vrot.lane.b32.xlu0 %v1735, 96
    %v1839 = vpop.permute.xlu0 %1838
    %1841 = vst.msk [vmem:[#allocation3 + $0x7] sm:$0x1] %vm384, %v1839
    %1843 = vrot.lane.b32.xlu0 %v1836, 96
    %v1844 = vpop.permute.xlu0 %1843
    %1846 = vst.msk [vmem:[#allocation4] sm:$0x1] %vm384, %v1844
    %v1847 = vld [vmem:[%s7] sm:$0xff]
    %v1848 = vld [vmem:[%s7 + $0x8] sm:$0xff]
    %v1849 = vld [vmem:[%s7 + $0x10] sm:$0xff]
    %v1850 = vld [vmem:[%s7 + $0x18] sm:$0xff]
    %v1851 = vld [vmem:[#allocation3] sm:$0xff]
    %v1852 = vld [vmem:[#allocation4] sm:$0xff]
    %v1854 = vsel %vm89, %v1852, 0
    %1856 = vmatprep.subr.mxu0 0.0
    %1857 = vmatpush1.msra.mxu0 %v1849
    %1858 = vmatprep.subr.mxu0 0.0
    %1859 = vmatpush1.msra.mxu0 %v1850
    %1860 = vmatprep.subr.mxu0 0.0
    %1861 = vmatpush1.msra.mxu0 0.0
    %1862 = vmatprep.subr.mxu0 0.0
    %1863 = vmatpush1.msra.mxu0 0.0
    %1864 = vmatprep.subr.mxu0 0.0
    %1865 = vmatpush1.msra.mxu0 0.0
    %1866 = vmatprep.subr.mxu0 0.0
    %1867 = vmatpush1.msra.mxu0 0.0
    %1868 = vmatprep.subr.mxu0 0.0
    %1869 = vmatpush1.msra.mxu0 0.0
    %1870 = vmatprep.subr.mxu0 0.0
    %1871 = vmatpush1.msra.mxu0 0.0
    %1872 = vmatprep.subr.mxu0 0.0
    %1873 = vmatpush1.msra.mxu0 0.0
    %1874 = vmatprep.subr.mxu0 0.0
    %1875 = vmatpush1.msra.mxu0 0.0
    %1876 = vmatprep.subr.mxu0 0.0
    %1877 = vmatpush1.msra.mxu0 0.0
    %1878 = vmatprep.subr.mxu0 0.0
    %1879 = vmatpush1.msra.mxu0 0.0
    %1880 = vmatprep.subr.mxu0 0.0
    %1881 = vmatpush1.msra.mxu0 0.0
    %1882 = vmatprep.subr.mxu0 0.0
    %1883 = vmatpush1.msra.mxu0 0.0
    %1884 = vmatprep.subr.mxu0 0.0
    %1885 = vmatpush1.msra.mxu0 0.0
    %1886 = vmatprep.subr.mxu0 0.0
    %1887 = vmatpush1.msra.mxu0 0.0
    %1888 = vmatprep.subr.mxu0 0.0
    %1889 = vmatpush1.msra.mxu0 0.0
    %1890 = vmatprep.subr.mxu0 0.0
    %1891 = vmatpush1.msra.mxu0 0.0
    %1892 = vmatprep.subr.mxu0 0.0
    %1893 = vmatpush1.msra.mxu0 0.0
    %1894 = vmatprep.subr.mxu0 0.0
    %1895 = vmatpush1.msra.mxu0 0.0
    %1896 = vmatprep.subr.mxu0 0.0
    %1897 = vmatpush1.msra.mxu0 0.0
    %1898 = vmatprep.subr.mxu0 0.0
    %1899 = vmatpush1.msra.mxu0 0.0
    %1900 = vmatprep.subr.mxu0 0.0
    %1901 = vmatpush1.msra.mxu0 0.0
    %1902 = vmatprep.subr.mxu0 0.0
    %1903 = vmatpush1.msra.mxu0 0.0
    %1904 = vmatprep.subr.mxu0 0.0
    %1905 = vmatpush1.msra.mxu0 0.0
    %1906 = vmatprep.subr.mxu0 0.0
    %1907 = vmatpush1.msra.mxu0 0.0
    %1908 = vmatprep.subr.mxu0 0.0
    %1909 = vmatpush1.msra.mxu0 0.0
    %1910 = vmatprep.subr.mxu0 0.0
    %1911 = vmatpush1.msra.mxu0 0.0
    %1912 = vmatprep.subr.mxu0 0.0
    %1913 = vmatpush1.msra.mxu0 0.0
    %1914 = vmatprep.subr.mxu0 0.0
    %1915 = vmatpush1.msra.mxu0 0.0
    %1916 = vmatprep.subr.mxu0 0.0
    %1917 = vmatpush1.msra.mxu0 0.0
    %1918 = vmatprep.subr.mxu0 0.0
    %1919 = vmatpush1.msra.mxu0 0.0
    %1920 = vmatprep.mubr.f32.mxu0 0.0
    %1921 = vmatmul.mubr.f32.gmra.mrb[0].mxu0 %v1854
    %v1922 = vpop.f32.mrb[0].mxu0
    %v1923 = vadd.f32 0.0, %v1922
    %v1924 = vpop.f32.mrb[0].mxu0
    %1925 = vdwg.mxu0
    %v1927 = vsel %vm89, %v1851, 0
    %1929 = vmatprep.subr.mxu0 0.0
    %1930 = vmatpush1.msra.mxu0 %v1847
    %1931 = vmatprep.subr.mxu0 0.0
    %1932 = vmatpush1.msra.mxu0 %v1848
    %1933 = vmatprep.subr.mxu0 0.0
    %1934 = vmatpush1.msra.mxu0 0.0
    %1935 = vmatprep.subr.mxu0 0.0
    %1936 = vmatpush1.msra.mxu0 0.0
    %1937 = vmatprep.subr.mxu0 0.0
    %1938 = vmatpush1.msra.mxu0 0.0
    %1939 = vmatprep.subr.mxu0 0.0
    %1940 = vmatpush1.msra.mxu0 0.0
    %1941 = vmatprep.subr.mxu0 0.0
    %1942 = vmatpush1.msra.mxu0 0.0
    %1943 = vmatprep.subr.mxu0 0.0
    %1944 = vmatpush1.msra.mxu0 0.0
    %1945 = vmatprep.subr.mxu0 0.0
    %1946 = vmatpush1.msra.mxu0 0.0
    %1947 = vmatprep.subr.mxu0 0.0
    %1948 = vmatpush1.msra.mxu0 0.0
    %1949 = vmatprep.subr.mxu0 0.0
    %1950 = vmatpush1.msra.mxu0 0.0
    %1951 = vmatprep.subr.mxu0 0.0
    %1952 = vmatpush1.msra.mxu0 0.0
    %1953 = vmatprep.subr.mxu0 0.0
    %1954 = vmatpush1.msra.mxu0 0.0
    %1955 = vmatprep.subr.mxu0 0.0
    %1956 = vmatpush1.msra.mxu0 0.0
    %1957 = vmatprep.subr.mxu0 0.0
    %1958 = vmatpush1.msra.mxu0 0.0
    %1959 = vmatprep.subr.mxu0 0.0
    %1960 = vmatpush1.msra.mxu0 0.0
    %1961 = vmatprep.subr.mxu0 0.0
    %1962 = vmatpush1.msra.mxu0 0.0
    %1963 = vmatprep.subr.mxu0 0.0
    %1964 = vmatpush1.msra.mxu0 0.0
    %1965 = vmatprep.subr.mxu0 0.0
    %1966 = vmatpush1.msra.mxu0 0.0
    %1967 = vmatprep.subr.mxu0 0.0
    %1968 = vmatpush1.msra.mxu0 0.0
    %1969 = vmatprep.subr.mxu0 0.0
    %1970 = vmatpush1.msra.mxu0 0.0
    %1971 = vmatprep.subr.mxu0 0.0
    %1972 = vmatpush1.msra.mxu0 0.0
    %1973 = vmatprep.subr.mxu0 0.0
    %1974 = vmatpush1.msra.mxu0 0.0
    %1975 = vmatprep.subr.mxu0 0.0
    %1976 = vmatpush1.msra.mxu0 0.0
    %1977 = vmatprep.subr.mxu0 0.0
    %1978 = vmatpush1.msra.mxu0 0.0
    %1979 = vmatprep.subr.mxu0 0.0
    %1980 = vmatpush1.msra.mxu0 0.0
    %1981 = vmatprep.subr.mxu0 0.0
    %1982 = vmatpush1.msra.mxu0 0.0
    %1983 = vmatprep.subr.mxu0 0.0
    %1984 = vmatpush1.msra.mxu0 0.0
    %1985 = vmatprep.subr.mxu0 0.0
    %1986 = vmatpush1.msra.mxu0 0.0
    %1987 = vmatprep.subr.mxu0 0.0
    %1988 = vmatpush1.msra.mxu0 0.0
    %1989 = vmatprep.subr.mxu0 0.0
    %1990 = vmatpush1.msra.mxu0 0.0
    %1991 = vmatprep.subr.mxu0 0.0
    %1992 = vmatpush1.msra.mxu0 0.0
    %1993 = vmatprep.mubr.f32.mxu0 0.0
    %1994 = vmatmul.mubr.f32.gmra.mrb[0].mxu0 %v1927
    %v1995 = vpop.f32.mrb[0].mxu0
    %v1996 = vadd.f32 %v1923, %v1995
    %v1997 = vpop.f32.mrb[0].mxu0
    %1998 = vdwg.mxu0
    %v1999 = vld [vmem:[%s8] sm:$0x1]
    %v2001 = vlaneseq
    %v2002 = vshrl.u32 %v2001, 7
    %v2003 = vsub.s32 0, %v2002
    %v2004 = vrot.slane %v1999, %v2003
    %v2006 = vadd.f32 %v1996, %v2004
    %vm2007 = vcmask 39936
    %2008 = vst.msk [vmem:[#allocation13] sm:$0xff] %vm2007, %v2006
    %v2009 = vlaneseq
    %v2010 = vand.u32 %v2009, 127
    %v2011 = vcvt.s32.f32 %v2010
    %v2012 = vlaneseq
    %v2013 = vshrl.u32 %v2012, 7
    %v2014 = vcvt.s32.f32 %v2013
    %vm2015 = vcmp.eq.s32.totalorder %v2013, %v2010
    %v2016 = vsel %vm2015, 1, 0
    %v2017 = vcvt.s32.f32 %v2016
    %v2018 = vld [vmem:[%s9] sm:$0x1f]
    %vm2019 = vcmp.eq.f32.partialorder %v2014, 3.0
    %v2020 = vsel %vm2019, 0.0, -10000.0
    %v2021 = vadd.f32 %v2018, %v2020
    %vm2022 = vcmask 36864
    %v2023 = vsel %vm2022, %v2021, -inf
    %v2024 = vrot.slane %v2023, 4
    %v2025 = vmax.f32 %v2023, %v2024
    %v2026 = vrot.slane %v2025, 2
    %v2027 = vmax.f32 %v2025, %v2026
    %v2028 = vrot.slane %v2027, 1
    %v2029 = vmax.f32 %v2027, %v2028
    %vm2030 = vcmp.eq.f32.partialorder %v2021, %v2029
    %v2031 = vsel %vm2030, %v2014, 5.0
    %v2032 = vsel %vm2022, %v2031, inf
    %v2033 = vrot.slane %v2032, 4
    %v2034 = vmin.f32 %v2032, %v2033
    %v2035 = vrot.slane %v2034, 2
    %v2036 = vmin.f32 %v2034, %v2035
    %v2037 = vrot.slane %v2036, 1
    %v2038 = vmin.f32 %v2036, %v2037
    %vm2039 = vcmask 32768
    %2040 = vst.msk [vmem:[#allocation5] sm:$0x1] %vm2039, %v2038
    %v2041 = vld [vmem:[#allocation13] sm:$0x1]
    %v2042 = vadd.f32 %v2029, %v2041
    %v2043 = vlaneseq
    %v2044 = vshrl.u32 %v2043, 7
    %v2045 = vsub.s32 0, %v2044
    %v2046 = vrot.slane %v2042, %v2045
    %v2047 = vmul.f32 %v2017, %v2046
    %v2048 = vsel %vm2022, %v2047, 0.0
    %2049 = vadd.xlane.f32.xlu0 %v2048
    %v2050 = vpop.xlane.xlu0 %2049
    %v2051 = vadd.f32 %v2018, %v2050
    %v2052 = vsel %vm2022, %v2051, -inf
    %v2053 = vrot.slane %v2052, 4
    %v2054 = vmax.f32 %v2052, %v2053
    %v2055 = vrot.slane %v2054, 2
    %v2056 = vmax.f32 %v2054, %v2055
    %v2057 = vrot.slane %v2056, 1
    %v2058 = vmax.f32 %v2056, %v2057
    %vm2059 = vcmp.eq.f32.partialorder %v2051, %v2058
    %v2060 = vsel %vm2059, %v2014, 5.0
    %v2061 = vsel %vm2022, %v2060, inf
    %v2062 = vrot.slane %v2061, 4
    %v2063 = vmin.f32 %v2061, %v2062
    %v2064 = vrot.slane %v2063, 2
    %v2065 = vmin.f32 %v2063, %v2064
    %v2066 = vrot.slane %v2065, 1
    %v2067 = vmin.f32 %v2065, %v2066
    %2068 = vst.msk [vmem:[#allocation5 + $0x1] sm:$0x1] %vm2039, %v2067
    %v2069 = vld [vmem:[#allocation13 + $0x1] sm:$0x1]
    %v2070 = vadd.f32 %v2058, %v2069
    %v2071 = vlaneseq
    %v2072 = vshrl.u32 %v2071, 7
    %v2073 = vsub.s32 0, %v2072
    %v2074 = vrot.slane %v2070, %v2073
    %v2075 = vmul.f32 %v2017, %v2074
    %v2076 = vsel %vm2022, %v2075, 0.0
    %2077 = vadd.xlane.f32.xlu0 %v2076
    %v2078 = vpop.xlane.xlu0 %2077
    %v2079 = vadd.f32 %v2018, %v2078
    %v2080 = vsel %vm2022, %v2079, -inf
    %v2081 = vrot.slane %v2080, 4
    %v2082 = vmax.f32 %v2080, %v2081
    %v2083 = vrot.slane %v2082, 2
    %v2084 = vmax.f32 %v2082, %v2083
    %v2085 = vrot.slane %v2084, 1
    %v2086 = vmax.f32 %v2084, %v2085
    %vm2087 = vcmp.eq.f32.partialorder %v2079, %v2086
    %v2088 = vsel %vm2087, %v2014, 5.0
    %v2089 = vsel %vm2022, %v2088, inf
    %v2090 = vrot.slane %v2089, 4
    %v2091 = vmin.f32 %v2089, %v2090
    %v2092 = vrot.slane %v2091, 2
    %v2093 = vmin.f32 %v2091, %v2092
    %v2094 = vrot.slane %v2093, 1
    %v2095 = vmin.f32 %v2093, %v2094
    %2096 = vst.msk [vmem:[#allocation5 + $0x2] sm:$0x1] %vm2039, %v2095
    %v2097 = vld [vmem:[#allocation13 + $0x2] sm:$0x1]
    %v2098 = vadd.f32 %v2086, %v2097
    %v2099 = vlaneseq
    %v2100 = vshrl.u32 %v2099, 7
    %v2101 = vsub.s32 0, %v2100
    %v2102 = vrot.slane %v2098, %v2101
    %v2103 = vmul.f32 %v2017, %v2102
    %v2104 = vsel %vm2022, %v2103, 0.0
    %2105 = vadd.xlane.f32.xlu0 %v2104
    %v2106 = vpop.xlane.xlu0 %2105
    %v2107 = vadd.f32 %v2018, %v2106
    %v2108 = vsel %vm2022, %v2107, -inf
    %v2109 = vrot.slane %v2108, 4
    %v2110 = vmax.f32 %v2108, %v2109
    %v2111 = vrot.slane %v2110, 2
    %v2112 = vmax.f32 %v2110, %v2111
    %v2113 = vrot.slane %v2112, 1
    %v2114 = vmax.f32 %v2112, %v2113
    %vm2115 = vcmp.eq.f32.partialorder %v2107, %v2114
    %v2116 = vsel %vm2115, %v2014, 5.0
    %v2117 = vsel %vm2022, %v2116, inf
    %v2118 = vrot.slane %v2117, 4
    %v2119 = vmin.f32 %v2117, %v2118
    %v2120 = vrot.slane %v2119, 2
    %v2121 = vmin.f32 %v2119, %v2120
    %v2122 = vrot.slane %v2121, 1
    %v2123 = vmin.f32 %v2121, %v2122
    %2124 = vst.msk [vmem:[#allocation5 + $0x3] sm:$0x1] %vm2039, %v2123
    %v2125 = vld [vmem:[#allocation13 + $0x3] sm:$0x1]
    %v2126 = vadd.f32 %v2114, %v2125
    %v2127 = vlaneseq
    %v2128 = vshrl.u32 %v2127, 7
    %v2129 = vsub.s32 0, %v2128
    %v2130 = vrot.slane %v2126, %v2129
    %v2131 = vmul.f32 %v2017, %v2130
    %v2132 = vsel %vm2022, %v2131, 0.0
    %2133 = vadd.xlane.f32.xlu0 %v2132
    %v2134 = vpop.xlane.xlu0 %2133
    %v2135 = vadd.f32 %v2018, %v2134
    %v2136 = vsel %vm2022, %v2135, -inf
    %v2137 = vrot.slane %v2136, 4
    %v2138 = vmax.f32 %v2136, %v2137
    %v2139 = vrot.slane %v2138, 2
    %v2140 = vmax.f32 %v2138, %v2139
    %v2141 = vrot.slane %v2140, 1
    %v2142 = vmax.f32 %v2140, %v2141
    %vm2143 = vcmp.eq.f32.partialorder %v2135, %v2142
    %v2144 = vsel %vm2143, %v2014, 5.0
    %v2145 = vsel %vm2022, %v2144, inf
    %v2146 = vrot.slane %v2145, 4
    %v2147 = vmin.f32 %v2145, %v2146
    %v2148 = vrot.slane %v2147, 2
    %v2149 = vmin.f32 %v2147, %v2148
    %v2150 = vrot.slane %v2149, 1
    %v2151 = vmin.f32 %v2149, %v2150
    %2152 = vst.msk [vmem:[#allocation5 + $0x4] sm:$0x1] %vm2039, %v2151
    %v2153 = vld [vmem:[#allocation13 + $0x4] sm:$0x1]
    %v2154 = vadd.f32 %v2142, %v2153
    %v2155 = vlaneseq
    %v2156 = vshrl.u32 %v2155, 7
    %v2157 = vsub.s32 0, %v2156
    %v2158 = vrot.slane %v2154, %v2157
    %v2159 = vmul.f32 %v2017, %v2158
    %v2160 = vsel %vm2022, %v2159, 0.0
    %2161 = vadd.xlane.f32.xlu0 %v2160
    %v2162 = vpop.xlane.xlu0 %2161
    %v2163 = vadd.f32 %v2018, %v2162
    %v2164 = vsel %vm2022, %v2163, -inf
    %v2165 = vrot.slane %v2164, 4
    %v2166 = vmax.f32 %v2164, %v2165
    %v2167 = vrot.slane %v2166, 2
    %v2168 = vmax.f32 %v2166, %v2167
    %v2169 = vrot.slane %v2168, 1
    %v2170 = vmax.f32 %v2168, %v2169
    %vm2171 = vcmp.eq.f32.partialorder %v2163, %v2170
    %v2172 = vsel %vm2171, %v2014, 5.0
    %v2173 = vsel %vm2022, %v2172, inf
    %v2174 = vrot.slane %v2173, 4
    %v2175 = vmin.f32 %v2173, %v2174
    %v2176 = vrot.slane %v2175, 2
    %v2177 = vmin.f32 %v2175, %v2176
    %v2178 = vrot.slane %v2177, 1
    %v2179 = vmin.f32 %v2177, %v2178
    %2180 = vst.msk [vmem:[#allocation5 + $0x5] sm:$0x1] %vm2039, %v2179
    %v2181 = vld [vmem:[#allocation13 + $0x5] sm:$0x1]
    %v2182 = vadd.f32 %v2170, %v2181
    %v2183 = vlaneseq
    %v2184 = vshrl.u32 %v2183, 7
    %v2185 = vsub.s32 0, %v2184
    %v2186 = vrot.slane %v2182, %v2185
    %v2187 = vmul.f32 %v2017, %v2186
    %v2188 = vsel %vm2022, %v2187, 0.0
    %2189 = vadd.xlane.f32.xlu0 %v2188
    %v2190 = vpop.xlane.xlu0 %2189
    %v2191 = vadd.f32 %v2018, %v2190
    %v2192 = vsel %vm2022, %v2191, -inf
    %v2193 = vrot.slane %v2192, 4
    %v2194 = vmax.f32 %v2192, %v2193
    %v2195 = vrot.slane %v2194, 2
    %v2196 = vmax.f32 %v2194, %v2195
    %v2197 = vrot.slane %v2196, 1
    %v2198 = vmax.f32 %v2196, %v2197
    %vm2199 = vcmp.eq.f32.partialorder %v2191, %v2198
    %v2200 = vsel %vm2199, %v2014, 5.0
    %v2201 = vsel %vm2022, %v2200, inf
    %v2202 = vrot.slane %v2201, 4
    %v2203 = vmin.f32 %v2201, %v2202
    %v2204 = vrot.slane %v2203, 2
    %v2205 = vmin.f32 %v2203, %v2204
    %v2206 = vrot.slane %v2205, 1
    %v2207 = vmin.f32 %v2205, %v2206
    %2208 = vst.msk [vmem:[#allocation5 + $0x6] sm:$0x1] %vm2039, %v2207
    %v2209 = vld [vmem:[#allocation13 + $0x6] sm:$0x1]
    %v2210 = vadd.f32 %v2198, %v2209
    %v2211 = vlaneseq
    %v2212 = vshrl.u32 %v2211, 7
    %v2213 = vsub.s32 0, %v2212
    %v2214 = vrot.slane %v2210, %v2213
    %v2215 = vmul.f32 %v2017, %v2214
    %v2216 = vsel %vm2022, %v2215, 0.0
    %2217 = vadd.xlane.f32.xlu0 %v2216
    %v2218 = vpop.xlane.xlu0 %2217
    %v2219 = vadd.f32 %v2018, %v2218
    %v2220 = vsel %vm2022, %v2219, -inf
    %v2221 = vrot.slane %v2220, 4
    %v2222 = vmax.f32 %v2220, %v2221
    %v2223 = vrot.slane %v2222, 2
    %v2224 = vmax.f32 %v2222, %v2223
    %v2225 = vrot.slane %v2224, 1
    %v2226 = vmax.f32 %v2224, %v2225
    %vm2227 = vcmp.eq.f32.partialorder %v2219, %v2226
    %v2228 = vsel %vm2227, %v2014, 5.0
    %v2229 = vsel %vm2022, %v2228, inf
    %v2230 = vrot.slane %v2229, 4
    %v2231 = vmin.f32 %v2229, %v2230
    %v2232 = vrot.slane %v2231, 2
    %v2233 = vmin.f32 %v2231, %v2232
    %v2234 = vrot.slane %v2233, 1
    %v2235 = vmin.f32 %v2233, %v2234
    %2236 = vst.msk [vmem:[#allocation5 + $0x7] sm:$0x1] %vm2039, %v2235
    %v2237 = vld [vmem:[#allocation13 + $0x7] sm:$0x1]
    %v2238 = vadd.f32 %v2226, %v2237
    %v2239 = vld [vmem:[%s10] sm:$0x1]
    %v2240 = vadd.f32 %v2238, %v2239
    %v2241 = vsel %vm2039, %v2240, -inf
    %2242 = vmax.xlane.f32.xlu0 %v2241
    %v2243 = vpop.xlane.xlu0 %2242
    %vm2244 = vcmp.eq.f32.partialorder %v2240, %v2243
    %v2245 = vsel %vm2244, %v2011, 5.0
    %v2246 = vsel %vm2039, %v2245, inf
    %2247 = vmin.xlane.f32.xlu0 %v2246
    %v2248 = vpop.xlane.xlu0 %2247
    %vm2249 = vcmask 0
    %2250 = vst.msk [vmem:[#allocation14] sm:$0x1] %vm2249, %v2243
    %vm2251 = vcmp.eq.f32.partialorder %v2011, %v2248
    %v2252 = vsel %vm2251, 1, 0
    %v2253 = vcvt.s32.f32 %v2252
    %2254 = vst.msk [vmem:[#allocation6 + $0x7] sm:$0x1] %vm2039, %v2253
    %v2255 = vld [vmem:[#allocation5 + $0x7] sm:$0x1]
    %v2256 = vmul.f32 %v2255, %v2253
    %v2257 = vsel %vm2039, %v2256, 0.0
    %2258 = vadd.xlane.f32.xlu0 %v2257
    %v2259 = vpop.xlane.xlu0 %2258
    %vm2260 = vcmp.eq.f32.partialorder %v2011, %v2259
    %v2261 = vsel %vm2260, 1, 0
    %v2262 = vcvt.s32.f32 %v2261
    %2263 = vst.msk [vmem:[#allocation6 + $0x6] sm:$0x1] %vm2039, %v2262
    %v2264 = vld [vmem:[#allocation5 + $0x6] sm:$0x1]
    %v2265 = vmul.f32 %v2264, %v2262
    %v2266 = vsel %vm2039, %v2265, 0.0
    %2267 = vadd.xlane.f32.xlu0 %v2266
    %v2268 = vpop.xlane.xlu0 %2267
    %vm2269 = vcmp.eq.f32.partialorder %v2011, %v2268
    %v2270 = vsel %vm2269, 1, 0
    %v2271 = vcvt.s32.f32 %v2270
    %2272 = vst.msk [vmem:[#allocation6 + $0x5] sm:$0x1] %vm2039, %v2271
    %v2273 = vld [vmem:[#allocation5 + $0x5] sm:$0x1]
    %v2274 = vmul.f32 %v2273, %v2271
    %v2275 = vsel %vm2039, %v2274, 0.0
    %2276 = vadd.xlane.f32.xlu0 %v2275
    %v2277 = vpop.xlane.xlu0 %2276
    %vm2278 = vcmp.eq.f32.partialorder %v2011, %v2277
    %v2279 = vsel %vm2278, 1, 0
    %v2280 = vcvt.s32.f32 %v2279
    %2281 = vst.msk [vmem:[#allocation6 + $0x4] sm:$0x1] %vm2039, %v2280
    %v2282 = vld [vmem:[#allocation5 + $0x4] sm:$0x1]
    %v2283 = vmul.f32 %v2282, %v2280
    %v2284 = vsel %vm2039, %v2283, 0.0
    %2285 = vadd.xlane.f32.xlu0 %v2284
    %v2286 = vpop.xlane.xlu0 %2285
    %vm2287 = vcmp.eq.f32.partialorder %v2011, %v2286
    %v2288 = vsel %vm2287, 1, 0
    %v2289 = vcvt.s32.f32 %v2288
    %2290 = vst.msk [vmem:[#allocation6 + $0x3] sm:$0x1] %vm2039, %v2289
    %v2291 = vld [vmem:[#allocation5 + $0x3] sm:$0x1]
    %v2292 = vmul.f32 %v2291, %v2289
    %v2293 = vsel %vm2039, %v2292, 0.0
    %2294 = vadd.xlane.f32.xlu0 %v2293
    %v2295 = vpop.xlane.xlu0 %2294
    %vm2296 = vcmp.eq.f32.partialorder %v2011, %v2295
    %v2297 = vsel %vm2296, 1, 0
    %v2298 = vcvt.s32.f32 %v2297
    %2299 = vst.msk [vmem:[#allocation6 + $0x2] sm:$0x1] %vm2039, %v2298
    %v2300 = vld [vmem:[#allocation5 + $0x2] sm:$0x1]
    %v2301 = vmul.f32 %v2300, %v2298
    %v2302 = vsel %vm2039, %v2301, 0.0
    %2303 = vadd.xlane.f32.xlu0 %v2302
    %v2304 = vpop.xlane.xlu0 %2303
    %vm2305 = vcmp.eq.f32.partialorder %v2011, %v2304
    %v2306 = vsel %vm2305, 1, 0
    %v2307 = vcvt.s32.f32 %v2306
    %2308 = vst.msk [vmem:[#allocation6 + $0x1] sm:$0x1] %vm2039, %v2307
    %v2309 = vld [vmem:[#allocation5 + $0x1] sm:$0x1]
    %v2310 = vmul.f32 %v2309, %v2307
    %v2311 = vsel %vm2039, %v2310, 0.0
    %2312 = vadd.xlane.f32.xlu0 %v2311
    %v2313 = vpop.xlane.xlu0 %2312
    %vm2314 = vcmp.eq.f32.partialorder %v2011, %v2313
    %v2315 = vsel %vm2314, 1, 0
    %v2316 = vcvt.s32.f32 %v2315
    %2317 = vst.msk [vmem:[#allocation6] sm:$0x1] %vm2039, %v2316
    %v2318 = vld [vmem:[#allocation5] sm:$0x1]
    %v2319 = vmul.f32 %v2318, %v2316
    %v2320 = vsel %vm2039, %v2319, 0.0
    %2321 = vadd.xlane.f32.xlu0 %v2320
    %v2322 = vpop.xlane.xlu0 %2321
    %v2323 = vcvt.f32.s32.to.zero.pseudo %v2322
    %2324 = vst.msk [vmem:[#allocation16] sm:$0x1] %vm2249, %v2323
    %v2325 = vld [vmem:[#allocation6] sm:$0xff]
    %v2326 = vmul.f32 %v2325, %v2011
    %v2327 = vsel %vm2007, %v2326, 0.0
    %2328 = vadd.xlane.f32.xlu0 %v2327
    %v2329 = vpop.xlane.xlu0 %2328
    %v2330 = vcvt.f32.s32.to.zero.pseudo %v2329
    %vm2331 = vcmask 7168
    %2332 = vst.msk [vmem:[%s12] sm:$0xff] %vm2331, %v2330
    // Predicated region
    $region58: #{tpu_custom_call.1} parent=1 // pred_check
      _
    $region59: #{tpu_custom_call.1} parent=1 // pred_check_branch
      %2334 = sbr.rel (0) target = $region61
    $region60: #{tpu_custom_call.1} parent=1 // pred_region
      %s2336 = ssub.s32 128, 128
      %2337 = vsyncadd [#allocation9], %s2336
      %s2339 = sshll.u32 [#allocation13], 4
      %s2340 = int_to_ptr.vmem [resolvable:$true] %s2339
      %2342 = dma.vmem_to_hbm [thread:$0]  %s2340, 128, %s11, [#allocation9]
    $region61: #{tpu_custom_call.1} parent=1 // pred_fallthru
      _
    // Predicated region
    $region62: #{tpu_custom_call.1} parent=1 // pred_check
      _
    $region63: #{tpu_custom_call.1} parent=1 // pred_check_branch
      %2344 = sbr.rel (0) target = $region65
    $region64: #{tpu_custom_call.1} parent=1 // pred_region
      _
    $region65: #{tpu_custom_call.1} parent=1 // pred_fallthru
      _
    // Predicated region
    $region66: #{tpu_custom_call.1} parent=1 // pred_check
      _
    $region67: #{tpu_custom_call.1} parent=1 // pred_check_branch
      %2346 = sbr.rel (0) target = $region69
    $region68: #{tpu_custom_call.1} parent=1 // pred_region
      %s2348 = ssub.s32 16, 16
      %2349 = vsyncadd [#allocation15], %s2348
      %s2351 = sshll.u32 [#allocation14], 4
      %s2352 = int_to_ptr.vmem [resolvable:$true] %s2351
      %2354 = dma.vmem_to_hbm [thread:$0]  %s2352, 16, %s13, [#allocation15]
    $region69: #{tpu_custom_call.1} parent=1 // pred_fallthru
      _
    // Predicated region
    $region70: #{tpu_custom_call.1} parent=1 // pred_check
      _
    $region71: #{tpu_custom_call.1} parent=1 // pred_check_branch
      %2356 = sbr.rel (0) target = $region73
    $region72: #{tpu_custom_call.1} parent=1 // pred_region
      %s2358 = ssub.s32 16, 16
      %2359 = vsyncadd [#allocation15], %s2358
      %s2361 = sshll.u32 [#allocation16], 4
      %s2362 = int_to_ptr.vmem [resolvable:$true] %s2361
      %2364 = dma.vmem_to_hbm [thread:$0]  %s2362, 16, %s14, [#allocation15]
    $region73: #{tpu_custom_call.1} parent=1 // pred_fallthru
      _
    // Predicated region
    $region74: #{tpu_custom_call.1} parent=1 // pred_check
      _
    $region75: #{tpu_custom_call.1} parent=1 // pred_check_branch
      %2366 = sbr.rel (0) target = $region77
    $region76: #{tpu_custom_call.1} parent=1 // pred_region
      %2367 = dma.done [#allocation9], 128
    $region77: #{tpu_custom_call.1} parent=1 // pred_fallthru
      _
    // Predicated region
    $region78: #{tpu_custom_call.1} parent=1 // pred_check
      _
    $region79: #{tpu_custom_call.1} parent=1 // pred_check_branch
      %2369 = sbr.rel (0) target = $region81
    $region80: #{tpu_custom_call.1} parent=1 // pred_region
      _
    $region81: #{tpu_custom_call.1} parent=1 // pred_fallthru
      _
    // Predicated region
    $region82: #{tpu_custom_call.1} parent=1 // pred_check
      _
    $region83: #{tpu_custom_call.1} parent=1 // pred_check_branch
      %2371 = sbr.rel (0) target = $region85
    $region84: #{tpu_custom_call.1} parent=1 // pred_region
      %2372 = dma.done [#allocation15], 16
    $region85: #{tpu_custom_call.1} parent=1 // pred_fallthru
      _
    // Predicated region
    $region86: #{tpu_custom_call.1} parent=1 // pred_check
      _
    $region87: #{tpu_custom_call.1} parent=1 // pred_check_branch
      %2374 = sbr.rel (0) target = $region89
    $region88: #{tpu_custom_call.1} parent=1 // pred_region
      %2375 = dma.done [#allocation15], 16
    $region89: #{tpu_custom_call.1} parent=1 // pred_fallthru
      _
    %2376 = vsyncpa [#allocation8], 1
    %2377 = vsyncpa [#allocation11], 1
    %2378 = vsyncpa [#allocation9], 1
    %2379 = vsyncpa [#allocation15], 1

</llo_original>
